<compile_context>
chip_gen: v7x
topology: tpu7x:2x2x1
jax: 0.10.0
libtpu: 0.0.40
codegen_flags: <defaults>
</compile_context>

<pallas_src>
import functools
import math

import jax
import jax.numpy as jnp
from jax.experimental import pallas as pl
from jax.experimental.pallas import tpu as pltpu

# Gate pre-activation that makes an LSTM step a no-op from zero state:
# sigmoid(-1e30)=0 -> i=0, o=0 -> c_new=0, h_new=0.
_NEG = -1e30
_VMEM_LIMIT = 48 * 1024 * 1024


# --------------------------------------------------------------------------
# Shared LSTM cell pieces (gate order i, f, g, o — matches PyTorch).
# --------------------------------------------------------------------------
def _gate_mask(rows, h):
    lane = jax.lax.broadcasted_iota(jnp.int32, (rows, 4 * h), 1)
    return (lane >= 2 * h) & (lane < 3 * h)


def _lstm_cell(gates, c_prev, gmask, h_dtype):
    # gates: (B, 4H) f32.  One dense sigmoid + one dense tanh over the full 128-lane
    # tile (2 EUP passes instead of 4 quarter-dense strip passes); the strip selects
    # land on the XLU/VPU slots, off the EUP.
    act = jnp.where(gmask, jnp.tanh(gates), jax.nn.sigmoid(gates))
    H = c_prev.shape[-1]
    i_g = act[:, 0 * H:1 * H]
    f_g = act[:, 1 * H:2 * H]
    g_g = act[:, 2 * H:3 * H]
    o_g = act[:, 3 * H:4 * H]
    c_new = f_g * c_prev + i_g * g_g
    h_new = o_g * jnp.tanh(c_new)
    return h_new.astype(h_dtype), c_new


# --------------------------------------------------------------------------
# Layer-1 input projection (hoisted out of the recurrence): one big MXU matmul over
# row-flattened (Tp*Bp, I) input.  Emits the fwd / bwd gate streams as two separate
# bf16 arrays so the recurrence kernel can tile them with mirrored time blocks.
# Left-padded ("no-op") timesteps are overwritten with _NEG inside the kernel.
# --------------------------------------------------------------------------
def _proj1_kernel(x_ref, w_ref, b_ref, of_ref, ob_ref, *, pad_rows):
    y = (jnp.dot(x_ref[...], w_ref[...], preferred_element_type=jnp.float32)
         + b_ref[...])
    if pad_rows:  # static; only traced when time padding exists
        r0 = pl.program_id(0) * x_ref.shape[0]
        ridx = r0 + jax.lax.broadcasted_iota(jnp.int32, y.shape, 0)
        y = jnp.where(ridx < pad_rows, _NEG, y)
    G = of_ref.shape[-1]
    of_ref[...] = y[:, :G].astype(of_ref.dtype)
    ob_ref[...] = y[:, G:].astype(ob_ref.dtype)


def _project_l1(x2d, w, b, rows_per_block, pad_rows):
    R, Fin = x2d.shape
    G2 = w.shape[1]
    G = G2 // 2
    n_s = R // rows_per_block
    kernel = functools.partial(_proj1_kernel, pad_rows=pad_rows)
    return pl.pallas_call(
        kernel,
        out_shape=(jax.ShapeDtypeStruct((R, G), jnp.bfloat16),
                   jax.ShapeDtypeStruct((R, G), jnp.bfloat16)),
        grid_spec=pltpu.PrefetchScalarGridSpec(
            num_scalar_prefetch=0, grid=(n_s,),
            in_specs=[pl.BlockSpec((rows_per_block, Fin), lambda s: (s, 0)),
                      pl.BlockSpec((Fin, G2), lambda s: (0, 0)),
                      pl.BlockSpec((1, G2), lambda s: (0, 0))],
            out_specs=(pl.BlockSpec((rows_per_block, G), lambda s: (s, 0)),
                       pl.BlockSpec((rows_per_block, G), lambda s: (s, 0)))),
        compiler_params=pltpu.CompilerParams(
            dimension_semantics=("parallel",),
            vmem_limit_bytes=_VMEM_LIMIT),
    )(x2d, w, b)


# --------------------------------------------------------------------------
# Layer 1: fused bidirectional recurrence, tb timesteps per grid step.
# Two back-to-back (B,H)@(H,4H) matmuls per step (no discarded half, no concat).
# Backward-direction time reversal is done purely via index maps.
# --------------------------------------------------------------------------
def _bilstm_kernel(gxf_ref, gxb_ref, whf_ref, whb_ref, of_ref, ob_ref,
                   hf_scr, cf_scr, hb_scr, cb_scr, *, unroll):
    s = pl.program_id(0)
    Tb, B, _ = gxf_ref.shape
    H = whf_ref.shape[0]

    @pl.when(s == 0)
    def _():
        hf_scr[...] = jnp.zeros_like(hf_scr)
        cf_scr[...] = jnp.zeros_like(cf_scr)
        hb_scr[...] = jnp.zeros_like(hb_scr)
        cb_scr[...] = jnp.zeros_like(cb_scr)

    w_f = whf_ref[...]            # (H, 4H) bf16, loop-invariant
    w_b = whb_ref[...]
    gmask = _gate_mask(B, H)      # hoisted out of the loop

    def step(k, carry):
        hf, cf, hb, cb = carry
        ghf = jnp.dot(hf, w_f, preferred_element_type=jnp.float32)   # (B, 4H)
        ghb = jnp.dot(hb, w_b, preferred_element_type=jnp.float32)
        gf = gxf_ref[k].astype(jnp.float32) + ghf
        gb = gxb_ref[Tb - 1 - k].astype(jnp.float32) + ghb
        hf_n, cf_n = _lstm_cell(gf, cf, gmask, of_ref.dtype)         # h kept bf16
        hb_n, cb_n = _lstm_cell(gb, cb, gmask, ob_ref.dtype)
        of_ref[k] = hf_n
        ob_ref[Tb - 1 - k] = hb_n
        return hf_n, cf_n, hb_n, cb_n

    carry0 = (hf_scr[...], cf_scr[...], hb_scr[...], cb_scr[...])
    hf, cf, hb, cb = jax.lax.fori_loop(0, Tb, step, carry0, unroll=unroll)
    hf_scr[...] = hf
    cf_scr[...] = cf
    hb_scr[...] = hb
    cb_scr[...] = cb


def _bilstm_l1(gxf, gxb, whf, whb, tb, unroll):
    Tp, B, G = gxf.shape
    H = whf.shape[0]
    n_s = Tp // tb
    kernel = functools.partial(_bilstm_kernel, unroll=unroll)
    return pl.pallas_call(
        kernel,
        out_shape=(jax.ShapeDtypeStruct((Tp, B, H), jnp.bfloat16),
                   jax.ShapeDtypeStruct((Tp, B, H), jnp.bfloat16)),
        grid_spec=pltpu.PrefetchScalarGridSpec(
            num_scalar_prefetch=0, grid=(n_s,),
            in_specs=[
                pl.BlockSpec((tb, B, G), lambda s: (s, 0, 0)),                 # fwd gates
                pl.BlockSpec((tb, B, G), lambda s, n=n_s: (n - 1 - s, 0, 0)),  # bwd gates
                pl.BlockSpec((H, G), lambda s: (0, 0)),                        # W_hh fwd
                pl.BlockSpec((H, G), lambda s: (0, 0)),                        # W_hh bwd
            ],
            out_specs=(pl.BlockSpec((tb, B, H), lambda s: (s, 0, 0)),
                       pl.BlockSpec((tb, B, H), lambda s, n=n_s: (n - 1 - s, 0, 0))),
            scratch_shapes=[pltpu.VMEM((B, H), jnp.bfloat16),   # h fwd carry
                            pltpu.VMEM((B, H), jnp.float32),    # c fwd carry
                            pltpu.VMEM((B, H), jnp.bfloat16),   # h bwd carry
                            pltpu.VMEM((B, H), jnp.float32)]),  # c bwd carry
        compiler_params=pltpu.CompilerParams(
            dimension_semantics=("arbitrary",),
            vmem_limit_bytes=_VMEM_LIMIT),
    )(gxf, gxb, whf, whb)


# --------------------------------------------------------------------------
# Layer 2 + head, fully fused:
#   * per-block input-gate projection (two (tb*B,H)@(H,4H) matmuls) into VMEM scratch
#   * forward recurrence keeping only the final hidden state (no sequence writeback)
#   * last grid step: layer-2 backward single cell (zero init state -> no W_hh term)
#     + relu(r2o) + relu(i2h) + h2o, written to the (Bp, num_classes) output.
# --------------------------------------------------------------------------
def _layer2_head_kernel(f1_ref, b1_ref,
                        w2ft_ref, w2fb_ref, b2f_ref, whh2f_ref,
                        w2bt_ref, w2bb_ref, b2b_ref,
                        r2o_wt_ref, r2o_wb_ref, r2o_b_ref,
                        i2h_w_ref, i2h_b_ref, h2o_w_ref, h2o_b_ref,
                        o_ref, gx_scr, h_scr, c_scr, *, pad_steps, unroll):
    s = pl.program_id(0)
    n_s = pl.num_programs(0)
    Tb, B, H = f1_ref.shape
    G = 4 * H

    # Block-start input-gate projection (once per block, off the per-step chain;
    # overlaps with the next block's input DMA).
    f1 = f1_ref[...].reshape(Tb * B, H)
    b1 = b1_ref[...].reshape(Tb * B, H)
    gx = (jnp.dot(f1, w2ft_ref[...], preferred_element_type=jnp.float32)
          + jnp.dot(b1, w2fb_ref[...], preferred_element_type=jnp.float32)
          + b2f_ref[...])
    gx_scr[...] = gx.reshape(Tb, B, G)

    @pl.when(s == 0)
    def _():
        h_scr[...] = jnp.zeros_like(h_scr)
        c_scr[...] = jnp.zeros_like(c_scr)
        if pad_steps:  # static: left-padded no-op timesteps live at the head of block 0
            gx_scr[0:pad_steps] = jnp.full((pad_steps, B, G), _NEG, gx_scr.dtype)

    w_hh = whh2f_ref[...]
    gmask = _gate_mask(B, H)

    def step(k, carry):
        h, c = carry
        gates = gx_scr[k] + jnp.dot(h, w_hh, preferred_element_type=jnp.float32)
        return _lstm_cell(gates, c, gmask, h_scr.dtype)

    h_fin, c_fin = jax.lax.fori_loop(0, Tb, step, (h_scr[...], c_scr[...]),
                                     unroll=unroll)
    h_scr[...] = h_fin
    c_scr[...] = c_fin

    @pl.when(s == n_s - 1)
    def _():
        hf2 = h_fin.astype(jnp.float32)                  # (B, H) layer-2 fwd final state
        hf1 = f1_ref[Tb - 1].astype(jnp.float32)         # (B, H) layer-1 fwd @ T-1
        hb1 = b1_ref[Tb - 1].astype(jnp.float32)         # (B, H) layer-1 bwd @ T-1
        # Layer-2 backward direction at output[T-1]: one LSTM cell from zero state,
        # so h0 @ W_hh == 0 and c = i*g (f gate irrelevant).
        g = (jnp.dot(hf1, w2bt_ref[...], preferred_element_type=jnp.float32)
             + jnp.dot(hb1, w2bb_ref[...], preferred_element_type=jnp.float32)
             + b2b_ref[...])                                            # (B, 4H)
        i_g = jax.nn.sigmoid(g[:, 0 * H:1 * H])
        g_g = jnp.tanh(g[:, 2 * H:3 * H])
        o_g = jax.nn.sigmoid(g[:, 3 * H:4 * H])
        hb2 = o_g * jnp.tanh(i_g * g_g)                                 # (B, H)
        # relu(r2o([hf2 | hb2])) without materializing the concat
        y = (jnp.dot(hf2, r2o_wt_ref[...], preferred_element_type=jnp.float32)
             + jnp.dot(hb2, r2o_wb_ref[...], preferred_element_type=jnp.float32)
             + r2o_b_ref[...])
        y = jnp.maximum(y, 0.0)
        y = jnp.maximum(jnp.dot(y, i2h_w_ref[...], preferred_element_type=jnp.float32)
                        + i2h_b_ref[...], 0.0)
        o_ref[...] = (jnp.dot(y, h2o_w_ref[...], preferred_element_type=jnp.float32)
                      + h2o_b_ref[...]).astype(o_ref.dtype)


def _layer2_head(fwd1, bwd1, params, tb, unroll, pad_steps, num_classes):
    Tp, B, H = fwd1.shape
    n_s = Tp // tb
    kernel = functools.partial(_layer2_head_kernel, pad_steps=pad_steps, unroll=unroll)
    blk_seq = pl.BlockSpec((tb, B, H), lambda s: (s, 0, 0))

    def const2(a):
        return pl.BlockSpec(a.shape, lambda s: (0, 0))

    return pl.pallas_call(
        kernel,
        out_shape=jax.ShapeDtypeStruct((B, num_classes), jnp.float32),
        grid_spec=pltpu.PrefetchScalarGridSpec(
            num_scalar_prefetch=0, grid=(n_s,),
            in_specs=[blk_seq, blk_seq,
                      const2(params["wih2f_top"]), const2(params["wih2f_bot"]),
                      const2(params["b2f"]), const2(params["whh2f"]),
                      const2(params["wih2b_top"]), const2(params["wih2b_bot"]),
                      const2(params["b2b"]),
                      const2(params["r2o_wt"]), const2(params["r2o_wb"]),
                      const2(params["r2o_b"]),
                      const2(params["i2h_w"]), const2(params["i2h_b"]),
                      const2(params["h2o_w"]), const2(params["h2o_b"])],
            out_specs=pl.BlockSpec((B, num_classes), lambda s: (0, 0)),
            scratch_shapes=[pltpu.VMEM((tb, B, 4 * H), jnp.float32),   # input gates
                            pltpu.VMEM((B, H), jnp.bfloat16),          # h carry
                            pltpu.VMEM((B, H), jnp.float32)]),         # c carry
        compiler_params=pltpu.CompilerParams(
            dimension_semantics=("arbitrary",),
            vmem_limit_bytes=_VMEM_LIMIT),
    )(fwd1, bwd1,
      params["wih2f_top"], params["wih2f_bot"], params["b2f"], params["whh2f"],
      params["wih2b_top"], params["wih2b_bot"], params["b2b"],
      params["r2o_wt"], params["r2o_wb"], params["r2o_b"],
      params["i2h_w"], params["i2h_b"], params["h2o_w"], params["h2o_b"])


# ----------------------------------- Forward --------------------------------------
def _choose_time_block(T, max_tb):
    """Pick a time block. Prefer an exact divisor; otherwise left-pad T up to a
    multiple of max_tb with no-op timesteps (removes the silent tb=1 perf cliff)."""
    cap = max(1, min(T, max_tb))
    best = 1
    for tb in range(cap, 0, -1):
        if T % tb == 0:
            best = tb
            break
    if best >= max(1, cap // 2):
        return best, T
    tb = cap
    Tp = -(-T // tb) * tb
    return tb, Tp


def _proj_rows_block(Tp, Bp, max_t):
    """Projection row tile (decoupled from the recurrence time block)."""
    for t in range(min(Tp, max_t), 0, -1):
        if Tp % t == 0:
            return t * Bp
    return Bp


def rnn_forward(x, params, *, max_tb=1024):
    # x: (B, input_size, T) == PyTorch (N, C, L); the module maps it to (T, B, C).
    B, input_size, T = x.shape
    H = params["whh2f"].shape[0]
    num_classes = params["h2o_w"].shape[1]

    tb, Tp = _choose_time_block(T, max_tb)
    pad_t = Tp - T

    xt = jnp.transpose(x, (2, 0, 1))                        # (T, B, I) time-major
    Bp = max(8, ((B + 7) // 8) * 8)                         # pad batch to 8 sublanes
    xt = jnp.pad(xt, ((pad_t, 0), (0, Bp - B), (0, 0)))     # LEFT-pad time (no-op steps)

    unroll = True if tb <= 16 else 8

    # ---- layer 1: input gates for both directions in one big MXU matmul (bf16 out) ----
    rows_blk = _proj_rows_block(Tp, Bp, 256)
    gx1f, gx1b = _project_l1(xt.reshape(Tp * Bp, input_size),
                             params["wih1"], params["b1"], rows_blk, pad_t * Bp)
    gx1f = gx1f.reshape(Tp, Bp, 4 * H)
    gx1b = gx1b.reshape(Tp, Bp, 4 * H)

    # ---- layer 1 recurrence: fused bidirectional, bf16 hidden sequences ----
    fwd1, bwd1 = _bilstm_l1(gx1f, gx1b, params["whh1f"], params["whh1b"], tb, unroll)

    # ---- layer 2 + head, fused into one kernel ----
    # TODO(synk): nn.LSTM inter-layer dropout (p=0.3) is training-only; inference semantics.
    # The module reads output[T-1] only, so the layer-2 backward direction collapses to a
    # single cell (zero initial state) fused into the last grid step of this kernel.
    out = _layer2_head(fwd1, bwd1, params, tb, unroll, pad_t, num_classes)
    return out[:B]


# ------------------------------ Deterministic params ------------------------------
def init_params(key, input_size, h1, h2, h3, num_classes):
    # Self-initialized, PyTorch-like layout transposed to (in, out); gate order i,f,g,o.
    # (Loading real nn.LSTM weights would require transposing the (4H, in) tensors.)
    ks = iter(jax.random.split(key, 32))

    def u(shape, bound):
        return jax.random.uniform(next(ks), shape, jnp.float32, -bound, bound)

    std1 = 1.0 / math.sqrt(h1)
    p = {}

    # ---- LSTM layer 1 (input_size -> h1, bidirectional) ----
    wih1_f = u((input_size, 4 * h1), std1)
    wih1_b = u((input_size, 4 * h1), std1)
    p["wih1"] = jnp.concatenate([wih1_f, wih1_b], axis=1)                  # (I, 8H)
    b1_f = u((1, 4 * h1), std1) + u((1, 4 * h1), std1)                     # b_ih + b_hh
    b1_b = u((1, 4 * h1), std1) + u((1, 4 * h1), std1)
    p["b1"] = jnp.concatenate([b1_f, b1_b], axis=1)                        # (1, 8H)
    p["whh1f"] = u((h1, 4 * h1), std1).astype(jnp.bfloat16)                # (H, 4H)
    p["whh1b"] = u((h1, 4 * h1), std1).astype(jnp.bfloat16)                # (H, 4H)

    # ---- LSTM layer 2 (2*h1 -> h1, bidirectional) ----
    wih2_f = u((2 * h1, 4 * h1), std1)
    wih2_b = u((2 * h1, 4 * h1), std1)
    p["wih2f_top"], p["wih2f_bot"] = wih2_f[:h1], wih2_f[h1:]              # (H, 4H) x2
    p["wih2b_top"], p["wih2b_bot"] = wih2_b[:h1], wih2_b[h1:]              # (H, 4H) x2
    p["b2f"] = u((1, 4 * h1), std1) + u((1, 4 * h1), std1)
    p["b2b"] = u((1, 4 * h1), std1) + u((1, 4 * h1), std1)
    p["whh2f"] = u((h1, 4 * h1), std1).astype(jnp.bfloat16)                # (H, 4H)
    # whh2_b exists in PyTorch but multiplies a zero initial state at output[T-1]; unused.

    # ---- head: r2o (2*h1 -> h2) split fwd/bwd, i2h (h2 -> h3), h2o (h3 -> classes) ----
    r2o_w = u((2 * h1, h2), 1.0 / math.sqrt(2 * h1))
    p["r2o_wt"], p["r2o_wb"] = r2o_w[:h1], r2o_w[h1:]                      # (H, h2) x2
    p["r2o_b"] = u((1, h2), 1.0 / math.sqrt(2 * h1))
    p["i2h_w"] = u((h2, h3), 1.0 / math.sqrt(h2))
    p["i2h_b"] = u((1, h3), 1.0 / math.sqrt(h2))
    p["h2o_w"] = u((h3, num_classes), 1.0 / math.sqrt(h3))
    p["h2o_b"] = u((1, num_classes), 1.0 / math.sqrt(h3))
    return p


if __name__ == "__main__":
    B, input_size, T = 2, 16, 8
    h1, h2, h3, num_classes = 32, 32, 32, 34

    key = jax.random.PRNGKey(0)
    kx, kp = jax.random.split(key)
    x = jax.random.normal(kx, (B, input_size, T), dtype=jnp.float32)
    params = init_params(kp, input_size, h1, h2, h3, num_classes)

    out = jax.jit(rnn_forward)(x, params)
    jax.block_until_ready(out)
    assert out.shape == (B, num_classes) and out.dtype == jnp.float32
    print("KERNEL_OK")
</pallas_src>

<mosaic_0001>
module attributes {stable_mosaic.version = 11 : i64} {
  func.func @_bilstm_kernel(%arg0: i32, %arg1: memref<8x8x128xbf16, #tpu.memory_space<vmem>>, %arg2: memref<8x8x128xbf16, #tpu.memory_space<vmem>>, %arg3: memref<32x128xbf16, #tpu.memory_space<vmem>>, %arg4: memref<32x128xbf16, #tpu.memory_space<vmem>>, %arg5: memref<8x8x32xbf16, #tpu.memory_space<vmem>>, %arg6: memref<8x8x32xbf16, #tpu.memory_space<vmem>>, %arg7: memref<8x32xbf16, #tpu.memory_space<vmem>>, %arg8: memref<8x32xf32, #tpu.memory_space<vmem>>, %arg9: memref<8x32xbf16, #tpu.memory_space<vmem>>, %arg10: memref<8x32xf32, #tpu.memory_space<vmem>>) attributes {dimension_semantics = [#tpu.dimension_semantics<arbitrary>], iteration_bounds = array<i64: 1>, scalar_prefetch = 0 : i64, scratch_operands = 4 : i64, tpu.core_type = #tpu.core_type<tc>, window_params = [{transform_indices = @transform_0, window_bounds = array<i64: 8, 8, 128>}, {transform_indices = @transform_1, window_bounds = array<i64: 8, 8, 128>}, {pipeline_mode = #tpu.pipeline_mode<synchronous>, transform_indices = @transform_2, window_bounds = array<i64: 32, 128>}, {pipeline_mode = #tpu.pipeline_mode<synchronous>, transform_indices = @transform_3, window_bounds = array<i64: 32, 128>}, {transform_indices = @transform_4, window_bounds = array<i64: 8, 8, 32>}, {transform_indices = @transform_5, window_bounds = array<i64: 8, 8, 32>}]} {
    %c0_i32 = arith.constant 0 : i32
    %0 = arith.cmpi eq, %arg0, %c0_i32 : i32
    %1 = arith.extui %0 : i1 to i32
    %c0_i32_0 = arith.constant 0 : i32
    %2 = arith.cmpi ne, %1, %c0_i32_0 : i32
    scf.if %2 {
      %cst_132 = arith.constant 0.000000e+00 : bf16
      %467 = vector.broadcast %cst_132 : bf16 to vector<8x32xbf16>
      %c0_133 = arith.constant 0 : index
      %c0_134 = arith.constant 0 : index
      %468 = vector.load %arg7[%c0_133, %c0_134] : memref<8x32xbf16, #tpu.memory_space<vmem>>, vector<8x32xbf16>
      tpu.vector_store %arg7[%c0_133, %c0_134], %467 {strides = array<i32>} : memref<8x32xbf16, #tpu.memory_space<vmem>>, vector<8x32xbf16>,
      %cst_135 = arith.constant 0.000000e+00 : f32
      %469 = vector.broadcast %cst_135 : f32 to vector<8x32xf32>
      %c0_136 = arith.constant 0 : index
      %c0_137 = arith.constant 0 : index
      %470 = vector.load %arg8[%c0_136, %c0_137] : memref<8x32xf32, #tpu.memory_space<vmem>>, vector<8x32xf32>
      tpu.vector_store %arg8[%c0_136, %c0_137], %469 {strides = array<i32>} : memref<8x32xf32, #tpu.memory_space<vmem>>, vector<8x32xf32>,
      %cst_138 = arith.constant 0.000000e+00 : bf16
      %471 = vector.broadcast %cst_138 : bf16 to vector<8x32xbf16>
      %c0_139 = arith.constant 0 : index
      %c0_140 = arith.constant 0 : index
      %472 = vector.load %arg9[%c0_139, %c0_140] : memref<8x32xbf16, #tpu.memory_space<vmem>>, vector<8x32xbf16>
      tpu.vector_store %arg9[%c0_139, %c0_140], %471 {strides = array<i32>} : memref<8x32xbf16, #tpu.memory_space<vmem>>, vector<8x32xbf16>,
      %cst_141 = arith.constant 0.000000e+00 : f32
      %473 = vector.broadcast %cst_141 : f32 to vector<8x32xf32>
      %c0_142 = arith.constant 0 : index
      %c0_143 = arith.constant 0 : index
      %474 = vector.load %arg10[%c0_142, %c0_143] : memref<8x32xf32, #tpu.memory_space<vmem>>, vector<8x32xf32>
      tpu.vector_store %arg10[%c0_142, %c0_143], %473 {strides = array<i32>} : memref<8x32xf32, #tpu.memory_space<vmem>>, vector<8x32xf32>,
    } else {
    }
    %c0 = arith.constant 0 : index
    %c0_1 = arith.constant 0 : index
    %3 = vector.load %arg3[%c0, %c0_1] : memref<32x128xbf16, #tpu.memory_space<vmem>>, vector<32x128xbf16>
    %c0_2 = arith.constant 0 : index
    %c0_3 = arith.constant 0 : index
    %4 = vector.load %arg4[%c0_2, %c0_3] : memref<32x128xbf16, #tpu.memory_space<vmem>>, vector<32x128xbf16>
    %5 = tpu.iota {dimensions = array<i32: 1>} : vector<8x128xi32>
    %c64_i32 = arith.constant 64 : i32
    %6 = vector.broadcast %c64_i32 : i32 to vector<8x128xi32>
    %7 = arith.cmpi sge, %5, %6 : vector<8x128xi32>
    %c96_i32 = arith.constant 96 : i32
    %8 = vector.broadcast %c96_i32 : i32 to vector<8x128xi32>
    %9 = arith.cmpi slt, %5, %8 : vector<8x128xi32>
    %10 = arith.andi %7, %9 : vector<8x128xi1>
    %c0_4 = arith.constant 0 : index
    %c0_5 = arith.constant 0 : index
    %11 = vector.load %arg7[%c0_4, %c0_5] : memref<8x32xbf16, #tpu.memory_space<vmem>>, vector<8x32xbf16>
    %c0_6 = arith.constant 0 : index
    %c0_7 = arith.constant 0 : index
    %12 = vector.load %arg8[%c0_6, %c0_7] : memref<8x32xf32, #tpu.memory_space<vmem>>, vector<8x32xf32>
    %c0_8 = arith.constant 0 : index
    %c0_9 = arith.constant 0 : index
    %13 = vector.load %arg9[%c0_8, %c0_9] : memref<8x32xbf16, #tpu.memory_space<vmem>>, vector<8x32xbf16>
    %c0_10 = arith.constant 0 : index
    %c0_11 = arith.constant 0 : index
    %14 = vector.load %arg10[%c0_10, %c0_11] : memref<8x32xf32, #tpu.memory_space<vmem>>, vector<8x32xf32>
    %c0_i32_12 = arith.constant 0 : i32
    %cst = arith.constant dense<0.000000e+00> : vector<8x128xf32>
    %15 = tpu.matmul %11, %3, %cst {dimension_numbers = #tpu.dot_dimension_numbers<[1], [0], [0], [1], [0, 0, 1, 1], [], []>} : vector<8x32xbf16>, vector<32x128xbf16>, vector<8x128xf32> -> vector<8x128xf32>
    %cst_13 = arith.constant dense<0.000000e+00> : vector<8x128xf32>
    %16 = tpu.matmul %13, %4, %cst_13 {dimension_numbers = #tpu.dot_dimension_numbers<[1], [0], [0], [1], [0, 0, 1, 1], [], []>} : vector<8x32xbf16>, vector<32x128xbf16>, vector<8x128xf32> -> vector<8x128xf32>
    %17 = arith.index_cast %c0_i32_12 : i32 to index
    %c0_14 = arith.constant 0 : index
    %c0_15 = arith.constant 0 : index
    %18 = vector.load %arg1[%17, %c0_14, %c0_15] : memref<8x8x128xbf16, #tpu.memory_space<vmem>>, vector<1x8x128xbf16>
    %19 = vector.shape_cast %18 : vector<1x8x128xbf16> to vector<8x128xbf16>
    %20 = arith.extf %19 : vector<8x128xbf16> to vector<8x128xf32>
    %21 = arith.addf %20, %15 : vector<8x128xf32>
    %c7_i32 = arith.constant 7 : i32
    %22 = arith.subi %c7_i32, %c0_i32_12 : i32
    %23 = arith.index_cast %22 : i32 to index
    %c0_16 = arith.constant 0 : index
    %c0_17 = arith.constant 0 : index
    %24 = vector.load %arg2[%23, %c0_16, %c0_17] : memref<8x8x128xbf16, #tpu.memory_space<vmem>>, vector<1x8x128xbf16>
    %25 = vector.shape_cast %24 : vector<1x8x128xbf16> to vector<8x128xbf16>
    %26 = arith.extf %25 : vector<8x128xbf16> to vector<8x128xf32>
    %27 = arith.addf %26, %16 : vector<8x128xf32>
    %28 = math.tanh %21 : vector<8x128xf32>
    %29 = arith.negf %21 : vector<8x128xf32>
    %30 = math.exp %29 : vector<8x128xf32>
    %cst_18 = arith.constant 1.000000e+00 : f32
    %31 = vector.broadcast %cst_18 : f32 to vector<8x128xf32>
    %32 = arith.addf %31, %30 : vector<8x128xf32>
    %33 = arith.divf %31, %32 : vector<8x128xf32>
    %34 = arith.select %10, %28, %33 : vector<8x128xi1>, vector<8x128xf32>
    %35 = vector.extract_strided_slice %34 {offsets = [0, 0], sizes = [8, 32], strides = [1, 1]} : vector<8x128xf32> to vector<8x32xf32>
    %36 = vector.extract_strided_slice %34 {offsets = [0, 32], sizes = [8, 32], strides = [1, 1]} : vector<8x128xf32> to vector<8x32xf32>
    %37 = vector.extract_strided_slice %34 {offsets = [0, 64], sizes = [8, 32], strides = [1, 1]} : vector<8x128xf32> to vector<8x32xf32>
    %38 = vector.extract_strided_slice %34 {offsets = [0, 96], sizes = [8, 32], strides = [1, 1]} : vector<8x128xf32> to vector<8x32xf32>
    %39 = arith.mulf %36, %12 : vector<8x32xf32>
    %40 = arith.mulf %35, %37 : vector<8x32xf32>
    %41 = arith.addf %39, %40 : vector<8x32xf32>
    %42 = math.tanh %41 : vector<8x32xf32>
    %43 = arith.mulf %38, %42 : vector<8x32xf32>
    %44 = arith.truncf %43 : vector<8x32xf32> to vector<8x32xbf16>
    %45 = math.tanh %27 : vector<8x128xf32>
    %46 = arith.negf %27 : vector<8x128xf32>
    %47 = math.exp %46 : vector<8x128xf32>
    %cst_19 = arith.constant 1.000000e+00 : f32
    %48 = vector.broadcast %cst_19 : f32 to vector<8x128xf32>
    %49 = arith.addf %48, %47 : vector<8x128xf32>
    %50 = arith.divf %48, %49 : vector<8x128xf32>
    %51 = arith.select %10, %45, %50 : vector<8x128xi1>, vector<8x128xf32>
    %52 = vector.extract_strided_slice %51 {offsets = [0, 0], sizes = [8, 32], strides = [1, 1]} : vector<8x128xf32> to vector<8x32xf32>
    %53 = vector.extract_strided_slice %51 {offsets = [0, 32], sizes = [8, 32], strides = [1, 1]} : vector<8x128xf32> to vector<8x32xf32>
    %54 = vector.extract_strided_slice %51 {offsets = [0, 64], sizes = [8, 32], strides = [1, 1]} : vector<8x128xf32> to vector<8x32xf32>
    %55 = vector.extract_strided_slice %51 {offsets = [0, 96], sizes = [8, 32], strides = [1, 1]} : vector<8x128xf32> to vector<8x32xf32>
    %56 = arith.mulf %53, %14 : vector<8x32xf32>
    %57 = arith.mulf %52, %54 : vector<8x32xf32>
    %58 = arith.addf %56, %57 : vector<8x32xf32>
    %59 = math.tanh %58 : vector<8x32xf32>
    %60 = arith.mulf %55, %59 : vector<8x32xf32>
    %61 = arith.truncf %60 : vector<8x32xf32> to vector<8x32xbf16>
    %62 = arith.index_cast %c0_i32_12 : i32 to index
    %c0_20 = arith.constant 0 : index
    %c0_21 = arith.constant 0 : index
    %63 = vector.load %arg5[%62, %c0_20, %c0_21] : memref<8x8x32xbf16, #tpu.memory_space<vmem>>, vector<1x8x32xbf16>
    %64 = vector.shape_cast %63 : vector<1x8x32xbf16> to vector<8x32xbf16>
    %65 = vector.shape_cast %44 : vector<8x32xbf16> to vector<1x8x32xbf16>
    tpu.vector_store %arg5[%62, %c0_20, %c0_21], %65 {strides = array<i32>} : memref<8x8x32xbf16, #tpu.memory_space<vmem>>, vector<1x8x32xbf16>,
    %c7_i32_22 = arith.constant 7 : i32
    %66 = arith.subi %c7_i32_22, %c0_i32_12 : i32
    %67 = arith.index_cast %66 : i32 to index
    %c0_23 = arith.constant 0 : index
    %c0_24 = arith.constant 0 : index
    %68 = vector.load %arg6[%67, %c0_23, %c0_24] : memref<8x8x32xbf16, #tpu.memory_space<vmem>>, vector<1x8x32xbf16>
    %69 = vector.shape_cast %68 : vector<1x8x32xbf16> to vector<8x32xbf16>
    %70 = vector.shape_cast %61 : vector<8x32xbf16> to vector<1x8x32xbf16>
    tpu.vector_store %arg6[%67, %c0_23, %c0_24], %70 {strides = array<i32>} : memref<8x8x32xbf16, #tpu.memory_space<vmem>>, vector<1x8x32xbf16>,
    %c1_i32 = arith.constant 1 : i32
    %cst_25 = arith.constant dense<0.000000e+00> : vector<8x128xf32>
    %71 = tpu.matmul %44, %3, %cst_25 {dimension_numbers = #tpu.dot_dimension_numbers<[1], [0], [0], [1], [0, 0, 1, 1], [], []>} : vector<8x32xbf16>, vector<32x128xbf16>, vector<8x128xf32> -> vector<8x128xf32>
    %cst_26 = arith.constant dense<0.000000e+00> : vector<8x128xf32>
    %72 = tpu.matmul %61, %4, %cst_26 {dimension_numbers = #tpu.dot_dimension_numbers<[1], [0], [0], [1], [0, 0, 1, 1], [], []>} : vector<8x32xbf16>, vector<32x128xbf16>, vector<8x128xf32> -> vector<8x128xf32>
    %73 = arith.index_cast %c1_i32 : i32 to index
    %c0_27 = arith.constant 0 : index
    %c0_28 = arith.constant 0 : index
    %74 = vector.load %arg1[%73, %c0_27, %c0_28] : memref<8x8x128xbf16, #tpu.memory_space<vmem>>, vector<1x8x128xbf16>
    %75 = vector.shape_cast %74 : vector<1x8x128xbf16> to vector<8x128xbf16>
    %76 = arith.extf %75 : vector<8x128xbf16> to vector<8x128xf32>
    %77 = arith.addf %76, %71 : vector<8x128xf32>
    %c7_i32_29 = arith.constant 7 : i32
    %78 = arith.subi %c7_i32_29, %c1_i32 : i32
    %79 = arith.index_cast %78 : i32 to index
    %c0_30 = arith.constant 0 : index
    %c0_31 = arith.constant 0 : index
    %80 = vector.load %arg2[%79, %c0_30, %c0_31] : memref<8x8x128xbf16, #tpu.memory_space<vmem>>, vector<1x8x128xbf16>
    %81 = vector.shape_cast %80 : vector<1x8x128xbf16> to vector<8x128xbf16>
    %82 = arith.extf %81 : vector<8x128xbf16> to vector<8x128xf32>
    %83 = arith.addf %82, %72 : vector<8x128xf32>
    %84 = math.tanh %77 : vector<8x128xf32>
    %85 = arith.negf %77 : vector<8x128xf32>
    %86 = math.exp %85 : vector<8x128xf32>
    %cst_32 = arith.constant 1.000000e+00 : f32
    %87 = vector.broadcast %cst_32 : f32 to vector<8x128xf32>
    %88 = arith.addf %87, %86 : vector<8x128xf32>
    %89 = arith.divf %87, %88 : vector<8x128xf32>
    %90 = arith.select %10, %84, %89 : vector<8x128xi1>, vector<8x128xf32>
    %91 = vector.extract_strided_slice %90 {offsets = [0, 0], sizes = [8, 32], strides = [1, 1]} : vector<8x128xf32> to vector<8x32xf32>
    %92 = vector.extract_strided_slice %90 {offsets = [0, 32], sizes = [8, 32], strides = [1, 1]} : vector<8x128xf32> to vector<8x32xf32>
    %93 = vector.extract_strided_slice %90 {offsets = [0, 64], sizes = [8, 32], strides = [1, 1]} : vector<8x128xf32> to vector<8x32xf32>
    %94 = vector.extract_strided_slice %90 {offsets = [0, 96], sizes = [8, 32], strides = [1, 1]} : vector<8x128xf32> to vector<8x32xf32>
    %95 = arith.mulf %92, %41 : vector<8x32xf32>
    %96 = arith.mulf %91, %93 : vector<8x32xf32>
    %97 = arith.addf %95, %96 : vector<8x32xf32>
    %98 = math.tanh %97 : vector<8x32xf32>
    %99 = arith.mulf %94, %98 : vector<8x32xf32>
    %100 = arith.truncf %99 : vector<8x32xf32> to vector<8x32xbf16>
    %101 = math.tanh %83 : vector<8x128xf32>
    %102 = arith.negf %83 : vector<8x128xf32>
    %103 = math.exp %102 : vector<8x128xf32>
    %cst_33 = arith.constant 1.000000e+00 : f32
    %104 = vector.broadcast %cst_33 : f32 to vector<8x128xf32>
    %105 = arith.addf %104, %103 : vector<8x128xf32>
    %106 = arith.divf %104, %105 : vector<8x128xf32>
    %107 = arith.select %10, %101, %106 : vector<8x128xi1>, vector<8x128xf32>
    %108 = vector.extract_strided_slice %107 {offsets = [0, 0], sizes = [8, 32], strides = [1, 1]} : vector<8x128xf32> to vector<8x32xf32>
    %109 = vector.extract_strided_slice %107 {offsets = [0, 32], sizes = [8, 32], strides = [1, 1]} : vector<8x128xf32> to vector<8x32xf32>
    %110 = vector.extract_strided_slice %107 {offsets = [0, 64], sizes = [8, 32], strides = [1, 1]} : vector<8x128xf32> to vector<8x32xf32>
    %111 = vector.extract_strided_slice %107 {offsets = [0, 96], sizes = [8, 32], strides = [1, 1]} : vector<8x128xf32> to vector<8x32xf32>
    %112 = arith.mulf %109, %58 : vector<8x32xf32>
    %113 = arith.mulf %108, %110 : vector<8x32xf32>
    %114 = arith.addf %112, %113 : vector<8x32xf32>
    %115 = math.tanh %114 : vector<8x32xf32>
    %116 = arith.mulf %111, %115 : vector<8x32xf32>
    %117 = arith.truncf %116 : vector<8x32xf32> to vector<8x32xbf16>
    %118 = arith.index_cast %c1_i32 : i32 to index
    %c0_34 = arith.constant 0 : index
    %c0_35 = arith.constant 0 : index
    %119 = vector.load %arg5[%118, %c0_34, %c0_35] : memref<8x8x32xbf16, #tpu.memory_space<vmem>>, vector<1x8x32xbf16>
    %120 = vector.shape_cast %119 : vector<1x8x32xbf16> to vector<8x32xbf16>
    %121 = vector.shape_cast %100 : vector<8x32xbf16> to vector<1x8x32xbf16>
    tpu.vector_store %arg5[%118, %c0_34, %c0_35], %121 {strides = array<i32>} : memref<8x8x32xbf16, #tpu.memory_space<vmem>>, vector<1x8x32xbf16>,
    %c7_i32_36 = arith.constant 7 : i32
    %122 = arith.subi %c7_i32_36, %c1_i32 : i32
    %123 = arith.index_cast %122 : i32 to index
    %c0_37 = arith.constant 0 : index
    %c0_38 = arith.constant 0 : index
    %124 = vector.load %arg6[%123, %c0_37, %c0_38] : memref<8x8x32xbf16, #tpu.memory_space<vmem>>, vector<1x8x32xbf16>
    %125 = vector.shape_cast %124 : vector<1x8x32xbf16> to vector<8x32xbf16>
    %126 = vector.shape_cast %117 : vector<8x32xbf16> to vector<1x8x32xbf16>
    tpu.vector_store %arg6[%123, %c0_37, %c0_38], %126 {strides = array<i32>} : memref<8x8x32xbf16, #tpu.memory_space<vmem>>, vector<1x8x32xbf16>,
    %c2_i32 = arith.constant 2 : i32
    %cst_39 = arith.constant dense<0.000000e+00> : vector<8x128xf32>
    %127 = tpu.matmul %100, %3, %cst_39 {dimension_numbers = #tpu.dot_dimension_numbers<[1], [0], [0], [1], [0, 0, 1, 1], [], []>} : vector<8x32xbf16>, vector<32x128xbf16>, vector<8x128xf32> -> vector<8x128xf32>
    %cst_40 = arith.constant dense<0.000000e+00> : vector<8x128xf32>
    %128 = tpu.matmul %117, %4, %cst_40 {dimension_numbers = #tpu.dot_dimension_numbers<[1], [0], [0], [1], [0, 0, 1, 1], [], []>} : vector<8x32xbf16>, vector<32x128xbf16>, vector<8x128xf32> -> vector<8x128xf32>
    %129 = arith.index_cast %c2_i32 : i32 to index
    %c0_41 = arith.constant 0 : index
    %c0_42 = arith.constant 0 : index
    %130 = vector.load %arg1[%129, %c0_41, %c0_42] : memref<8x8x128xbf16, #tpu.memory_space<vmem>>, vector<1x8x128xbf16>
    %131 = vector.shape_cast %130 : vector<1x8x128xbf16> to vector<8x128xbf16>
    %132 = arith.extf %131 : vector<8x128xbf16> to vector<8x128xf32>
    %133 = arith.addf %132, %127 : vector<8x128xf32>
    %c7_i32_43 = arith.constant 7 : i32
    %134 = arith.subi %c7_i32_43, %c2_i32 : i32
    %135 = arith.index_cast %134 : i32 to index
    %c0_44 = arith.constant 0 : index
    %c0_45 = arith.constant 0 : index
    %136 = vector.load %arg2[%135, %c0_44, %c0_45] : memref<8x8x128xbf16, #tpu.memory_space<vmem>>, vector<1x8x128xbf16>
    %137 = vector.shape_cast %136 : vector<1x8x128xbf16> to vector<8x128xbf16>
    %138 = arith.extf %137 : vector<8x128xbf16> to vector<8x128xf32>
    %139 = arith.addf %138, %128 : vector<8x128xf32>
    %140 = math.tanh %133 : vector<8x128xf32>
    %141 = arith.negf %133 : vector<8x128xf32>
    %142 = math.exp %141 : vector<8x128xf32>
    %cst_46 = arith.constant 1.000000e+00 : f32
    %143 = vector.broadcast %cst_46 : f32 to vector<8x128xf32>
    %144 = arith.addf %143, %142 : vector<8x128xf32>
    %145 = arith.divf %143, %144 : vector<8x128xf32>
    %146 = arith.select %10, %140, %145 : vector<8x128xi1>, vector<8x128xf32>
    %147 = vector.extract_strided_slice %146 {offsets = [0, 0], sizes = [8, 32], strides = [1, 1]} : vector<8x128xf32> to vector<8x32xf32>
    %148 = vector.extract_strided_slice %146 {offsets = [0, 32], sizes = [8, 32], strides = [1, 1]} : vector<8x128xf32> to vector<8x32xf32>
    %149 = vector.extract_strided_slice %146 {offsets = [0, 64], sizes = [8, 32], strides = [1, 1]} : vector<8x128xf32> to vector<8x32xf32>
    %150 = vector.extract_strided_slice %146 {offsets = [0, 96], sizes = [8, 32], strides = [1, 1]} : vector<8x128xf32> to vector<8x32xf32>
    %151 = arith.mulf %148, %97 : vector<8x32xf32>
    %152 = arith.mulf %147, %149 : vector<8x32xf32>
    %153 = arith.addf %151, %152 : vector<8x32xf32>
    %154 = math.tanh %153 : vector<8x32xf32>
    %155 = arith.mulf %150, %154 : vector<8x32xf32>
    %156 = arith.truncf %155 : vector<8x32xf32> to vector<8x32xbf16>
    %157 = math.tanh %139 : vector<8x128xf32>
    %158 = arith.negf %139 : vector<8x128xf32>
    %159 = math.exp %158 : vector<8x128xf32>
    %cst_47 = arith.constant 1.000000e+00 : f32
    %160 = vector.broadcast %cst_47 : f32 to vector<8x128xf32>
    %161 = arith.addf %160, %159 : vector<8x128xf32>
    %162 = arith.divf %160, %161 : vector<8x128xf32>
    %163 = arith.select %10, %157, %162 : vector<8x128xi1>, vector<8x128xf32>
    %164 = vector.extract_strided_slice %163 {offsets = [0, 0], sizes = [8, 32], strides = [1, 1]} : vector<8x128xf32> to vector<8x32xf32>
    %165 = vector.extract_strided_slice %163 {offsets = [0, 32], sizes = [8, 32], strides = [1, 1]} : vector<8x128xf32> to vector<8x32xf32>
    %166 = vector.extract_strided_slice %163 {offsets = [0, 64], sizes = [8, 32], strides = [1, 1]} : vector<8x128xf32> to vector<8x32xf32>
    %167 = vector.extract_strided_slice %163 {offsets = [0, 96], sizes = [8, 32], strides = [1, 1]} : vector<8x128xf32> to vector<8x32xf32>
    %168 = arith.mulf %165, %114 : vector<8x32xf32>
    %169 = arith.mulf %164, %166 : vector<8x32xf32>
    %170 = arith.addf %168, %169 : vector<8x32xf32>
    %171 = math.tanh %170 : vector<8x32xf32>
    %172 = arith.mulf %167, %171 : vector<8x32xf32>
    %173 = arith.truncf %172 : vector<8x32xf32> to vector<8x32xbf16>
    %174 = arith.index_cast %c2_i32 : i32 to index
    %c0_48 = arith.constant 0 : index
    %c0_49 = arith.constant 0 : index
    %175 = vector.load %arg5[%174, %c0_48, %c0_49] : memref<8x8x32xbf16, #tpu.memory_space<vmem>>, vector<1x8x32xbf16>
    %176 = vector.shape_cast %175 : vector<1x8x32xbf16> to vector<8x32xbf16>
    %177 = vector.shape_cast %156 : vector<8x32xbf16> to vector<1x8x32xbf16>
    tpu.vector_store %arg5[%174, %c0_48, %c0_49], %177 {strides = array<i32>} : memref<8x8x32xbf16, #tpu.memory_space<vmem>>, vector<1x8x32xbf16>,
    %c7_i32_50 = arith.constant 7 : i32
    %178 = arith.subi %c7_i32_50, %c2_i32 : i32
    %179 = arith.index_cast %178 : i32 to index
    %c0_51 = arith.constant 0 : index
    %c0_52 = arith.constant 0 : index
    %180 = vector.load %arg6[%179, %c0_51, %c0_52] : memref<8x8x32xbf16, #tpu.memory_space<vmem>>, vector<1x8x32xbf16>
    %181 = vector.shape_cast %180 : vector<1x8x32xbf16> to vector<8x32xbf16>
    %182 = vector.shape_cast %173 : vector<8x32xbf16> to vector<1x8x32xbf16>
    tpu.vector_store %arg6[%179, %c0_51, %c0_52], %182 {strides = array<i32>} : memref<8x8x32xbf16, #tpu.memory_space<vmem>>, vector<1x8x32xbf16>,
    %c3_i32 = arith.constant 3 : i32
    %cst_53 = arith.constant dense<0.000000e+00> : vector<8x128xf32>
    %183 = tpu.matmul %156, %3, %cst_53 {dimension_numbers = #tpu.dot_dimension_numbers<[1], [0], [0], [1], [0, 0, 1, 1], [], []>} : vector<8x32xbf16>, vector<32x128xbf16>, vector<8x128xf32> -> vector<8x128xf32>
    %cst_54 = arith.constant dense<0.000000e+00> : vector<8x128xf32>
    %184 = tpu.matmul %173, %4, %cst_54 {dimension_numbers = #tpu.dot_dimension_numbers<[1], [0], [0], [1], [0, 0, 1, 1], [], []>} : vector<8x32xbf16>, vector<32x128xbf16>, vector<8x128xf32> -> vector<8x128xf32>
    %185 = arith.index_cast %c3_i32 : i32 to index
    %c0_55 = arith.constant 0 : index
    %c0_56 = arith.constant 0 : index
    %186 = vector.load %arg1[%185, %c0_55, %c0_56] : memref<8x8x128xbf16, #tpu.memory_space<vmem>>, vector<1x8x128xbf16>
    %187 = vector.shape_cast %186 : vector<1x8x128xbf16> to vector<8x128xbf16>
    %188 = arith.extf %187 : vector<8x128xbf16> to vector<8x128xf32>
    %189 = arith.addf %188, %183 : vector<8x128xf32>
    %c7_i32_57 = arith.constant 7 : i32
    %190 = arith.subi %c7_i32_57, %c3_i32 : i32
    %191 = arith.index_cast %190 : i32 to index
    %c0_58 = arith.constant 0 : index
    %c0_59 = arith.constant 0 : index
    %192 = vector.load %arg2[%191, %c0_58, %c0_59] : memref<8x8x128xbf16, #tpu.memory_space<vmem>>, vector<1x8x128xbf16>
    %193 = vector.shape_cast %192 : vector<1x8x128xbf16> to vector<8x128xbf16>
    %194 = arith.extf %193 : vector<8x128xbf16> to vector<8x128xf32>
    %195 = arith.addf %194, %184 : vector<8x128xf32>
    %196 = math.tanh %189 : vector<8x128xf32>
    %197 = arith.negf %189 : vector<8x128xf32>
    %198 = math.exp %197 : vector<8x128xf32>
    %cst_60 = arith.constant 1.000000e+00 : f32
    %199 = vector.broadcast %cst_60 : f32 to vector<8x128xf32>
    %200 = arith.addf %199, %198 : vector<8x128xf32>
    %201 = arith.divf %199, %200 : vector<8x128xf32>
    %202 = arith.select %10, %196, %201 : vector<8x128xi1>, vector<8x128xf32>
    %203 = vector.extract_strided_slice %202 {offsets = [0, 0], sizes = [8, 32], strides = [1, 1]} : vector<8x128xf32> to vector<8x32xf32>
    %204 = vector.extract_strided_slice %202 {offsets = [0, 32], sizes = [8, 32], strides = [1, 1]} : vector<8x128xf32> to vector<8x32xf32>
    %205 = vector.extract_strided_slice %202 {offsets = [0, 64], sizes = [8, 32], strides = [1, 1]} : vector<8x128xf32> to vector<8x32xf32>
    %206 = vector.extract_strided_slice %202 {offsets = [0, 96], sizes = [8, 32], strides = [1, 1]} : vector<8x128xf32> to vector<8x32xf32>
    %207 = arith.mulf %204, %153 : vector<8x32xf32>
    %208 = arith.mulf %203, %205 : vector<8x32xf32>
    %209 = arith.addf %207, %208 : vector<8x32xf32>
    %210 = math.tanh %209 : vector<8x32xf32>
    %211 = arith.mulf %206, %210 : vector<8x32xf32>
    %212 = arith.truncf %211 : vector<8x32xf32> to vector<8x32xbf16>
    %213 = math.tanh %195 : vector<8x128xf32>
    %214 = arith.negf %195 : vector<8x128xf32>
    %215 = math.exp %214 : vector<8x128xf32>
    %cst_61 = arith.constant 1.000000e+00 : f32
    %216 = vector.broadcast %cst_61 : f32 to vector<8x128xf32>
    %217 = arith.addf %216, %215 : vector<8x128xf32>
    %218 = arith.divf %216, %217 : vector<8x128xf32>
    %219 = arith.select %10, %213, %218 : vector<8x128xi1>, vector<8x128xf32>
    %220 = vector.extract_strided_slice %219 {offsets = [0, 0], sizes = [8, 32], strides = [1, 1]} : vector<8x128xf32> to vector<8x32xf32>
    %221 = vector.extract_strided_slice %219 {offsets = [0, 32], sizes = [8, 32], strides = [1, 1]} : vector<8x128xf32> to vector<8x32xf32>
    %222 = vector.extract_strided_slice %219 {offsets = [0, 64], sizes = [8, 32], strides = [1, 1]} : vector<8x128xf32> to vector<8x32xf32>
    %223 = vector.extract_strided_slice %219 {offsets = [0, 96], sizes = [8, 32], strides = [1, 1]} : vector<8x128xf32> to vector<8x32xf32>
    %224 = arith.mulf %221, %170 : vector<8x32xf32>
    %225 = arith.mulf %220, %222 : vector<8x32xf32>
    %226 = arith.addf %224, %225 : vector<8x32xf32>
    %227 = math.tanh %226 : vector<8x32xf32>
    %228 = arith.mulf %223, %227 : vector<8x32xf32>
    %229 = arith.truncf %228 : vector<8x32xf32> to vector<8x32xbf16>
    %230 = arith.index_cast %c3_i32 : i32 to index
    %c0_62 = arith.constant 0 : index
    %c0_63 = arith.constant 0 : index
    %231 = vector.load %arg5[%230, %c0_62, %c0_63] : memref<8x8x32xbf16, #tpu.memory_space<vmem>>, vector<1x8x32xbf16>
    %232 = vector.shape_cast %231 : vector<1x8x32xbf16> to vector<8x32xbf16>
    %233 = vector.shape_cast %212 : vector<8x32xbf16> to vector<1x8x32xbf16>
    tpu.vector_store %arg5[%230, %c0_62, %c0_63], %233 {strides = array<i32>} : memref<8x8x32xbf16, #tpu.memory_space<vmem>>, vector<1x8x32xbf16>,
    %c7_i32_64 = arith.constant 7 : i32
    %234 = arith.subi %c7_i32_64, %c3_i32 : i32
    %235 = arith.index_cast %234 : i32 to index
    %c0_65 = arith.constant 0 : index
    %c0_66 = arith.constant 0 : index
    %236 = vector.load %arg6[%235, %c0_65, %c0_66] : memref<8x8x32xbf16, #tpu.memory_space<vmem>>, vector<1x8x32xbf16>
    %237 = vector.shape_cast %236 : vector<1x8x32xbf16> to vector<8x32xbf16>
    %238 = vector.shape_cast %229 : vector<8x32xbf16> to vector<1x8x32xbf16>
    tpu.vector_store %arg6[%235, %c0_65, %c0_66], %238 {strides = array<i32>} : memref<8x8x32xbf16, #tpu.memory_space<vmem>>, vector<1x8x32xbf16>,
    %c4_i32 = arith.constant 4 : i32
    %cst_67 = arith.constant dense<0.000000e+00> : vector<8x128xf32>
    %239 = tpu.matmul %212, %3, %cst_67 {dimension_numbers = #tpu.dot_dimension_numbers<[1], [0], [0], [1], [0, 0, 1, 1], [], []>} : vector<8x32xbf16>, vector<32x128xbf16>, vector<8x128xf32> -> vector<8x128xf32>
    %cst_68 = arith.constant dense<0.000000e+00> : vector<8x128xf32>
    %240 = tpu.matmul %229, %4, %cst_68 {dimension_numbers = #tpu.dot_dimension_numbers<[1], [0], [0], [1], [0, 0, 1, 1], [], []>} : vector<8x32xbf16>, vector<32x128xbf16>, vector<8x128xf32> -> vector<8x128xf32>
    %241 = arith.index_cast %c4_i32 : i32 to index
    %c0_69 = arith.constant 0 : index
    %c0_70 = arith.constant 0 : index
    %242 = vector.load %arg1[%241, %c0_69, %c0_70] : memref<8x8x128xbf16, #tpu.memory_space<vmem>>, vector<1x8x128xbf16>
    %243 = vector.shape_cast %242 : vector<1x8x128xbf16> to vector<8x128xbf16>
    %244 = arith.extf %243 : vector<8x128xbf16> to vector<8x128xf32>
    %245 = arith.addf %244, %239 : vector<8x128xf32>
    %c7_i32_71 = arith.constant 7 : i32
    %246 = arith.subi %c7_i32_71, %c4_i32 : i32
    %247 = arith.index_cast %246 : i32 to index
    %c0_72 = arith.constant 0 : index
    %c0_73 = arith.constant 0 : index
    %248 = vector.load %arg2[%247, %c0_72, %c0_73] : memref<8x8x128xbf16, #tpu.memory_space<vmem>>, vector<1x8x128xbf16>
    %249 = vector.shape_cast %248 : vector<1x8x128xbf16> to vector<8x128xbf16>
    %250 = arith.extf %249 : vector<8x128xbf16> to vector<8x128xf32>
    %251 = arith.addf %250, %240 : vector<8x128xf32>
    %252 = math.tanh %245 : vector<8x128xf32>
    %253 = arith.negf %245 : vector<8x128xf32>
    %254 = math.exp %253 : vector<8x128xf32>
    %cst_74 = arith.constant 1.000000e+00 : f32
    %255 = vector.broadcast %cst_74 : f32 to vector<8x128xf32>
    %256 = arith.addf %255, %254 : vector<8x128xf32>
    %257 = arith.divf %255, %256 : vector<8x128xf32>
    %258 = arith.select %10, %252, %257 : vector<8x128xi1>, vector<8x128xf32>
    %259 = vector.extract_strided_slice %258 {offsets = [0, 0], sizes = [8, 32], strides = [1, 1]} : vector<8x128xf32> to vector<8x32xf32>
    %260 = vector.extract_strided_slice %258 {offsets = [0, 32], sizes = [8, 32], strides = [1, 1]} : vector<8x128xf32> to vector<8x32xf32>
    %261 = vector.extract_strided_slice %258 {offsets = [0, 64], sizes = [8, 32], strides = [1, 1]} : vector<8x128xf32> to vector<8x32xf32>
    %262 = vector.extract_strided_slice %258 {offsets = [0, 96], sizes = [8, 32], strides = [1, 1]} : vector<8x128xf32> to vector<8x32xf32>
    %263 = arith.mulf %260, %209 : vector<8x32xf32>
    %264 = arith.mulf %259, %261 : vector<8x32xf32>
    %265 = arith.addf %263, %264 : vector<8x32xf32>
    %266 = math.tanh %265 : vector<8x32xf32>
    %267 = arith.mulf %262, %266 : vector<8x32xf32>
    %268 = arith.truncf %267 : vector<8x32xf32> to vector<8x32xbf16>
    %269 = math.tanh %251 : vector<8x128xf32>
    %270 = arith.negf %251 : vector<8x128xf32>
    %271 = math.exp %270 : vector<8x128xf32>
    %cst_75 = arith.constant 1.000000e+00 : f32
    %272 = vector.broadcast %cst_75 : f32 to vector<8x128xf32>
    %273 = arith.addf %272, %271 : vector<8x128xf32>
    %274 = arith.divf %272, %273 : vector<8x128xf32>
    %275 = arith.select %10, %269, %274 : vector<8x128xi1>, vector<8x128xf32>
    %276 = vector.extract_strided_slice %275 {offsets = [0, 0], sizes = [8, 32], strides = [1, 1]} : vector<8x128xf32> to vector<8x32xf32>
    %277 = vector.extract_strided_slice %275 {offsets = [0, 32], sizes = [8, 32], strides = [1, 1]} : vector<8x128xf32> to vector<8x32xf32>
    %278 = vector.extract_strided_slice %275 {offsets = [0, 64], sizes = [8, 32], strides = [1, 1]} : vector<8x128xf32> to vector<8x32xf32>
    %279 = vector.extract_strided_slice %275 {offsets = [0, 96], sizes = [8, 32], strides = [1, 1]} : vector<8x128xf32> to vector<8x32xf32>
    %280 = arith.mulf %277, %226 : vector<8x32xf32>
    %281 = arith.mulf %276, %278 : vector<8x32xf32>
    %282 = arith.addf %280, %281 : vector<8x32xf32>
    %283 = math.tanh %282 : vector<8x32xf32>
    %284 = arith.mulf %279, %283 : vector<8x32xf32>
    %285 = arith.truncf %284 : vector<8x32xf32> to vector<8x32xbf16>
    %286 = arith.index_cast %c4_i32 : i32 to index
    %c0_76 = arith.constant 0 : index
    %c0_77 = arith.constant 0 : index
    %287 = vector.load %arg5[%286, %c0_76, %c0_77] : memref<8x8x32xbf16, #tpu.memory_space<vmem>>, vector<1x8x32xbf16>
    %288 = vector.shape_cast %287 : vector<1x8x32xbf16> to vector<8x32xbf16>
    %289 = vector.shape_cast %268 : vector<8x32xbf16> to vector<1x8x32xbf16>
    tpu.vector_store %arg5[%286, %c0_76, %c0_77], %289 {strides = array<i32>} : memref<8x8x32xbf16, #tpu.memory_space<vmem>>, vector<1x8x32xbf16>,
    %c7_i32_78 = arith.constant 7 : i32
    %290 = arith.subi %c7_i32_78, %c4_i32 : i32
    %291 = arith.index_cast %290 : i32 to index
    %c0_79 = arith.constant 0 : index
    %c0_80 = arith.constant 0 : index
    %292 = vector.load %arg6[%291, %c0_79, %c0_80] : memref<8x8x32xbf16, #tpu.memory_space<vmem>>, vector<1x8x32xbf16>
    %293 = vector.shape_cast %292 : vector<1x8x32xbf16> to vector<8x32xbf16>
    %294 = vector.shape_cast %285 : vector<8x32xbf16> to vector<1x8x32xbf16>
    tpu.vector_store %arg6[%291, %c0_79, %c0_80], %294 {strides = array<i32>} : memref<8x8x32xbf16, #tpu.memory_space<vmem>>, vector<1x8x32xbf16>,
    %c5_i32 = arith.constant 5 : i32
    %cst_81 = arith.constant dense<0.000000e+00> : vector<8x128xf32>
    %295 = tpu.matmul %268, %3, %cst_81 {dimension_numbers = #tpu.dot_dimension_numbers<[1], [0], [0], [1], [0, 0, 1, 1], [], []>} : vector<8x32xbf16>, vector<32x128xbf16>, vector<8x128xf32> -> vector<8x128xf32>
    %cst_82 = arith.constant dense<0.000000e+00> : vector<8x128xf32>
    %296 = tpu.matmul %285, %4, %cst_82 {dimension_numbers = #tpu.dot_dimension_numbers<[1], [0], [0], [1], [0, 0, 1, 1], [], []>} : vector<8x32xbf16>, vector<32x128xbf16>, vector<8x128xf32> -> vector<8x128xf32>
    %297 = arith.index_cast %c5_i32 : i32 to index
    %c0_83 = arith.constant 0 : index
    %c0_84 = arith.constant 0 : index
    %298 = vector.load %arg1[%297, %c0_83, %c0_84] : memref<8x8x128xbf16, #tpu.memory_space<vmem>>, vector<1x8x128xbf16>
    %299 = vector.shape_cast %298 : vector<1x8x128xbf16> to vector<8x128xbf16>
    %300 = arith.extf %299 : vector<8x128xbf16> to vector<8x128xf32>
    %301 = arith.addf %300, %295 : vector<8x128xf32>
    %c7_i32_85 = arith.constant 7 : i32
    %302 = arith.subi %c7_i32_85, %c5_i32 : i32
    %303 = arith.index_cast %302 : i32 to index
    %c0_86 = arith.constant 0 : index
    %c0_87 = arith.constant 0 : index
    %304 = vector.load %arg2[%303, %c0_86, %c0_87] : memref<8x8x128xbf16, #tpu.memory_space<vmem>>, vector<1x8x128xbf16>
    %305 = vector.shape_cast %304 : vector<1x8x128xbf16> to vector<8x128xbf16>
    %306 = arith.extf %305 : vector<8x128xbf16> to vector<8x128xf32>
    %307 = arith.addf %306, %296 : vector<8x128xf32>
    %308 = math.tanh %301 : vector<8x128xf32>
    %309 = arith.negf %301 : vector<8x128xf32>
    %310 = math.exp %309 : vector<8x128xf32>
    %cst_88 = arith.constant 1.000000e+00 : f32
    %311 = vector.broadcast %cst_88 : f32 to vector<8x128xf32>
    %312 = arith.addf %311, %310 : vector<8x128xf32>
    %313 = arith.divf %311, %312 : vector<8x128xf32>
    %314 = arith.select %10, %308, %313 : vector<8x128xi1>, vector<8x128xf32>
    %315 = vector.extract_strided_slice %314 {offsets = [0, 0], sizes = [8, 32], strides = [1, 1]} : vector<8x128xf32> to vector<8x32xf32>
    %316 = vector.extract_strided_slice %314 {offsets = [0, 32], sizes = [8, 32], strides = [1, 1]} : vector<8x128xf32> to vector<8x32xf32>
    %317 = vector.extract_strided_slice %314 {offsets = [0, 64], sizes = [8, 32], strides = [1, 1]} : vector<8x128xf32> to vector<8x32xf32>
    %318 = vector.extract_strided_slice %314 {offsets = [0, 96], sizes = [8, 32], strides = [1, 1]} : vector<8x128xf32> to vector<8x32xf32>
    %319 = arith.mulf %316, %265 : vector<8x32xf32>
    %320 = arith.mulf %315, %317 : vector<8x32xf32>
    %321 = arith.addf %319, %320 : vector<8x32xf32>
    %322 = math.tanh %321 : vector<8x32xf32>
    %323 = arith.mulf %318, %322 : vector<8x32xf32>
    %324 = arith.truncf %323 : vector<8x32xf32> to vector<8x32xbf16>
    %325 = math.tanh %307 : vector<8x128xf32>
    %326 = arith.negf %307 : vector<8x128xf32>
    %327 = math.exp %326 : vector<8x128xf32>
    %cst_89 = arith.constant 1.000000e+00 : f32
    %328 = vector.broadcast %cst_89 : f32 to vector<8x128xf32>
    %329 = arith.addf %328, %327 : vector<8x128xf32>
    %330 = arith.divf %328, %329 : vector<8x128xf32>
    %331 = arith.select %10, %325, %330 : vector<8x128xi1>, vector<8x128xf32>
    %332 = vector.extract_strided_slice %331 {offsets = [0, 0], sizes = [8, 32], strides = [1, 1]} : vector<8x128xf32> to vector<8x32xf32>
    %333 = vector.extract_strided_slice %331 {offsets = [0, 32], sizes = [8, 32], strides = [1, 1]} : vector<8x128xf32> to vector<8x32xf32>
    %334 = vector.extract_strided_slice %331 {offsets = [0, 64], sizes = [8, 32], strides = [1, 1]} : vector<8x128xf32> to vector<8x32xf32>
    %335 = vector.extract_strided_slice %331 {offsets = [0, 96], sizes = [8, 32], strides = [1, 1]} : vector<8x128xf32> to vector<8x32xf32>
    %336 = arith.mulf %333, %282 : vector<8x32xf32>
    %337 = arith.mulf %332, %334 : vector<8x32xf32>
    %338 = arith.addf %336, %337 : vector<8x32xf32>
    %339 = math.tanh %338 : vector<8x32xf32>
    %340 = arith.mulf %335, %339 : vector<8x32xf32>
    %341 = arith.truncf %340 : vector<8x32xf32> to vector<8x32xbf16>
    %342 = arith.index_cast %c5_i32 : i32 to index
    %c0_90 = arith.constant 0 : index
    %c0_91 = arith.constant 0 : index
    %343 = vector.load %arg5[%342, %c0_90, %c0_91] : memref<8x8x32xbf16, #tpu.memory_space<vmem>>, vector<1x8x32xbf16>
    %344 = vector.shape_cast %343 : vector<1x8x32xbf16> to vector<8x32xbf16>
    %345 = vector.shape_cast %324 : vector<8x32xbf16> to vector<1x8x32xbf16>
    tpu.vector_store %arg5[%342, %c0_90, %c0_91], %345 {strides = array<i32>} : memref<8x8x32xbf16, #tpu.memory_space<vmem>>, vector<1x8x32xbf16>,
    %c7_i32_92 = arith.constant 7 : i32
    %346 = arith.subi %c7_i32_92, %c5_i32 : i32
    %347 = arith.index_cast %346 : i32 to index
    %c0_93 = arith.constant 0 : index
    %c0_94 = arith.constant 0 : index
    %348 = vector.load %arg6[%347, %c0_93, %c0_94] : memref<8x8x32xbf16, #tpu.memory_space<vmem>>, vector<1x8x32xbf16>
    %349 = vector.shape_cast %348 : vector<1x8x32xbf16> to vector<8x32xbf16>
    %350 = vector.shape_cast %341 : vector<8x32xbf16> to vector<1x8x32xbf16>
    tpu.vector_store %arg6[%347, %c0_93, %c0_94], %350 {strides = array<i32>} : memref<8x8x32xbf16, #tpu.memory_space<vmem>>, vector<1x8x32xbf16>,
    %c6_i32 = arith.constant 6 : i32
    %cst_95 = arith.constant dense<0.000000e+00> : vector<8x128xf32>
    %351 = tpu.matmul %324, %3, %cst_95 {dimension_numbers = #tpu.dot_dimension_numbers<[1], [0], [0], [1], [0, 0, 1, 1], [], []>} : vector<8x32xbf16>, vector<32x128xbf16>, vector<8x128xf32> -> vector<8x128xf32>
    %cst_96 = arith.constant dense<0.000000e+00> : vector<8x128xf32>
    %352 = tpu.matmul %341, %4, %cst_96 {dimension_numbers = #tpu.dot_dimension_numbers<[1], [0], [0], [1], [0, 0, 1, 1], [], []>} : vector<8x32xbf16>, vector<32x128xbf16>, vector<8x128xf32> -> vector<8x128xf32>
    %353 = arith.index_cast %c6_i32 : i32 to index
    %c0_97 = arith.constant 0 : index
    %c0_98 = arith.constant 0 : index
    %354 = vector.load %arg1[%353, %c0_97, %c0_98] : memref<8x8x128xbf16, #tpu.memory_space<vmem>>, vector<1x8x128xbf16>
    %355 = vector.shape_cast %354 : vector<1x8x128xbf16> to vector<8x128xbf16>
    %356 = arith.extf %355 : vector<8x128xbf16> to vector<8x128xf32>
    %357 = arith.addf %356, %351 : vector<8x128xf32>
    %c7_i32_99 = arith.constant 7 : i32
    %358 = arith.subi %c7_i32_99, %c6_i32 : i32
    %359 = arith.index_cast %358 : i32 to index
    %c0_100 = arith.constant 0 : index
    %c0_101 = arith.constant 0 : index
    %360 = vector.load %arg2[%359, %c0_100, %c0_101] : memref<8x8x128xbf16, #tpu.memory_space<vmem>>, vector<1x8x128xbf16>
    %361 = vector.shape_cast %360 : vector<1x8x128xbf16> to vector<8x128xbf16>
    %362 = arith.extf %361 : vector<8x128xbf16> to vector<8x128xf32>
    %363 = arith.addf %362, %352 : vector<8x128xf32>
    %364 = math.tanh %357 : vector<8x128xf32>
    %365 = arith.negf %357 : vector<8x128xf32>
    %366 = math.exp %365 : vector<8x128xf32>
    %cst_102 = arith.constant 1.000000e+00 : f32
    %367 = vector.broadcast %cst_102 : f32 to vector<8x128xf32>
    %368 = arith.addf %367, %366 : vector<8x128xf32>
    %369 = arith.divf %367, %368 : vector<8x128xf32>
    %370 = arith.select %10, %364, %369 : vector<8x128xi1>, vector<8x128xf32>
    %371 = vector.extract_strided_slice %370 {offsets = [0, 0], sizes = [8, 32], strides = [1, 1]} : vector<8x128xf32> to vector<8x32xf32>
    %372 = vector.extract_strided_slice %370 {offsets = [0, 32], sizes = [8, 32], strides = [1, 1]} : vector<8x128xf32> to vector<8x32xf32>
    %373 = vector.extract_strided_slice %370 {offsets = [0, 64], sizes = [8, 32], strides = [1, 1]} : vector<8x128xf32> to vector<8x32xf32>
    %374 = vector.extract_strided_slice %370 {offsets = [0, 96], sizes = [8, 32], strides = [1, 1]} : vector<8x128xf32> to vector<8x32xf32>
    %375 = arith.mulf %372, %321 : vector<8x32xf32>
    %376 = arith.mulf %371, %373 : vector<8x32xf32>
    %377 = arith.addf %375, %376 : vector<8x32xf32>
    %378 = math.tanh %377 : vector<8x32xf32>
    %379 = arith.mulf %374, %378 : vector<8x32xf32>
    %380 = arith.truncf %379 : vector<8x32xf32> to vector<8x32xbf16>
    %381 = math.tanh %363 : vector<8x128xf32>
    %382 = arith.negf %363 : vector<8x128xf32>
    %383 = math.exp %382 : vector<8x128xf32>
    %cst_103 = arith.constant 1.000000e+00 : f32
    %384 = vector.broadcast %cst_103 : f32 to vector<8x128xf32>
    %385 = arith.addf %384, %383 : vector<8x128xf32>
    %386 = arith.divf %384, %385 : vector<8x128xf32>
    %387 = arith.select %10, %381, %386 : vector<8x128xi1>, vector<8x128xf32>
    %388 = vector.extract_strided_slice %387 {offsets = [0, 0], sizes = [8, 32], strides = [1, 1]} : vector<8x128xf32> to vector<8x32xf32>
    %389 = vector.extract_strided_slice %387 {offsets = [0, 32], sizes = [8, 32], strides = [1, 1]} : vector<8x128xf32> to vector<8x32xf32>
    %390 = vector.extract_strided_slice %387 {offsets = [0, 64], sizes = [8, 32], strides = [1, 1]} : vector<8x128xf32> to vector<8x32xf32>
    %391 = vector.extract_strided_slice %387 {offsets = [0, 96], sizes = [8, 32], strides = [1, 1]} : vector<8x128xf32> to vector<8x32xf32>
    %392 = arith.mulf %389, %338 : vector<8x32xf32>
    %393 = arith.mulf %388, %390 : vector<8x32xf32>
    %394 = arith.addf %392, %393 : vector<8x32xf32>
    %395 = math.tanh %394 : vector<8x32xf32>
    %396 = arith.mulf %391, %395 : vector<8x32xf32>
    %397 = arith.truncf %396 : vector<8x32xf32> to vector<8x32xbf16>
    %398 = arith.index_cast %c6_i32 : i32 to index
    %c0_104 = arith.constant 0 : index
    %c0_105 = arith.constant 0 : index
    %399 = vector.load %arg5[%398, %c0_104, %c0_105] : memref<8x8x32xbf16, #tpu.memory_space<vmem>>, vector<1x8x32xbf16>
    %400 = vector.shape_cast %399 : vector<1x8x32xbf16> to vector<8x32xbf16>
    %401 = vector.shape_cast %380 : vector<8x32xbf16> to vector<1x8x32xbf16>
    tpu.vector_store %arg5[%398, %c0_104, %c0_105], %401 {strides = array<i32>} : memref<8x8x32xbf16, #tpu.memory_space<vmem>>, vector<1x8x32xbf16>,
    %c7_i32_106 = arith.constant 7 : i32
    %402 = arith.subi %c7_i32_106, %c6_i32 : i32
    %403 = arith.index_cast %402 : i32 to index
    %c0_107 = arith.constant 0 : index
    %c0_108 = arith.constant 0 : index
    %404 = vector.load %arg6[%403, %c0_107, %c0_108] : memref<8x8x32xbf16, #tpu.memory_space<vmem>>, vector<1x8x32xbf16>
    %405 = vector.shape_cast %404 : vector<1x8x32xbf16> to vector<8x32xbf16>
    %406 = vector.shape_cast %397 : vector<8x32xbf16> to vector<1x8x32xbf16>
    tpu.vector_store %arg6[%403, %c0_107, %c0_108], %406 {strides = array<i32>} : memref<8x8x32xbf16, #tpu.memory_space<vmem>>, vector<1x8x32xbf16>,
    %c7_i32_109 = arith.constant 7 : i32
    %cst_110 = arith.constant dense<0.000000e+00> : vector<8x128xf32>
    %407 = tpu.matmul %380, %3, %cst_110 {dimension_numbers = #tpu.dot_dimension_numbers<[1], [0], [0], [1], [0, 0, 1, 1], [], []>} : vector<8x32xbf16>, vector<32x128xbf16>, vector<8x128xf32> -> vector<8x128xf32>
    %cst_111 = arith.constant dense<0.000000e+00> : vector<8x128xf32>
    %408 = tpu.matmul %397, %4, %cst_111 {dimension_numbers = #tpu.dot_dimension_numbers<[1], [0], [0], [1], [0, 0, 1, 1], [], []>} : vector<8x32xbf16>, vector<32x128xbf16>, vector<8x128xf32> -> vector<8x128xf32>
    %409 = arith.index_cast %c7_i32_109 : i32 to index
    %c0_112 = arith.constant 0 : index
    %c0_113 = arith.constant 0 : index
    %410 = vector.load %arg1[%409, %c0_112, %c0_113] : memref<8x8x128xbf16, #tpu.memory_space<vmem>>, vector<1x8x128xbf16>
    %411 = vector.shape_cast %410 : vector<1x8x128xbf16> to vector<8x128xbf16>
    %412 = arith.extf %411 : vector<8x128xbf16> to vector<8x128xf32>
    %413 = arith.addf %412, %407 : vector<8x128xf32>
    %c7_i32_114 = arith.constant 7 : i32
    %414 = arith.subi %c7_i32_114, %c7_i32_109 : i32
    %415 = arith.index_cast %414 : i32 to index
    %c0_115 = arith.constant 0 : index
    %c0_116 = arith.constant 0 : index
    %416 = vector.load %arg2[%415, %c0_115, %c0_116] : memref<8x8x128xbf16, #tpu.memory_space<vmem>>, vector<1x8x128xbf16>
    %417 = vector.shape_cast %416 : vector<1x8x128xbf16> to vector<8x128xbf16>
    %418 = arith.extf %417 : vector<8x128xbf16> to vector<8x128xf32>
    %419 = arith.addf %418, %408 : vector<8x128xf32>
    %420 = math.tanh %413 : vector<8x128xf32>
    %421 = arith.negf %413 : vector<8x128xf32>
    %422 = math.exp %421 : vector<8x128xf32>
    %cst_117 = arith.constant 1.000000e+00 : f32
    %423 = vector.broadcast %cst_117 : f32 to vector<8x128xf32>
    %424 = arith.addf %423, %422 : vector<8x128xf32>
    %425 = arith.divf %423, %424 : vector<8x128xf32>
    %426 = arith.select %10, %420, %425 : vector<8x128xi1>, vector<8x128xf32>
    %427 = vector.extract_strided_slice %426 {offsets = [0, 0], sizes = [8, 32], strides = [1, 1]} : vector<8x128xf32> to vector<8x32xf32>
    %428 = vector.extract_strided_slice %426 {offsets = [0, 32], sizes = [8, 32], strides = [1, 1]} : vector<8x128xf32> to vector<8x32xf32>
    %429 = vector.extract_strided_slice %426 {offsets = [0, 64], sizes = [8, 32], strides = [1, 1]} : vector<8x128xf32> to vector<8x32xf32>
    %430 = vector.extract_strided_slice %426 {offsets = [0, 96], sizes = [8, 32], strides = [1, 1]} : vector<8x128xf32> to vector<8x32xf32>
    %431 = arith.mulf %428, %377 : vector<8x32xf32>
    %432 = arith.mulf %427, %429 : vector<8x32xf32>
    %433 = arith.addf %431, %432 : vector<8x32xf32>
    %434 = math.tanh %433 : vector<8x32xf32>
    %435 = arith.mulf %430, %434 : vector<8x32xf32>
    %436 = arith.truncf %435 : vector<8x32xf32> to vector<8x32xbf16>
    %437 = math.tanh %419 : vector<8x128xf32>
    %438 = arith.negf %419 : vector<8x128xf32>
    %439 = math.exp %438 : vector<8x128xf32>
    %cst_118 = arith.constant 1.000000e+00 : f32
    %440 = vector.broadcast %cst_118 : f32 to vector<8x128xf32>
    %441 = arith.addf %440, %439 : vector<8x128xf32>
    %442 = arith.divf %440, %441 : vector<8x128xf32>
    %443 = arith.select %10, %437, %442 : vector<8x128xi1>, vector<8x128xf32>
    %444 = vector.extract_strided_slice %443 {offsets = [0, 0], sizes = [8, 32], strides = [1, 1]} : vector<8x128xf32> to vector<8x32xf32>
    %445 = vector.extract_strided_slice %443 {offsets = [0, 32], sizes = [8, 32], strides = [1, 1]} : vector<8x128xf32> to vector<8x32xf32>
    %446 = vector.extract_strided_slice %443 {offsets = [0, 64], sizes = [8, 32], strides = [1, 1]} : vector<8x128xf32> to vector<8x32xf32>
    %447 = vector.extract_strided_slice %443 {offsets = [0, 96], sizes = [8, 32], strides = [1, 1]} : vector<8x128xf32> to vector<8x32xf32>
    %448 = arith.mulf %445, %394 : vector<8x32xf32>
    %449 = arith.mulf %444, %446 : vector<8x32xf32>
    %450 = arith.addf %448, %449 : vector<8x32xf32>
    %451 = math.tanh %450 : vector<8x32xf32>
    %452 = arith.mulf %447, %451 : vector<8x32xf32>
    %453 = arith.truncf %452 : vector<8x32xf32> to vector<8x32xbf16>
    %454 = arith.index_cast %c7_i32_109 : i32 to index
    %c0_119 = arith.constant 0 : index
    %c0_120 = arith.constant 0 : index
    %455 = vector.load %arg5[%454, %c0_119, %c0_120] : memref<8x8x32xbf16, #tpu.memory_space<vmem>>, vector<1x8x32xbf16>
    %456 = vector.shape_cast %455 : vector<1x8x32xbf16> to vector<8x32xbf16>
    %457 = vector.shape_cast %436 : vector<8x32xbf16> to vector<1x8x32xbf16>
    tpu.vector_store %arg5[%454, %c0_119, %c0_120], %457 {strides = array<i32>} : memref<8x8x32xbf16, #tpu.memory_space<vmem>>, vector<1x8x32xbf16>,
    %c7_i32_121 = arith.constant 7 : i32
    %458 = arith.subi %c7_i32_121, %c7_i32_109 : i32
    %459 = arith.index_cast %458 : i32 to index
    %c0_122 = arith.constant 0 : index
    %c0_123 = arith.constant 0 : index
    %460 = vector.load %arg6[%459, %c0_122, %c0_123] : memref<8x8x32xbf16, #tpu.memory_space<vmem>>, vector<1x8x32xbf16>
    %461 = vector.shape_cast %460 : vector<1x8x32xbf16> to vector<8x32xbf16>
    %462 = vector.shape_cast %453 : vector<8x32xbf16> to vector<1x8x32xbf16>
    tpu.vector_store %arg6[%459, %c0_122, %c0_123], %462 {strides = array<i32>} : memref<8x8x32xbf16, #tpu.memory_space<vmem>>, vector<1x8x32xbf16>,
    %c8_i32 = arith.constant 8 : i32
    %c0_124 = arith.constant 0 : index
    %c0_125 = arith.constant 0 : index
    %463 = vector.load %arg7[%c0_124, %c0_125] : memref<8x32xbf16, #tpu.memory_space<vmem>>, vector<8x32xbf16>
    tpu.vector_store %arg7[%c0_124, %c0_125], %436 {strides = array<i32>} : memref<8x32xbf16, #tpu.memory_space<vmem>>, vector<8x32xbf16>,
    %c0_126 = arith.constant 0 : index
    %c0_127 = arith.constant 0 : index
    %464 = vector.load %arg8[%c0_126, %c0_127] : memref<8x32xf32, #tpu.memory_space<vmem>>, vector<8x32xf32>
    tpu.vector_store %arg8[%c0_126, %c0_127], %433 {strides = array<i32>} : memref<8x32xf32, #tpu.memory_space<vmem>>, vector<8x32xf32>,
    %c0_128 = arith.constant 0 : index
    %c0_129 = arith.constant 0 : index
    %465 = vector.load %arg9[%c0_128, %c0_129] : memref<8x32xbf16, #tpu.memory_space<vmem>>, vector<8x32xbf16>
    tpu.vector_store %arg9[%c0_128, %c0_129], %453 {strides = array<i32>} : memref<8x32xbf16, #tpu.memory_space<vmem>>, vector<8x32xbf16>,
    %c0_130 = arith.constant 0 : index
    %c0_131 = arith.constant 0 : index
    %466 = vector.load %arg10[%c0_130, %c0_131] : memref<8x32xf32, #tpu.memory_space<vmem>>, vector<8x32xf32>
    tpu.vector_store %arg10[%c0_130, %c0_131], %450 {strides = array<i32>} : memref<8x32xf32, #tpu.memory_space<vmem>>, vector<8x32xf32>,
    return
  }
  func.func @transform_0(%arg0: i32) -> (i32, i32, i32) {
    %c0_i32 = arith.constant 0 : i32
    %c0_i32_0 = arith.constant 0 : i32
    %c0_i32_1 = arith.constant 0 : i32
    return %arg0, %c0_i32, %c0_i32_0 : i32, i32, i32
  }
  func.func @transform_1(%arg0: i32) -> (i32, i32, i32) {
    %c0_i32 = arith.constant 0 : i32
    %0 = arith.subi %c0_i32, %arg0 : i32
    %c0_i32_0 = arith.constant 0 : i32
    %c0_i32_1 = arith.constant 0 : i32
    %c0_i32_2 = arith.constant 0 : i32
    return %0, %c0_i32_0, %c0_i32_1 : i32, i32, i32
  }
  func.func @transform_2(%arg0: i32) -> (i32, i32) {
    %c0_i32 = arith.constant 0 : i32
    %c0_i32_0 = arith.constant 0 : i32
    %c0_i32_1 = arith.constant 0 : i32
    return %c0_i32, %c0_i32_0 : i32, i32
  }
  func.func @transform_3(%arg0: i32) -> (i32, i32) {
    %c0_i32 = arith.constant 0 : i32
    %c0_i32_0 = arith.constant 0 : i32
    %c0_i32_1 = arith.constant 0 : i32
    return %c0_i32, %c0_i32_0 : i32, i32
  }
  func.func @transform_4(%arg0: i32) -> (i32, i32, i32) {
    %c0_i32 = arith.constant 0 : i32
    %c0_i32_0 = arith.constant 0 : i32
    %c0_i32_1 = arith.constant 0 : i32
    return %arg0, %c0_i32, %c0_i32_0 : i32, i32, i32
  }
  func.func @transform_5(%arg0: i32) -> (i32, i32, i32) {
    %c0_i32 = arith.constant 0 : i32
    %0 = arith.subi %c0_i32, %arg0 : i32
    %c0_i32_0 = arith.constant 0 : i32
    %c0_i32_1 = arith.constant 0 : i32
    %c0_i32_2 = arith.constant 0 : i32
    return %0, %c0_i32_0, %c0_i32_1 : i32, i32, i32
  }
}

module attributes {stable_mosaic.version = 11 : i64} {
  func.func @_proj1_kernel(%arg0: i32, %arg1: memref<64x16xf32, #tpu.memory_space<vmem>>, %arg2: memref<16x256xf32, #tpu.memory_space<vmem>>, %arg3: memref<1x256xf32, #tpu.memory_space<vmem>>, %arg4: memref<64x128xbf16, #tpu.memory_space<vmem>>, %arg5: memref<64x128xbf16, #tpu.memory_space<vmem>>) attributes {dimension_semantics = [#tpu.dimension_semantics<parallel>], iteration_bounds = array<i64: 1>, scalar_prefetch = 0 : i64, scratch_operands = 0 : i64, tpu.core_type = #tpu.core_type<tc>, window_params = [{transform_indices = @transform_0, window_bounds = array<i64: 64, 16>}, {pipeline_mode = #tpu.pipeline_mode<synchronous>, transform_indices = @transform_1, window_bounds = array<i64: 16, 256>}, {pipeline_mode = #tpu.pipeline_mode<synchronous>, transform_indices = @transform_2, window_bounds = array<i64: 1, 256>}, {transform_indices = @transform_3, window_bounds = array<i64: 64, 128>}, {transform_indices = @transform_4, window_bounds = array<i64: 64, 128>}]} {
    %c0 = arith.constant 0 : index
    %c0_0 = arith.constant 0 : index
    %0 = vector.load %arg1[%c0, %c0_0] : memref<64x16xf32, #tpu.memory_space<vmem>>, vector<64x16xf32>
    %c0_1 = arith.constant 0 : index
    %c0_2 = arith.constant 0 : index
    %1 = vector.load %arg2[%c0_1, %c0_2] : memref<16x256xf32, #tpu.memory_space<vmem>>, vector<16x256xf32>
    %cst = arith.constant dense<0.000000e+00> : vector<64x256xf32>
    %2 = tpu.matmul %0, %1, %cst {dimension_numbers = #tpu.dot_dimension_numbers<[1], [0], [0], [1], [0, 0, 1, 1], [], []>} : vector<64x16xf32>, vector<16x256xf32>, vector<64x256xf32> -> vector<64x256xf32>
    %c0_3 = arith.constant 0 : index
    %c0_4 = arith.constant 0 : index
    %3 = vector.load %arg3[%c0_3, %c0_4] : memref<1x256xf32, #tpu.memory_space<vmem>>, vector<1x256xf32>
    %4 = vector.broadcast %3 : vector<1x256xf32> to vector<64x256xf32>
    %5 = arith.addf %2, %4 : vector<64x256xf32>
    %6 = vector.extract_strided_slice %5 {offsets = [0, 0], sizes = [64, 128], strides = [1, 1]} : vector<64x256xf32> to vector<64x128xf32>
    %7 = arith.truncf %6 : vector<64x128xf32> to vector<64x128xbf16>
    %c0_5 = arith.constant 0 : index
    %c0_6 = arith.constant 0 : index
    %8 = vector.load %arg4[%c0_5, %c0_6] : memref<64x128xbf16, #tpu.memory_space<vmem>>, vector<64x128xbf16>
    tpu.vector_store %arg4[%c0_5, %c0_6], %7 {strides = array<i32>} : memref<64x128xbf16, #tpu.memory_space<vmem>>, vector<64x128xbf16>,
    %9 = vector.extract_strided_slice %5 {offsets = [0, 128], sizes = [64, 128], strides = [1, 1]} : vector<64x256xf32> to vector<64x128xf32>
    %10 = arith.truncf %9 : vector<64x128xf32> to vector<64x128xbf16>
    %c0_7 = arith.constant 0 : index
    %c0_8 = arith.constant 0 : index
    %11 = vector.load %arg5[%c0_7, %c0_8] : memref<64x128xbf16, #tpu.memory_space<vmem>>, vector<64x128xbf16>
    tpu.vector_store %arg5[%c0_7, %c0_8], %10 {strides = array<i32>} : memref<64x128xbf16, #tpu.memory_space<vmem>>, vector<64x128xbf16>,
    return
  }
  func.func @transform_0(%arg0: i32) -> (i32, i32) {
    %c0_i32 = arith.constant 0 : i32
    %c0_i32_0 = arith.constant 0 : i32
    return %arg0, %c0_i32 : i32, i32
  }
  func.func @transform_1(%arg0: i32) -> (i32, i32) {
    %c0_i32 = arith.constant 0 : i32
    %c0_i32_0 = arith.constant 0 : i32
    %c0_i32_1 = arith.constant 0 : i32
    return %c0_i32, %c0_i32_0 : i32, i32
  }
  func.func @transform_2(%arg0: i32) -> (i32, i32) {
    %c0_i32 = arith.constant 0 : i32
    %c0_i32_0 = arith.constant 0 : i32
    %c0_i32_1 = arith.constant 0 : i32
    return %c0_i32, %c0_i32_0 : i32, i32
  }
  func.func @transform_3(%arg0: i32) -> (i32, i32) {
    %c0_i32 = arith.constant 0 : i32
    %c0_i32_0 = arith.constant 0 : i32
    return %arg0, %c0_i32 : i32, i32
  }
  func.func @transform_4(%arg0: i32) -> (i32, i32) {
    %c0_i32 = arith.constant 0 : i32
    %c0_i32_0 = arith.constant 0 : i32
    return %arg0, %c0_i32 : i32, i32
  }
}

module attributes {stable_mosaic.version = 11 : i64} {
  func.func @_layer2_head_kernel(%arg0: i32, %arg1: memref<8x8x32xbf16, #tpu.memory_space<vmem>>, %arg2: memref<8x8x32xbf16, #tpu.memory_space<vmem>>, %arg3: memref<32x128xf32, #tpu.memory_space<vmem>>, %arg4: memref<32x128xf32, #tpu.memory_space<vmem>>, %arg5: memref<1x128xf32, #tpu.memory_space<vmem>>, %arg6: memref<32x128xbf16, #tpu.memory_space<vmem>>, %arg7: memref<32x128xf32, #tpu.memory_space<vmem>>, %arg8: memref<32x128xf32, #tpu.memory_space<vmem>>, %arg9: memref<1x128xf32, #tpu.memory_space<vmem>>, %arg10: memref<32x32xf32, #tpu.memory_space<vmem>>, %arg11: memref<32x32xf32, #tpu.memory_space<vmem>>, %arg12: memref<1x32xf32, #tpu.memory_space<vmem>>, %arg13: memref<32x32xf32, #tpu.memory_space<vmem>>, %arg14: memref<1x32xf32, #tpu.memory_space<vmem>>, %arg15: memref<32x34xf32, #tpu.memory_space<vmem>>, %arg16: memref<1x34xf32, #tpu.memory_space<vmem>>, %arg17: memref<8x34xf32, #tpu.memory_space<vmem>>, %arg18: memref<8x8x128xf32, #tpu.memory_space<vmem>>, %arg19: memref<8x32xbf16, #tpu.memory_space<vmem>>, %arg20: memref<8x32xf32, #tpu.memory_space<vmem>>) attributes {dimension_semantics = [#tpu.dimension_semantics<arbitrary>], iteration_bounds = array<i64: 1>, scalar_prefetch = 0 : i64, scratch_operands = 3 : i64, tpu.core_type = #tpu.core_type<tc>, window_params = [{transform_indices = @transform_0, window_bounds = array<i64: 8, 8, 32>}, {transform_indices = @transform_1, window_bounds = array<i64: 8, 8, 32>}, {pipeline_mode = #tpu.pipeline_mode<synchronous>, transform_indices = @transform_2, window_bounds = array<i64: 32, 128>}, {pipeline_mode = #tpu.pipeline_mode<synchronous>, transform_indices = @transform_3, window_bounds = array<i64: 32, 128>}, {pipeline_mode = #tpu.pipeline_mode<synchronous>, transform_indices = @transform_4, window_bounds = array<i64: 1, 128>}, {pipeline_mode = #tpu.pipeline_mode<synchronous>, transform_indices = @transform_5, window_bounds = array<i64: 32, 128>}, {pipeline_mode = #tpu.pipeline_mode<synchronous>, transform_indices = @transform_6, window_bounds = array<i64: 32, 128>}, {pipeline_mode = #tpu.pipeline_mode<synchronous>, transform_indices = @transform_7, window_bounds = array<i64: 32, 128>}, {pipeline_mode = #tpu.pipeline_mode<synchronous>, transform_indices = @transform_8, window_bounds = array<i64: 1, 128>}, {pipeline_mode = #tpu.pipeline_mode<synchronous>, transform_indices = @transform_9, window_bounds = array<i64: 32, 32>}, {pipeline_mode = #tpu.pipeline_mode<synchronous>, transform_indices = @transform_10, window_bounds = array<i64: 32, 32>}, {pipeline_mode = #tpu.pipeline_mode<synchronous>, transform_indices = @transform_11, window_bounds = array<i64: 1, 32>}, {pipeline_mode = #tpu.pipeline_mode<synchronous>, transform_indices = @transform_12, window_bounds = array<i64: 32, 32>}, {pipeline_mode = #tpu.pipeline_mode<synchronous>, transform_indices = @transform_13, window_bounds = array<i64: 1, 32>}, {pipeline_mode = #tpu.pipeline_mode<synchronous>, transform_indices = @transform_14, window_bounds = array<i64: 32, 34>}, {pipeline_mode = #tpu.pipeline_mode<synchronous>, transform_indices = @transform_15, window_bounds = array<i64: 1, 34>}, {pipeline_mode = #tpu.pipeline_mode<synchronous>, transform_indices = @transform_16, window_bounds = array<i64: 8, 34>}]} {
    %c0 = arith.constant 0 : index
    %c0_0 = arith.constant 0 : index
    %c0_1 = arith.constant 0 : index
    %0 = vector.load %arg1[%c0, %c0_0, %c0_1] : memref<8x8x32xbf16, #tpu.memory_space<vmem>>, vector<8x8x32xbf16>
    %1 = vector.shape_cast %0 : vector<8x8x32xbf16> to vector<64x32xbf16>
    %c0_2 = arith.constant 0 : index
    %c0_3 = arith.constant 0 : index
    %c0_4 = arith.constant 0 : index
    %2 = vector.load %arg2[%c0_2, %c0_3, %c0_4] : memref<8x8x32xbf16, #tpu.memory_space<vmem>>, vector<8x8x32xbf16>
    %3 = vector.shape_cast %2 : vector<8x8x32xbf16> to vector<64x32xbf16>
    %c0_5 = arith.constant 0 : index
    %c0_6 = arith.constant 0 : index
    %4 = vector.load %arg3[%c0_5, %c0_6] : memref<32x128xf32, #tpu.memory_space<vmem>>, vector<32x128xf32>
    %cst = arith.constant dense<0.000000e+00> : vector<64x128xf32>
    %5 = tpu.matmul %1, %4, %cst {dimension_numbers = #tpu.dot_dimension_numbers<[1], [0], [0], [1], [0, 0, 1, 1], [], []>} : vector<64x32xbf16>, vector<32x128xf32>, vector<64x128xf32> -> vector<64x128xf32>
    %c0_7 = arith.constant 0 : index
    %c0_8 = arith.constant 0 : index
    %6 = vector.load %arg4[%c0_7, %c0_8] : memref<32x128xf32, #tpu.memory_space<vmem>>, vector<32x128xf32>
    %cst_9 = arith.constant dense<0.000000e+00> : vector<64x128xf32>
    %7 = tpu.matmul %3, %6, %cst_9 {dimension_numbers = #tpu.dot_dimension_numbers<[1], [0], [0], [1], [0, 0, 1, 1], [], []>} : vector<64x32xbf16>, vector<32x128xf32>, vector<64x128xf32> -> vector<64x128xf32>
    %8 = arith.addf %5, %7 : vector<64x128xf32>
    %c0_10 = arith.constant 0 : index
    %c0_11 = arith.constant 0 : index
    %9 = vector.load %arg5[%c0_10, %c0_11] : memref<1x128xf32, #tpu.memory_space<vmem>>, vector<1x128xf32>
    %10 = vector.broadcast %9 : vector<1x128xf32> to vector<64x128xf32>
    %11 = arith.addf %8, %10 : vector<64x128xf32>
    %12 = vector.shape_cast %11 : vector<64x128xf32> to vector<8x8x128xf32>
    %c0_12 = arith.constant 0 : index
    %c0_13 = arith.constant 0 : index
    %c0_14 = arith.constant 0 : index
    %13 = vector.load %arg18[%c0_12, %c0_13, %c0_14] : memref<8x8x128xf32, #tpu.memory_space<vmem>>, vector<8x8x128xf32>
    tpu.vector_store %arg18[%c0_12, %c0_13, %c0_14], %12 {strides = array<i32>} : memref<8x8x128xf32, #tpu.memory_space<vmem>>, vector<8x8x128xf32>,
    %c0_i32 = arith.constant 0 : i32
    %14 = arith.cmpi eq, %arg0, %c0_i32 : i32
    %15 = arith.extui %14 : i1 to i32
    %c0_i32_15 = arith.constant 0 : i32
    %16 = arith.cmpi ne, %15, %c0_i32_15 : i32
    scf.if %16 {
      %cst_61 = arith.constant 0.000000e+00 : bf16
      %207 = vector.broadcast %cst_61 : bf16 to vector<8x32xbf16>
      %c0_62 = arith.constant 0 : index
      %c0_63 = arith.constant 0 : index
      %208 = vector.load %arg19[%c0_62, %c0_63] : memref<8x32xbf16, #tpu.memory_space<vmem>>, vector<8x32xbf16>
      tpu.vector_store %arg19[%c0_62, %c0_63], %207 {strides = array<i32>} : memref<8x32xbf16, #tpu.memory_space<vmem>>, vector<8x32xbf16>,
      %cst_64 = arith.constant 0.000000e+00 : f32
      %209 = vector.broadcast %cst_64 : f32 to vector<8x32xf32>
      %c0_65 = arith.constant 0 : index
      %c0_66 = arith.constant 0 : index
      %210 = vector.load %arg20[%c0_65, %c0_66] : memref<8x32xf32, #tpu.memory_space<vmem>>, vector<8x32xf32>
      tpu.vector_store %arg20[%c0_65, %c0_66], %209 {strides = array<i32>} : memref<8x32xf32, #tpu.memory_space<vmem>>, vector<8x32xf32>,
    } else {
    }
    %c0_16 = arith.constant 0 : index
    %c0_17 = arith.constant 0 : index
    %17 = vector.load %arg6[%c0_16, %c0_17] : memref<32x128xbf16, #tpu.memory_space<vmem>>, vector<32x128xbf16>
    %18 = tpu.iota {dimensions = array<i32: 1>} : vector<8x128xi32>
    %c64_i32 = arith.constant 64 : i32
    %19 = vector.broadcast %c64_i32 : i32 to vector<8x128xi32>
    %20 = arith.cmpi sge, %18, %19 : vector<8x128xi32>
    %c96_i32 = arith.constant 96 : i32
    %21 = vector.broadcast %c96_i32 : i32 to vector<8x128xi32>
    %22 = arith.cmpi slt, %18, %21 : vector<8x128xi32>
    %23 = arith.andi %20, %22 : vector<8x128xi1>
    %c0_18 = arith.constant 0 : index
    %c0_19 = arith.constant 0 : index
    %24 = vector.load %arg19[%c0_18, %c0_19] : memref<8x32xbf16, #tpu.memory_space<vmem>>, vector<8x32xbf16>
    %c0_20 = arith.constant 0 : index
    %c0_21 = arith.constant 0 : index
    %25 = vector.load %arg20[%c0_20, %c0_21] : memref<8x32xf32, #tpu.memory_space<vmem>>, vector<8x32xf32>
    %c0_i32_22 = arith.constant 0 : i32
    %26 = arith.index_cast %c0_i32_22 : i32 to index
    %c0_23 = arith.constant 0 : index
    %c0_24 = arith.constant 0 : index
    %27 = vector.load %arg18[%26, %c0_23, %c0_24] : memref<8x8x128xf32, #tpu.memory_space<vmem>>, vector<1x8x128xf32>
    %28 = vector.shape_cast %27 : vector<1x8x128xf32> to vector<8x128xf32>
    %cst_25 = arith.constant dense<0.000000e+00> : vector<8x128xf32>
    %29 = tpu.matmul %24, %17, %cst_25 {dimension_numbers = #tpu.dot_dimension_numbers<[1], [0], [0], [1], [0, 0, 1, 1], [], []>} : vector<8x32xbf16>, vector<32x128xbf16>, vector<8x128xf32> -> vector<8x128xf32>
    %30 = arith.addf %28, %29 : vector<8x128xf32>
    %31 = math.tanh %30 : vector<8x128xf32>
    %32 = arith.negf %30 : vector<8x128xf32>
    %33 = math.exp %32 : vector<8x128xf32>
    %cst_26 = arith.constant 1.000000e+00 : f32
    %34 = vector.broadcast %cst_26 : f32 to vector<8x128xf32>
    %35 = arith.addf %34, %33 : vector<8x128xf32>
    %36 = arith.divf %34, %35 : vector<8x128xf32>
    %37 = arith.select %23, %31, %36 : vector<8x128xi1>, vector<8x128xf32>
    %38 = vector.extract_strided_slice %37 {offsets = [0, 0], sizes = [8, 32], strides = [1, 1]} : vector<8x128xf32> to vector<8x32xf32>
    %39 = vector.extract_strided_slice %37 {offsets = [0, 32], sizes = [8, 32], strides = [1, 1]} : vector<8x128xf32> to vector<8x32xf32>
    %40 = vector.extract_strided_slice %37 {offsets = [0, 64], sizes = [8, 32], strides = [1, 1]} : vector<8x128xf32> to vector<8x32xf32>
    %41 = vector.extract_strided_slice %37 {offsets = [0, 96], sizes = [8, 32], strides = [1, 1]} : vector<8x128xf32> to vector<8x32xf32>
    %42 = arith.mulf %39, %25 : vector<8x32xf32>
    %43 = arith.mulf %38, %40 : vector<8x32xf32>
    %44 = arith.addf %42, %43 : vector<8x32xf32>
    %45 = math.tanh %44 : vector<8x32xf32>
    %46 = arith.mulf %41, %45 : vector<8x32xf32>
    %47 = arith.truncf %46 : vector<8x32xf32> to vector<8x32xbf16>
    %c1_i32 = arith.constant 1 : i32
    %48 = arith.index_cast %c1_i32 : i32 to index
    %c0_27 = arith.constant 0 : index
    %c0_28 = arith.constant 0 : index
    %49 = vector.load %arg18[%48, %c0_27, %c0_28] : memref<8x8x128xf32, #tpu.memory_space<vmem>>, vector<1x8x128xf32>
    %50 = vector.shape_cast %49 : vector<1x8x128xf32> to vector<8x128xf32>
    %cst_29 = arith.constant dense<0.000000e+00> : vector<8x128xf32>
    %51 = tpu.matmul %47, %17, %cst_29 {dimension_numbers = #tpu.dot_dimension_numbers<[1], [0], [0], [1], [0, 0, 1, 1], [], []>} : vector<8x32xbf16>, vector<32x128xbf16>, vector<8x128xf32> -> vector<8x128xf32>
    %52 = arith.addf %50, %51 : vector<8x128xf32>
    %53 = math.tanh %52 : vector<8x128xf32>
    %54 = arith.negf %52 : vector<8x128xf32>
    %55 = math.exp %54 : vector<8x128xf32>
    %cst_30 = arith.constant 1.000000e+00 : f32
    %56 = vector.broadcast %cst_30 : f32 to vector<8x128xf32>
    %57 = arith.addf %56, %55 : vector<8x128xf32>
    %58 = arith.divf %56, %57 : vector<8x128xf32>
    %59 = arith.select %23, %53, %58 : vector<8x128xi1>, vector<8x128xf32>
    %60 = vector.extract_strided_slice %59 {offsets = [0, 0], sizes = [8, 32], strides = [1, 1]} : vector<8x128xf32> to vector<8x32xf32>
    %61 = vector.extract_strided_slice %59 {offsets = [0, 32], sizes = [8, 32], strides = [1, 1]} : vector<8x128xf32> to vector<8x32xf32>
    %62 = vector.extract_strided_slice %59 {offsets = [0, 64], sizes = [8, 32], strides = [1, 1]} : vector<8x128xf32> to vector<8x32xf32>
    %63 = vector.extract_strided_slice %59 {offsets = [0, 96], sizes = [8, 32], strides = [1, 1]} : vector<8x128xf32> to vector<8x32xf32>
    %64 = arith.mulf %61, %44 : vector<8x32xf32>
    %65 = arith.mulf %60, %62 : vector<8x32xf32>
    %66 = arith.addf %64, %65 : vector<8x32xf32>
    %67 = math.tanh %66 : vector<8x32xf32>
    %68 = arith.mulf %63, %67 : vector<8x32xf32>
    %69 = arith.truncf %68 : vector<8x32xf32> to vector<8x32xbf16>
    %c2_i32 = arith.constant 2 : i32
    %70 = arith.index_cast %c2_i32 : i32 to index
    %c0_31 = arith.constant 0 : index
    %c0_32 = arith.constant 0 : index
    %71 = vector.load %arg18[%70, %c0_31, %c0_32] : memref<8x8x128xf32, #tpu.memory_space<vmem>>, vector<1x8x128xf32>
    %72 = vector.shape_cast %71 : vector<1x8x128xf32> to vector<8x128xf32>
    %cst_33 = arith.constant dense<0.000000e+00> : vector<8x128xf32>
    %73 = tpu.matmul %69, %17, %cst_33 {dimension_numbers = #tpu.dot_dimension_numbers<[1], [0], [0], [1], [0, 0, 1, 1], [], []>} : vector<8x32xbf16>, vector<32x128xbf16>, vector<8x128xf32> -> vector<8x128xf32>
    %74 = arith.addf %72, %73 : vector<8x128xf32>
    %75 = math.tanh %74 : vector<8x128xf32>
    %76 = arith.negf %74 : vector<8x128xf32>
    %77 = math.exp %76 : vector<8x128xf32>
    %cst_34 = arith.constant 1.000000e+00 : f32
    %78 = vector.broadcast %cst_34 : f32 to vector<8x128xf32>
    %79 = arith.addf %78, %77 : vector<8x128xf32>
    %80 = arith.divf %78, %79 : vector<8x128xf32>
    %81 = arith.select %23, %75, %80 : vector<8x128xi1>, vector<8x128xf32>
    %82 = vector.extract_strided_slice %81 {offsets = [0, 0], sizes = [8, 32], strides = [1, 1]} : vector<8x128xf32> to vector<8x32xf32>
    %83 = vector.extract_strided_slice %81 {offsets = [0, 32], sizes = [8, 32], strides = [1, 1]} : vector<8x128xf32> to vector<8x32xf32>
    %84 = vector.extract_strided_slice %81 {offsets = [0, 64], sizes = [8, 32], strides = [1, 1]} : vector<8x128xf32> to vector<8x32xf32>
    %85 = vector.extract_strided_slice %81 {offsets = [0, 96], sizes = [8, 32], strides = [1, 1]} : vector<8x128xf32> to vector<8x32xf32>
    %86 = arith.mulf %83, %66 : vector<8x32xf32>
    %87 = arith.mulf %82, %84 : vector<8x32xf32>
    %88 = arith.addf %86, %87 : vector<8x32xf32>
    %89 = math.tanh %88 : vector<8x32xf32>
    %90 = arith.mulf %85, %89 : vector<8x32xf32>
    %91 = arith.truncf %90 : vector<8x32xf32> to vector<8x32xbf16>
    %c3_i32 = arith.constant 3 : i32
    %92 = arith.index_cast %c3_i32 : i32 to index
    %c0_35 = arith.constant 0 : index
    %c0_36 = arith.constant 0 : index
    %93 = vector.load %arg18[%92, %c0_35, %c0_36] : memref<8x8x128xf32, #tpu.memory_space<vmem>>, vector<1x8x128xf32>
    %94 = vector.shape_cast %93 : vector<1x8x128xf32> to vector<8x128xf32>
    %cst_37 = arith.constant dense<0.000000e+00> : vector<8x128xf32>
    %95 = tpu.matmul %91, %17, %cst_37 {dimension_numbers = #tpu.dot_dimension_numbers<[1], [0], [0], [1], [0, 0, 1, 1], [], []>} : vector<8x32xbf16>, vector<32x128xbf16>, vector<8x128xf32> -> vector<8x128xf32>
    %96 = arith.addf %94, %95 : vector<8x128xf32>
    %97 = math.tanh %96 : vector<8x128xf32>
    %98 = arith.negf %96 : vector<8x128xf32>
    %99 = math.exp %98 : vector<8x128xf32>
    %cst_38 = arith.constant 1.000000e+00 : f32
    %100 = vector.broadcast %cst_38 : f32 to vector<8x128xf32>
    %101 = arith.addf %100, %99 : vector<8x128xf32>
    %102 = arith.divf %100, %101 : vector<8x128xf32>
    %103 = arith.select %23, %97, %102 : vector<8x128xi1>, vector<8x128xf32>
    %104 = vector.extract_strided_slice %103 {offsets = [0, 0], sizes = [8, 32], strides = [1, 1]} : vector<8x128xf32> to vector<8x32xf32>
    %105 = vector.extract_strided_slice %103 {offsets = [0, 32], sizes = [8, 32], strides = [1, 1]} : vector<8x128xf32> to vector<8x32xf32>
    %106 = vector.extract_strided_slice %103 {offsets = [0, 64], sizes = [8, 32], strides = [1, 1]} : vector<8x128xf32> to vector<8x32xf32>
    %107 = vector.extract_strided_slice %103 {offsets = [0, 96], sizes = [8, 32], strides = [1, 1]} : vector<8x128xf32> to vector<8x32xf32>
    %108 = arith.mulf %105, %88 : vector<8x32xf32>
    %109 = arith.mulf %104, %106 : vector<8x32xf32>
    %110 = arith.addf %108, %109 : vector<8x32xf32>
    %111 = math.tanh %110 : vector<8x32xf32>
    %112 = arith.mulf %107, %111 : vector<8x32xf32>
    %113 = arith.truncf %112 : vector<8x32xf32> to vector<8x32xbf16>
    %c4_i32 = arith.constant 4 : i32
    %114 = arith.index_cast %c4_i32 : i32 to index
    %c0_39 = arith.constant 0 : index
    %c0_40 = arith.constant 0 : index
    %115 = vector.load %arg18[%114, %c0_39, %c0_40] : memref<8x8x128xf32, #tpu.memory_space<vmem>>, vector<1x8x128xf32>
    %116 = vector.shape_cast %115 : vector<1x8x128xf32> to vector<8x128xf32>
    %cst_41 = arith.constant dense<0.000000e+00> : vector<8x128xf32>
    %117 = tpu.matmul %113, %17, %cst_41 {dimension_numbers = #tpu.dot_dimension_numbers<[1], [0], [0], [1], [0, 0, 1, 1], [], []>} : vector<8x32xbf16>, vector<32x128xbf16>, vector<8x128xf32> -> vector<8x128xf32>
    %118 = arith.addf %116, %117 : vector<8x128xf32>
    %119 = math.tanh %118 : vector<8x128xf32>
    %120 = arith.negf %118 : vector<8x128xf32>
    %121 = math.exp %120 : vector<8x128xf32>
    %cst_42 = arith.constant 1.000000e+00 : f32
    %122 = vector.broadcast %cst_42 : f32 to vector<8x128xf32>
    %123 = arith.addf %122, %121 : vector<8x128xf32>
    %124 = arith.divf %122, %123 : vector<8x128xf32>
    %125 = arith.select %23, %119, %124 : vector<8x128xi1>, vector<8x128xf32>
    %126 = vector.extract_strided_slice %125 {offsets = [0, 0], sizes = [8, 32], strides = [1, 1]} : vector<8x128xf32> to vector<8x32xf32>
    %127 = vector.extract_strided_slice %125 {offsets = [0, 32], sizes = [8, 32], strides = [1, 1]} : vector<8x128xf32> to vector<8x32xf32>
    %128 = vector.extract_strided_slice %125 {offsets = [0, 64], sizes = [8, 32], strides = [1, 1]} : vector<8x128xf32> to vector<8x32xf32>
    %129 = vector.extract_strided_slice %125 {offsets = [0, 96], sizes = [8, 32], strides = [1, 1]} : vector<8x128xf32> to vector<8x32xf32>
    %130 = arith.mulf %127, %110 : vector<8x32xf32>
    %131 = arith.mulf %126, %128 : vector<8x32xf32>
    %132 = arith.addf %130, %131 : vector<8x32xf32>
    %133 = math.tanh %132 : vector<8x32xf32>
    %134 = arith.mulf %129, %133 : vector<8x32xf32>
    %135 = arith.truncf %134 : vector<8x32xf32> to vector<8x32xbf16>
    %c5_i32 = arith.constant 5 : i32
    %136 = arith.index_cast %c5_i32 : i32 to index
    %c0_43 = arith.constant 0 : index
    %c0_44 = arith.constant 0 : index
    %137 = vector.load %arg18[%136, %c0_43, %c0_44] : memref<8x8x128xf32, #tpu.memory_space<vmem>>, vector<1x8x128xf32>
    %138 = vector.shape_cast %137 : vector<1x8x128xf32> to vector<8x128xf32>
    %cst_45 = arith.constant dense<0.000000e+00> : vector<8x128xf32>
    %139 = tpu.matmul %135, %17, %cst_45 {dimension_numbers = #tpu.dot_dimension_numbers<[1], [0], [0], [1], [0, 0, 1, 1], [], []>} : vector<8x32xbf16>, vector<32x128xbf16>, vector<8x128xf32> -> vector<8x128xf32>
    %140 = arith.addf %138, %139 : vector<8x128xf32>
    %141 = math.tanh %140 : vector<8x128xf32>
    %142 = arith.negf %140 : vector<8x128xf32>
    %143 = math.exp %142 : vector<8x128xf32>
    %cst_46 = arith.constant 1.000000e+00 : f32
    %144 = vector.broadcast %cst_46 : f32 to vector<8x128xf32>
    %145 = arith.addf %144, %143 : vector<8x128xf32>
    %146 = arith.divf %144, %145 : vector<8x128xf32>
    %147 = arith.select %23, %141, %146 : vector<8x128xi1>, vector<8x128xf32>
    %148 = vector.extract_strided_slice %147 {offsets = [0, 0], sizes = [8, 32], strides = [1, 1]} : vector<8x128xf32> to vector<8x32xf32>
    %149 = vector.extract_strided_slice %147 {offsets = [0, 32], sizes = [8, 32], strides = [1, 1]} : vector<8x128xf32> to vector<8x32xf32>
    %150 = vector.extract_strided_slice %147 {offsets = [0, 64], sizes = [8, 32], strides = [1, 1]} : vector<8x128xf32> to vector<8x32xf32>
    %151 = vector.extract_strided_slice %147 {offsets = [0, 96], sizes = [8, 32], strides = [1, 1]} : vector<8x128xf32> to vector<8x32xf32>
    %152 = arith.mulf %149, %132 : vector<8x32xf32>
    %153 = arith.mulf %148, %150 : vector<8x32xf32>
    %154 = arith.addf %152, %153 : vector<8x32xf32>
    %155 = math.tanh %154 : vector<8x32xf32>
    %156 = arith.mulf %151, %155 : vector<8x32xf32>
    %157 = arith.truncf %156 : vector<8x32xf32> to vector<8x32xbf16>
    %c6_i32 = arith.constant 6 : i32
    %158 = arith.index_cast %c6_i32 : i32 to index
    %c0_47 = arith.constant 0 : index
    %c0_48 = arith.constant 0 : index
    %159 = vector.load %arg18[%158, %c0_47, %c0_48] : memref<8x8x128xf32, #tpu.memory_space<vmem>>, vector<1x8x128xf32>
    %160 = vector.shape_cast %159 : vector<1x8x128xf32> to vector<8x128xf32>
    %cst_49 = arith.constant dense<0.000000e+00> : vector<8x128xf32>
    %161 = tpu.matmul %157, %17, %cst_49 {dimension_numbers = #tpu.dot_dimension_numbers<[1], [0], [0], [1], [0, 0, 1, 1], [], []>} : vector<8x32xbf16>, vector<32x128xbf16>, vector<8x128xf32> -> vector<8x128xf32>
    %162 = arith.addf %160, %161 : vector<8x128xf32>
    %163 = math.tanh %162 : vector<8x128xf32>
    %164 = arith.negf %162 : vector<8x128xf32>
    %165 = math.exp %164 : vector<8x128xf32>
    %cst_50 = arith.constant 1.000000e+00 : f32
    %166 = vector.broadcast %cst_50 : f32 to vector<8x128xf32>
    %167 = arith.addf %166, %165 : vector<8x128xf32>
    %168 = arith.divf %166, %167 : vector<8x128xf32>
    %169 = arith.select %23, %163, %168 : vector<8x128xi1>, vector<8x128xf32>
    %170 = vector.extract_strided_slice %169 {offsets = [0, 0], sizes = [8, 32], strides = [1, 1]} : vector<8x128xf32> to vector<8x32xf32>
    %171 = vector.extract_strided_slice %169 {offsets = [0, 32], sizes = [8, 32], strides = [1, 1]} : vector<8x128xf32> to vector<8x32xf32>
    %172 = vector.extract_strided_slice %169 {offsets = [0, 64], sizes = [8, 32], strides = [1, 1]} : vector<8x128xf32> to vector<8x32xf32>
    %173 = vector.extract_strided_slice %169 {offsets = [0, 96], sizes = [8, 32], strides = [1, 1]} : vector<8x128xf32> to vector<8x32xf32>
    %174 = arith.mulf %171, %154 : vector<8x32xf32>
    %175 = arith.mulf %170, %172 : vector<8x32xf32>
    %176 = arith.addf %174, %175 : vector<8x32xf32>
    %177 = math.tanh %176 : vector<8x32xf32>
    %178 = arith.mulf %173, %177 : vector<8x32xf32>
    %179 = arith.truncf %178 : vector<8x32xf32> to vector<8x32xbf16>
    %c7_i32 = arith.constant 7 : i32
    %180 = arith.index_cast %c7_i32 : i32 to index
    %c0_51 = arith.constant 0 : index
    %c0_52 = arith.constant 0 : index
    %181 = vector.load %arg18[%180, %c0_51, %c0_52] : memref<8x8x128xf32, #tpu.memory_space<vmem>>, vector<1x8x128xf32>
    %182 = vector.shape_cast %181 : vector<1x8x128xf32> to vector<8x128xf32>
    %cst_53 = arith.constant dense<0.000000e+00> : vector<8x128xf32>
    %183 = tpu.matmul %179, %17, %cst_53 {dimension_numbers = #tpu.dot_dimension_numbers<[1], [0], [0], [1], [0, 0, 1, 1], [], []>} : vector<8x32xbf16>, vector<32x128xbf16>, vector<8x128xf32> -> vector<8x128xf32>
    %184 = arith.addf %182, %183 : vector<8x128xf32>
    %185 = math.tanh %184 : vector<8x128xf32>
    %186 = arith.negf %184 : vector<8x128xf32>
    %187 = math.exp %186 : vector<8x128xf32>
    %cst_54 = arith.constant 1.000000e+00 : f32
    %188 = vector.broadcast %cst_54 : f32 to vector<8x128xf32>
    %189 = arith.addf %188, %187 : vector<8x128xf32>
    %190 = arith.divf %188, %189 : vector<8x128xf32>
    %191 = arith.select %23, %185, %190 : vector<8x128xi1>, vector<8x128xf32>
    %192 = vector.extract_strided_slice %191 {offsets = [0, 0], sizes = [8, 32], strides = [1, 1]} : vector<8x128xf32> to vector<8x32xf32>
    %193 = vector.extract_strided_slice %191 {offsets = [0, 32], sizes = [8, 32], strides = [1, 1]} : vector<8x128xf32> to vector<8x32xf32>
    %194 = vector.extract_strided_slice %191 {offsets = [0, 64], sizes = [8, 32], strides = [1, 1]} : vector<8x128xf32> to vector<8x32xf32>
    %195 = vector.extract_strided_slice %191 {offsets = [0, 96], sizes = [8, 32], strides = [1, 1]} : vector<8x128xf32> to vector<8x32xf32>
    %196 = arith.mulf %193, %176 : vector<8x32xf32>
    %197 = arith.mulf %192, %194 : vector<8x32xf32>
    %198 = arith.addf %196, %197 : vector<8x32xf32>
    %199 = math.tanh %198 : vector<8x32xf32>
    %200 = arith.mulf %195, %199 : vector<8x32xf32>
    %201 = arith.truncf %200 : vector<8x32xf32> to vector<8x32xbf16>
    %c8_i32 = arith.constant 8 : i32
    %c0_55 = arith.constant 0 : index
    %c0_56 = arith.constant 0 : index
    %202 = vector.load %arg19[%c0_55, %c0_56] : memref<8x32xbf16, #tpu.memory_space<vmem>>, vector<8x32xbf16>
    tpu.vector_store %arg19[%c0_55, %c0_56], %201 {strides = array<i32>} : memref<8x32xbf16, #tpu.memory_space<vmem>>, vector<8x32xbf16>,
    %c0_57 = arith.constant 0 : index
    %c0_58 = arith.constant 0 : index
    %203 = vector.load %arg20[%c0_57, %c0_58] : memref<8x32xf32, #tpu.memory_space<vmem>>, vector<8x32xf32>
    tpu.vector_store %arg20[%c0_57, %c0_58], %198 {strides = array<i32>} : memref<8x32xf32, #tpu.memory_space<vmem>>, vector<8x32xf32>,
    %c0_i32_59 = arith.constant 0 : i32
    %204 = arith.cmpi eq, %arg0, %c0_i32_59 : i32
    %205 = arith.extui %204 : i1 to i32
    %c0_i32_60 = arith.constant 0 : i32
    %206 = arith.cmpi ne, %205, %c0_i32_60 : i32
    scf.if %206 {
      %207 = arith.extf %201 : vector<8x32xbf16> to vector<8x32xf32>
      %c7 = arith.constant 7 : index
      %c0_61 = arith.constant 0 : index
      %c0_62 = arith.constant 0 : index
      %208 = vector.load %arg1[%c7, %c0_61, %c0_62] : memref<8x8x32xbf16, #tpu.memory_space<vmem>>, vector<1x8x32xbf16>
      %209 = vector.shape_cast %208 : vector<1x8x32xbf16> to vector<8x32xbf16>
      %210 = arith.extf %209 : vector<8x32xbf16> to vector<8x32xf32>
      %c7_63 = arith.constant 7 : index
      %c0_64 = arith.constant 0 : index
      %c0_65 = arith.constant 0 : index
      %211 = vector.load %arg2[%c7_63, %c0_64, %c0_65] : memref<8x8x32xbf16, #tpu.memory_space<vmem>>, vector<1x8x32xbf16>
      %212 = vector.shape_cast %211 : vector<1x8x32xbf16> to vector<8x32xbf16>
      %213 = arith.extf %212 : vector<8x32xbf16> to vector<8x32xf32>
      %c0_66 = arith.constant 0 : index
      %c0_67 = arith.constant 0 : index
      %214 = vector.load %arg7[%c0_66, %c0_67] : memref<32x128xf32, #tpu.memory_space<vmem>>, vector<32x128xf32>
      %cst_68 = arith.constant dense<0.000000e+00> : vector<8x128xf32>
      %215 = tpu.matmul %210, %214, %cst_68 {dimension_numbers = #tpu.dot_dimension_numbers<[1], [0], [0], [1], [0, 0, 1, 1], [], []>} : vector<8x32xf32>, vector<32x128xf32>, vector<8x128xf32> -> vector<8x128xf32>
      %c0_69 = arith.constant 0 : index
      %c0_70 = arith.constant 0 : index
      %216 = vector.load %arg8[%c0_69, %c0_70] : memref<32x128xf32, #tpu.memory_space<vmem>>, vector<32x128xf32>
      %cst_71 = arith.constant dense<0.000000e+00> : vector<8x128xf32>
      %217 = tpu.matmul %213, %216, %cst_71 {dimension_numbers = #tpu.dot_dimension_numbers<[1], [0], [0], [1], [0, 0, 1, 1], [], []>} : vector<8x32xf32>, vector<32x128xf32>, vector<8x128xf32> -> vector<8x128xf32>
      %218 = arith.addf %215, %217 : vector<8x128xf32>
      %c0_72 = arith.constant 0 : index
      %c0_73 = arith.constant 0 : index
      %219 = vector.load %arg9[%c0_72, %c0_73] : memref<1x128xf32, #tpu.memory_space<vmem>>, vector<1x128xf32>
      %220 = vector.broadcast %219 : vector<1x128xf32> to vector<8x128xf32>
      %221 = arith.addf %218, %220 : vector<8x128xf32>
      %222 = vector.extract_strided_slice %221 {offsets = [0, 0], sizes = [8, 32], strides = [1, 1]} : vector<8x128xf32> to vector<8x32xf32>
      %223 = arith.negf %222 : vector<8x32xf32>
      %224 = math.exp %223 : vector<8x32xf32>
      %cst_74 = arith.constant 1.000000e+00 : f32
      %225 = vector.broadcast %cst_74 : f32 to vector<8x32xf32>
      %226 = arith.addf %225, %224 : vector<8x32xf32>
      %227 = arith.divf %225, %226 : vector<8x32xf32>
      %228 = vector.extract_strided_slice %221 {offsets = [0, 64], sizes = [8, 32], strides = [1, 1]} : vector<8x128xf32> to vector<8x32xf32>
      %229 = math.tanh %228 : vector<8x32xf32>
      %230 = vector.extract_strided_slice %221 {offsets = [0, 96], sizes = [8, 32], strides = [1, 1]} : vector<8x128xf32> to vector<8x32xf32>
      %231 = arith.negf %230 : vector<8x32xf32>
      %232 = math.exp %231 : vector<8x32xf32>
      %cst_75 = arith.constant 1.000000e+00 : f32
      %233 = vector.broadcast %cst_75 : f32 to vector<8x32xf32>
      %234 = arith.addf %233, %232 : vector<8x32xf32>
      %235 = arith.divf %233, %234 : vector<8x32xf32>
      %236 = arith.mulf %227, %229 : vector<8x32xf32>
      %237 = math.tanh %236 : vector<8x32xf32>
      %238 = arith.mulf %235, %237 : vector<8x32xf32>
      %c0_76 = arith.constant 0 : index
      %c0_77 = arith.constant 0 : index
      %239 = vector.load %arg10[%c0_76, %c0_77] : memref<32x32xf32, #tpu.memory_space<vmem>>, vector<32x32xf32>
      %cst_78 = arith.constant dense<0.000000e+00> : vector<8x32xf32>
      %240 = tpu.matmul %207, %239, %cst_78 {dimension_numbers = #tpu.dot_dimension_numbers<[1], [0], [0], [1], [0, 0, 1, 1], [], []>} : vector<8x32xf32>, vector<32x32xf32>, vector<8x32xf32> -> vector<8x32xf32>
      %c0_79 = arith.constant 0 : index
      %c0_80 = arith.constant 0 : index
      %241 = vector.load %arg11[%c0_79, %c0_80] : memref<32x32xf32, #tpu.memory_space<vmem>>, vector<32x32xf32>
      %cst_81 = arith.constant dense<0.000000e+00> : vector<8x32xf32>
      %242 = tpu.matmul %238, %241, %cst_81 {dimension_numbers = #tpu.dot_dimension_numbers<[1], [0], [0], [1], [0, 0, 1, 1], [], []>} : vector<8x32xf32>, vector<32x32xf32>, vector<8x32xf32> -> vector<8x32xf32>
      %243 = arith.addf %240, %242 : vector<8x32xf32>
      %c0_82 = arith.constant 0 : index
      %c0_83 = arith.constant 0 : index
      %244 = vector.load %arg12[%c0_82, %c0_83] : memref<1x32xf32, #tpu.memory_space<vmem>>, vector<1x32xf32>
      %245 = vector.broadcast %244 : vector<1x32xf32> to vector<8x32xf32>
      %246 = arith.addf %243, %245 : vector<8x32xf32>
      %cst_84 = arith.constant 0.000000e+00 : f32
      %247 = vector.broadcast %cst_84 : f32 to vector<8x32xf32>
      %248 = arith.maximumf %246, %247 : vector<8x32xf32>
      %c0_85 = arith.constant 0 : index
      %c0_86 = arith.constant 0 : index
      %249 = vector.load %arg13[%c0_85, %c0_86] : memref<32x32xf32, #tpu.memory_space<vmem>>, vector<32x32xf32>
      %cst_87 = arith.constant dense<0.000000e+00> : vector<8x32xf32>
      %250 = tpu.matmul %248, %249, %cst_87 {dimension_numbers = #tpu.dot_dimension_numbers<[1], [0], [0], [1], [0, 0, 1, 1], [], []>} : vector<8x32xf32>, vector<32x32xf32>, vector<8x32xf32> -> vector<8x32xf32>
      %c0_88 = arith.constant 0 : index
      %c0_89 = arith.constant 0 : index
      %251 = vector.load %arg14[%c0_88, %c0_89] : memref<1x32xf32, #tpu.memory_space<vmem>>, vector<1x32xf32>
      %252 = vector.broadcast %251 : vector<1x32xf32> to vector<8x32xf32>
      %253 = arith.addf %250, %252 : vector<8x32xf32>
      %cst_90 = arith.constant 0.000000e+00 : f32
      %254 = vector.broadcast %cst_90 : f32 to vector<8x32xf32>
      %255 = arith.maximumf %253, %254 : vector<8x32xf32>
      %c0_91 = arith.constant 0 : index
      %c0_92 = arith.constant 0 : index
      %256 = vector.load %arg15[%c0_91, %c0_92] : memref<32x34xf32, #tpu.memory_space<vmem>>, vector<32x34xf32>
      %cst_93 = arith.constant dense<0.000000e+00> : vector<8x34xf32>
      %257 = tpu.matmul %255, %256, %cst_93 {dimension_numbers = #tpu.dot_dimension_numbers<[1], [0], [0], [1], [0, 0, 1, 1], [], []>} : vector<8x32xf32>, vector<32x34xf32>, vector<8x34xf32> -> vector<8x34xf32>
      %c0_94 = arith.constant 0 : index
      %c0_95 = arith.constant 0 : index
      %258 = vector.load %arg16[%c0_94, %c0_95] : memref<1x34xf32, #tpu.memory_space<vmem>>, vector<1x34xf32>
      %259 = vector.broadcast %258 : vector<1x34xf32> to vector<8x34xf32>
      %260 = arith.addf %257, %259 : vector<8x34xf32>
      %c0_96 = arith.constant 0 : index
      %c0_97 = arith.constant 0 : index
      %261 = vector.load %arg17[%c0_96, %c0_97] : memref<8x34xf32, #tpu.memory_space<vmem>>, vector<8x34xf32>
      tpu.vector_store %arg17[%c0_96, %c0_97], %260 {strides = array<i32>} : memref<8x34xf32, #tpu.memory_space<vmem>>, vector<8x34xf32>,
    } else {
    }
    return
  }
  func.func @transform_0(%arg0: i32) -> (i32, i32, i32) {
    %c0_i32 = arith.constant 0 : i32
    %c0_i32_0 = arith.constant 0 : i32
    %c0_i32_1 = arith.constant 0 : i32
    return %arg0, %c0_i32, %c0_i32_0 : i32, i32, i32
  }
  func.func @transform_1(%arg0: i32) -> (i32, i32, i32) {
    %c0_i32 = arith.constant 0 : i32
    %c0_i32_0 = arith.constant 0 : i32
    %c0_i32_1 = arith.constant 0 : i32
    return %arg0, %c0_i32, %c0_i32_0 : i32, i32, i32
  }
  func.func @transform_2(%arg0: i32) -> (i32, i32) {
    %c0_i32 = arith.constant 0 : i32
    %c0_i32_0 = arith.constant 0 : i32
    %c0_i32_1 = arith.constant 0 : i32
    return %c0_i32, %c0_i32_0 : i32, i32
  }
  func.func @transform_3(%arg0: i32) -> (i32, i32) {
    %c0_i32 = arith.constant 0 : i32
    %c0_i32_0 = arith.constant 0 : i32
    %c0_i32_1 = arith.constant 0 : i32
    return %c0_i32, %c0_i32_0 : i32, i32
  }
  func.func @transform_4(%arg0: i32) -> (i32, i32) {
    %c0_i32 = arith.constant 0 : i32
    %c0_i32_0 = arith.constant 0 : i32
    %c0_i32_1 = arith.constant 0 : i32
    return %c0_i32, %c0_i32_0 : i32, i32
  }
  func.func @transform_5(%arg0: i32) -> (i32, i32) {
    %c0_i32 = arith.constant 0 : i32
    %c0_i32_0 = arith.constant 0 : i32
    %c0_i32_1 = arith.constant 0 : i32
    return %c0_i32, %c0_i32_0 : i32, i32
  }
  func.func @transform_6(%arg0: i32) -> (i32, i32) {
    %c0_i32 = arith.constant 0 : i32
    %c0_i32_0 = arith.constant 0 : i32
    %c0_i32_1 = arith.constant 0 : i32
    return %c0_i32, %c0_i32_0 : i32, i32
  }
  func.func @transform_7(%arg0: i32) -> (i32, i32) {
    %c0_i32 = arith.constant 0 : i32
    %c0_i32_0 = arith.constant 0 : i32
    %c0_i32_1 = arith.constant 0 : i32
    return %c0_i32, %c0_i32_0 : i32, i32
  }
  func.func @transform_8(%arg0: i32) -> (i32, i32) {
    %c0_i32 = arith.constant 0 : i32
    %c0_i32_0 = arith.constant 0 : i32
    %c0_i32_1 = arith.constant 0 : i32
    return %c0_i32, %c0_i32_0 : i32, i32
  }
  func.func @transform_9(%arg0: i32) -> (i32, i32) {
    %c0_i32 = arith.constant 0 : i32
    %c0_i32_0 = arith.constant 0 : i32
    %c0_i32_1 = arith.constant 0 : i32
    return %c0_i32, %c0_i32_0 : i32, i32
  }
  func.func @transform_10(%arg0: i32) -> (i32, i32) {
    %c0_i32 = arith.constant 0 : i32
    %c0_i32_0 = arith.constant 0 : i32
    %c0_i32_1 = arith.constant 0 : i32
    return %c0_i32, %c0_i32_0 : i32, i32
  }
  func.func @transform_11(%arg0: i32) -> (i32, i32) {
    %c0_i32 = arith.constant 0 : i32
    %c0_i32_0 = arith.constant 0 : i32
    %c0_i32_1 = arith.constant 0 : i32
    return %c0_i32, %c0_i32_0 : i32, i32
  }
  func.func @transform_12(%arg0: i32) -> (i32, i32) {
    %c0_i32 = arith.constant 0 : i32
    %c0_i32_0 = arith.constant 0 : i32
    %c0_i32_1 = arith.constant 0 : i32
    return %c0_i32, %c0_i32_0 : i32, i32
  }
  func.func @transform_13(%arg0: i32) -> (i32, i32) {
    %c0_i32 = arith.constant 0 : i32
    %c0_i32_0 = arith.constant 0 : i32
    %c0_i32_1 = arith.constant 0 : i32
    return %c0_i32, %c0_i32_0 : i32, i32
  }
  func.func @transform_14(%arg0: i32) -> (i32, i32) {
    %c0_i32 = arith.constant 0 : i32
    %c0_i32_0 = arith.constant 0 : i32
    %c0_i32_1 = arith.constant 0 : i32
    return %c0_i32, %c0_i32_0 : i32, i32
  }
  func.func @transform_15(%arg0: i32) -> (i32, i32) {
    %c0_i32 = arith.constant 0 : i32
    %c0_i32_0 = arith.constant 0 : i32
    %c0_i32_1 = arith.constant 0 : i32
    return %c0_i32, %c0_i32_0 : i32, i32
  }
  func.func @transform_16(%arg0: i32) -> (i32, i32) {
    %c0_i32 = arith.constant 0 : i32
    %c0_i32_0 = arith.constant 0 : i32
    %c0_i32_1 = arith.constant 0 : i32
    return %c0_i32, %c0_i32_0 : i32, i32
  }
}

</mosaic_0001>

<llo_original>
// kernel: rnn_forward.3
$region0: #{rnn_forward.3}
  #allocation0 [shape = 'u32[]', space=smem, size = 0x4, offset = 0x4, fixed_abs, tag = 'smem constant byte address 0x4 - core index']
  #allocation1 [shape = 'u32[144,128]{1,0:T(1,128)}', space=vmem, size = 0x12000, scoped, tag = 'internal scratch']
  %s0 = inlined_call_operand.vmem [shape: f32[64,16], index: 0, kind: input, shape index: {}]
  %s1 = inlined_call_operand.vmem [shape: f32[16,256], index: 1, kind: input, shape index: {}]
  %s2 = inlined_call_operand.hbm [shape: f32[1,256], index: 2, kind: input, shape index: {}]
  %s3 = inlined_call_operand.vmem [shape: bf16[64,128], index: 3, kind: output, shape index: {0}]
  %s4 = inlined_call_operand.vmem [shape: bf16[64,128], index: 4, kind: output, shape index: {1}]
  %5 = xla_tuple %s3, %s4
  %s6 = sld [smem:[#allocation0]]
  $region34: #{rnn_forward.3} parent=0
    _
  %s8 = ssub.s32 1, %s6
  %s9 = scalar_select 0, %s8, %s6
  $region1: #{rnn_forward.3} parent=0
    #allocation2 [shape = 'u8[1024]{0}', space=vmem, size = 0x400, scoped, tag = 'input window, operand 2, single buffered']
    #allocation3 [shape = 's32[1]{0}', space=sflag, size = 0x4, scoped, tag = 'scoped memory for rnn_forward.3']
    %10 = vsyncpa [#allocation3], 0
    // Predicated region
    $region2: #{rnn_forward.3} parent=1 // pred_check
      _
    $region3: #{rnn_forward.3} parent=1 // pred_check_branch
      %12 = sbr.rel (0) target = $region5
    $region4: #{rnn_forward.3} parent=1 // pred_region
      _
    $region5: #{rnn_forward.3} parent=1 // pred_fallthru
      _
    // Predicated region
    $region6: #{rnn_forward.3} parent=1 // pred_check
      _
    $region7: #{rnn_forward.3} parent=1 // pred_check_branch
      %14 = sbr.rel (0) target = $region9
    $region8: #{rnn_forward.3} parent=1 // pred_region
      _
    $region9: #{rnn_forward.3} parent=1 // pred_fallthru
      _
    // Predicated region
    $region10: #{rnn_forward.3} parent=1 // pred_check
      _
    $region11: #{rnn_forward.3} parent=1 // pred_check_branch
      %16 = sbr.rel (0) target = $region13
    $region12: #{rnn_forward.3} parent=1 // pred_region
      %s18 = ssub.s32 32, 32
      %19 = vsyncadd [#allocation3], %s18
      %s21 = sshll.u32 [#allocation2], 4
      %s22 = int_to_ptr.vmem [resolvable:$true] %s21
      %24 = dma.hbm_to_vmem [thread:$0]  %s2, 32, %s22, [#allocation3]
    $region13: #{rnn_forward.3} parent=1 // pred_fallthru
      _
    // Predicated region
    $region14: #{rnn_forward.3} parent=1 // pred_check
      _
    $region15: #{rnn_forward.3} parent=1 // pred_check_branch
      %26 = sbr.rel (0) target = $region17
    $region16: #{rnn_forward.3} parent=1 // pred_region
      %27 = dma.done [#allocation3], 32
    $region17: #{rnn_forward.3} parent=1 // pred_fallthru
      _
    %v28 = vld [vmem:[%s0] sm:$0xff]
    %v29 = vld [vmem:[%s0 + $0x8] sm:$0xff]
    %v30 = vld [vmem:[%s0 + $0x10] sm:$0xff]
    %v31 = vld [vmem:[%s0 + $0x18] sm:$0xff]
    %v32 = vld [vmem:[%s0 + $0x20] sm:$0xff]
    %v33 = vld [vmem:[%s0 + $0x28] sm:$0xff]
    %v34 = vld [vmem:[%s0 + $0x30] sm:$0xff]
    %v35 = vld [vmem:[%s0 + $0x38] sm:$0xff]
    %v36 = vld [vmem:[%s1] sm:$0xff]
    %v37 = vld [vmem:[%s1 + $0x8] sm:$0xff]
    %v38 = vld [vmem:[%s1 + $0x10] sm:$0xff]
    %v39 = vld [vmem:[%s1 + $0x18] sm:$0xff]
    %v40 = vld [vmem:[#allocation2] sm:$0x3]
    %v42 = vlaneseq
    %v43 = vshrl.u32 %v42, 7
    %v44 = vsub.s32 0, %v43
    %v45 = vrot.slane %v40, %v44
    %v46 = vlaneseq
    %v47 = vshrl.u32 %v46, 7
    %v48 = vsub.s32 1, %v47
    %v49 = vrot.slane %v40, %v48
    %vm52 = vcmask 130048
    %v54 = vsel %vm52, %v28, 0
    %v57 = vsel %vm52, %v29, 0
    %v60 = vsel %vm52, %v30, 0
    %v63 = vsel %vm52, %v31, 0
    %v66 = vsel %vm52, %v32, 0
    %v69 = vsel %vm52, %v33, 0
    %v72 = vsel %vm52, %v34, 0
    %v75 = vsel %vm52, %v35, 0
    %77 = vmatprep.subr.mxu0 %v37
    %78 = vmatpush1.msra.mxu0 %v36
    %79 = vmatprep.subr.mxu0 %v39
    %80 = vmatpush1.msra.mxu0 %v38
    %81 = vmatprep.subr.mxu0 0.0
    %82 = vmatpush1.msra.mxu0 0.0
    %83 = vmatprep.subr.mxu0 0.0
    %84 = vmatpush1.msra.mxu0 0.0
    %85 = vmatprep.subr.mxu0 0.0
    %86 = vmatpush1.msra.mxu0 0.0
    %87 = vmatprep.subr.mxu0 0.0
    %88 = vmatpush1.msra.mxu0 0.0
    %89 = vmatprep.subr.mxu0 0.0
    %90 = vmatpush1.msra.mxu0 0.0
    %91 = vmatprep.subr.mxu0 0.0
    %92 = vmatpush1.msra.mxu0 0.0
    %93 = vmatprep.subr.mxu0 0.0
    %94 = vmatpush1.msra.mxu0 0.0
    %95 = vmatprep.subr.mxu0 0.0
    %96 = vmatpush1.msra.mxu0 0.0
    %97 = vmatprep.subr.mxu0 0.0
    %98 = vmatpush1.msra.mxu0 0.0
    %99 = vmatprep.subr.mxu0 0.0
    %100 = vmatpush1.msra.mxu0 0.0
    %101 = vmatprep.subr.mxu0 0.0
    %102 = vmatpush1.msra.mxu0 0.0
    %103 = vmatprep.subr.mxu0 0.0
    %104 = vmatpush1.msra.mxu0 0.0
    %105 = vmatprep.subr.mxu0 0.0
    %106 = vmatpush1.msra.mxu0 0.0
    %107 = vmatprep.subr.mxu0 0.0
    %108 = vmatpush1.msra.mxu0 0.0
    %109 = vmatprep.subr.mxu0 0.0
    %110 = vmatpush1.msra.mxu0 0.0
    %111 = vmatprep.subr.mxu0 0.0
    %112 = vmatpush1.msra.mxu0 0.0
    %113 = vmatprep.subr.mxu0 0.0
    %114 = vmatpush1.msra.mxu0 0.0
    %115 = vmatprep.subr.mxu0 0.0
    %116 = vmatpush1.msra.mxu0 0.0
    %117 = vmatprep.subr.mxu0 0.0
    %118 = vmatpush1.msra.mxu0 0.0
    %119 = vmatprep.subr.mxu0 0.0
    %120 = vmatpush1.msra.mxu0 0.0
    %121 = vmatprep.subr.mxu0 0.0
    %122 = vmatpush1.msra.mxu0 0.0
    %123 = vmatprep.subr.mxu0 0.0
    %124 = vmatpush1.msra.mxu0 0.0
    %125 = vmatprep.subr.mxu0 0.0
    %126 = vmatpush1.msra.mxu0 0.0
    %127 = vmatprep.subr.mxu0 0.0
    %128 = vmatpush1.msra.mxu0 0.0
    %129 = vmatprep.subr.mxu0 0.0
    %130 = vmatpush1.msra.mxu0 0.0
    %131 = vmatprep.subr.mxu0 0.0
    %132 = vmatpush1.msra.mxu0 0.0
    %133 = vmatprep.subr.mxu0 0.0
    %134 = vmatpush1.msra.mxu0 0.0
    %135 = vmatprep.subr.mxu0 0.0
    %136 = vmatpush1.msra.mxu0 0.0
    %137 = vmatprep.subr.mxu0 0.0
    %138 = vmatpush1.msra.mxu0 0.0
    %139 = vmatprep.subr.mxu0 0.0
    %140 = vmatpush1.msra.mxu0 0.0
    %141 = vmatprep.mubr.f32.mxu0 0.0
    %142 = vmatmul.mubr.f32.gmra.mrb[0].mxu0 %v54
    %v143 = vpop.f32.mrb[0].mxu0
    %v144 = vadd.f32 %v45, %v143
    %v145 = vpop.f32.mrb[0].mxu0
    %v146 = vadd.f32 %v49, %v145
    %147 = vmatprep.mubr.f32.mxu0 0.0
    %148 = vmatmul.mubr.f32.gmra.mrb[0].mxu0 %v57
    %v149 = vpop.f32.mrb[0].mxu0
    %v150 = vadd.f32 %v45, %v149
    %v151 = vpop.f32.mrb[0].mxu0
    %v152 = vadd.f32 %v49, %v151
    %153 = vmatprep.mubr.f32.mxu0 0.0
    %154 = vmatmul.mubr.f32.gmra.mrb[0].mxu0 %v60
    %v155 = vpop.f32.mrb[0].mxu0
    %v156 = vadd.f32 %v45, %v155
    %v157 = vpop.f32.mrb[0].mxu0
    %v158 = vadd.f32 %v49, %v157
    %159 = vmatprep.mubr.f32.mxu0 0.0
    %160 = vmatmul.mubr.f32.gmra.mrb[0].mxu0 %v63
    %v161 = vpop.f32.mrb[0].mxu0
    %v162 = vadd.f32 %v45, %v161
    %v163 = vpop.f32.mrb[0].mxu0
    %v164 = vadd.f32 %v49, %v163
    %165 = vmatprep.mubr.f32.mxu0 0.0
    %166 = vmatmul.mubr.f32.gmra.mrb[0].mxu0 %v66
    %v167 = vpop.f32.mrb[0].mxu0
    %v168 = vadd.f32 %v45, %v167
    %v169 = vpop.f32.mrb[0].mxu0
    %v170 = vadd.f32 %v49, %v169
    %171 = vmatprep.mubr.f32.mxu0 0.0
    %172 = vmatmul.mubr.f32.gmra.mrb[0].mxu0 %v69
    %v173 = vpop.f32.mrb[0].mxu0
    %v174 = vadd.f32 %v45, %v173
    %v175 = vpop.f32.mrb[0].mxu0
    %v176 = vadd.f32 %v49, %v175
    %177 = vmatprep.mubr.f32.mxu0 0.0
    %178 = vmatmul.mubr.f32.gmra.mrb[0].mxu0 %v72
    %v179 = vpop.f32.mrb[0].mxu0
    %v180 = vadd.f32 %v45, %v179
    %v181 = vpop.f32.mrb[0].mxu0
    %v182 = vadd.f32 %v49, %v181
    %183 = vmatprep.mubr.f32.mxu0 0.0
    %184 = vmatmul.mubr.f32.gmra.mrb[0].mxu0 %v75
    %v185 = vpop.f32.mrb[0].mxu0
    %v186 = vadd.f32 %v45, %v185
    %v187 = vpop.f32.mrb[0].mxu0
    %v188 = vadd.f32 %v49, %v187
    %189 = vdwg.mxu0
    %v190 = vpack.c.bf16 %v150, %v144
    %v191 = vpack.c.bf16 %v162, %v156
    %v192 = vpack.c.bf16 %v174, %v168
    %v193 = vpack.c.bf16 %v186, %v180
    %v198 = vunpack.c.l.b16 %v190
    %v199 = vunpack.c.h.b16 %v190
    %v200 = vunpack.c.l.b16 %v191
    %v201 = vunpack.c.h.b16 %v191
    %v202 = vunpack.c.l.b16 %v192
    %v203 = vunpack.c.h.b16 %v192
    %v204 = vunpack.c.l.b16 %v193
    %v205 = vunpack.c.h.b16 %v193
    %v206 = vpack.c.b16 %v198, %v198
    %v207 = vpack.c.b16 %v199, %v199
    %v208 = vpack.c.b16 %v200, %v200
    %v209 = vpack.c.b16 %v201, %v201
    %v210 = vpack.c.b16 %v202, %v202
    %v211 = vpack.c.b16 %v203, %v203
    %v212 = vpack.c.b16 %v204, %v204
    %v213 = vpack.c.b16 %v205, %v205
    %222 = vst [vmem:[%s3] sm:$0xf] %v206
    %223 = vst [vmem:[%s3 + $0x4] sm:$0xf] %v207
    %224 = vst [vmem:[%s3 + $0x8] sm:$0xf] %v208
    %225 = vst [vmem:[%s3 + $0xc] sm:$0xf] %v209
    %226 = vst [vmem:[%s3 + $0x10] sm:$0xf] %v210
    %227 = vst [vmem:[%s3 + $0x14] sm:$0xf] %v211
    %228 = vst [vmem:[%s3 + $0x18] sm:$0xf] %v212
    %229 = vst [vmem:[%s3 + $0x1c] sm:$0xf] %v213
    %v230 = vpack.c.bf16 %v152, %v146
    %v231 = vpack.c.bf16 %v164, %v158
    %v232 = vpack.c.bf16 %v176, %v170
    %v233 = vpack.c.bf16 %v188, %v182
    %v238 = vunpack.c.l.b16 %v230
    %v239 = vunpack.c.h.b16 %v230
    %v240 = vunpack.c.l.b16 %v231
    %v241 = vunpack.c.h.b16 %v231
    %v242 = vunpack.c.l.b16 %v232
    %v243 = vunpack.c.h.b16 %v232
    %v244 = vunpack.c.l.b16 %v233
    %v245 = vunpack.c.h.b16 %v233
    %v246 = vpack.c.b16 %v238, %v238
    %v247 = vpack.c.b16 %v239, %v239
    %v248 = vpack.c.b16 %v240, %v240
    %v249 = vpack.c.b16 %v241, %v241
    %v250 = vpack.c.b16 %v242, %v242
    %v251 = vpack.c.b16 %v243, %v243
    %v252 = vpack.c.b16 %v244, %v244
    %v253 = vpack.c.b16 %v245, %v245
    %262 = vst [vmem:[%s4] sm:$0xf] %v246
    %263 = vst [vmem:[%s4 + $0x4] sm:$0xf] %v247
    %264 = vst [vmem:[%s4 + $0x8] sm:$0xf] %v248
    %265 = vst [vmem:[%s4 + $0xc] sm:$0xf] %v249
    %266 = vst [vmem:[%s4 + $0x10] sm:$0xf] %v250
    %267 = vst [vmem:[%s4 + $0x14] sm:$0xf] %v251
    %268 = vst [vmem:[%s4 + $0x18] sm:$0xf] %v252
    %269 = vst [vmem:[%s4 + $0x1c] sm:$0xf] %v253
    // Predicated region
    $region18: #{rnn_forward.3} parent=1 // pred_check
      _
    $region19: #{rnn_forward.3} parent=1 // pred_check_branch
      %271 = sbr.rel (0) target = $region21
    $region20: #{rnn_forward.3} parent=1 // pred_region
      _
    $region21: #{rnn_forward.3} parent=1 // pred_fallthru
      _
    // Predicated region
    $region22: #{rnn_forward.3} parent=1 // pred_check
      _
    $region23: #{rnn_forward.3} parent=1 // pred_check_branch
      %273 = sbr.rel (0) target = $region25
    $region24: #{rnn_forward.3} parent=1 // pred_region
      _
    $region25: #{rnn_forward.3} parent=1 // pred_fallthru
      _
    // Predicated region
    $region26: #{rnn_forward.3} parent=1 // pred_check
      _
    $region27: #{rnn_forward.3} parent=1 // pred_check_branch
      %275 = sbr.rel (0) target = $region29
    $region28: #{rnn_forward.3} parent=1 // pred_region
      _
    $region29: #{rnn_forward.3} parent=1 // pred_fallthru
      _
    // Predicated region
    $region30: #{rnn_forward.3} parent=1 // pred_check
      _
    $region31: #{rnn_forward.3} parent=1 // pred_check_branch
      %277 = sbr.rel (0) target = $region33
    $region32: #{rnn_forward.3} parent=1 // pred_region
      _
    $region33: #{rnn_forward.3} parent=1 // pred_fallthru
      _
    %278 = vsyncpa [#allocation3], 1

// kernel: rnn_forward.4
$region0: #{rnn_forward.4}
  #allocation0 [shape = 'u32[]', space=smem, size = 0x4, offset = 0x4, fixed_abs, tag = 'smem constant byte address 0x4 - core index']
  #allocation1 [shape = 'u32[144,128]{1,0:T(1,128)}', space=vmem, size = 0x12000, scoped, tag = 'internal scratch']
  #allocation2 [shape = 'bf16[8,32]{1,0:T(8,128)(2,1)}', space=vmem, size = 0x800, scoped, tag = 'scratch operand']
  #allocation3 [shape = 'f32[8,32]{1,0:T(8,128)}', space=vmem, size = 0x1000, scoped, tag = 'scratch operand']
  #allocation4 [shape = 'bf16[8,32]{1,0:T(8,128)(2,1)}', space=vmem, size = 0x800, scoped, tag = 'scratch operand']
  #allocation5 [shape = 'f32[8,32]{1,0:T(8,128)}', space=vmem, size = 0x1000, scoped, tag = 'scratch operand']
  %s0 = inlined_call_operand.vmem [shape: bf16[8,8,128], index: 0, kind: input, shape index: {}]
  %s1 = inlined_call_operand.vmem [shape: bf16[8,8,128], index: 1, kind: input, shape index: {}]
  %s2 = inlined_call_operand.vmem [shape: bf16[32,128], index: 2, kind: input, shape index: {}]
  %s3 = inlined_call_operand.vmem [shape: bf16[32,128], index: 3, kind: input, shape index: {}]
  %s4 = inlined_call_operand.vmem [shape: bf16[8,8,32], index: 4, kind: output, shape index: {0}]
  %s5 = inlined_call_operand.vmem [shape: bf16[8,8,32], index: 5, kind: output, shape index: {1}]
  %6 = xla_tuple %s4, %s5
  %s7 = sld [smem:[#allocation0]]
  $region38: #{rnn_forward.4} parent=0
    _
  %s9 = ssub.s32 1, %s7
  %s10 = scalar_select 0, %s9, %s7
  // Predicated region
  $region2: #{rnn_forward.4} parent=0 // pred_check
    _
  $region3: #{rnn_forward.4} parent=0 // pred_check_branch
    %12 = sbr.rel (0) target = $region5
  $region4: #{rnn_forward.4} parent=0 // pred_region
    _
  $region5: #{rnn_forward.4} parent=0 // pred_fallthru
    _
  // Predicated region
  $region6: #{rnn_forward.4} parent=0 // pred_check
    _
  $region7: #{rnn_forward.4} parent=0 // pred_check_branch
    %14 = sbr.rel (0) target = $region9
  $region8: #{rnn_forward.4} parent=0 // pred_region
    %s15 = ssub.s32 0, 0
    %s16 = smul.u32 8, %s15
    %p17 = scmp.lt.s32.totalorder %s16, 7
    %s18 = scalar_select %p17, %s16, 7
    %s19 = smul.addr %s18, 4
    %s20 = scalar_lea.vmem %s1, %s19
    %s21 = ssub.s32 0, 0
    %s22 = smul.u32 8, %s21
  $region9: #{rnn_forward.4} parent=0 // pred_fallthru
    _
  // Predicated region
  $region10: #{rnn_forward.4} parent=0 // pred_check
    _
  $region11: #{rnn_forward.4} parent=0 // pred_check_branch
    %24 = sbr.rel (0) target = $region13
  $region12: #{rnn_forward.4} parent=0 // pred_region
    _
  $region13: #{rnn_forward.4} parent=0 // pred_fallthru
    _
  // Predicated region
  $region14: #{rnn_forward.4} parent=0 // pred_check
    _
  $region15: #{rnn_forward.4} parent=0 // pred_check_branch
    %26 = sbr.rel (0) target = $region17
  $region16: #{rnn_forward.4} parent=0 // pred_region
    _
  $region17: #{rnn_forward.4} parent=0 // pred_fallthru
    _
  %s27 = ssub.s32 0, 0
  %s28 = smul.u32 8, %s27
  %p29 = scmp.lt.s32.totalorder %s28, 7
  %s30 = scalar_select %p29, %s28, 7
  %s31 = smul.addr %s30, 4
  %s32 = scalar_lea.vmem %s1, %s31
  %s33 = ssub.s32 0, 0
  %s34 = smul.u32 8, %s33
  %p35 = scmp.lt.s32.totalorder %s34, 7
  %s36 = scalar_select %p35, %s34, 7
  %s37 = smul.addr %s36, 4
  %s38 = scalar_lea.vmem %s5, %s37
  %s39 = ssub.s32 0, 0
  %s40 = smul.u32 8, %s39
  %p41 = scmp.lt.s32.totalorder %s40, 7
  %s42 = scalar_select %p41, %s40, 7
  %s43 = smul.addr %s42, 4
  %s44 = scalar_lea.vmem %s1, %s43
  %s45 = ssub.s32 0, 0
  %s46 = smul.u32 8, %s45
  %s47 = ssub.s32 0, 0
  %s48 = smul.u32 8, %s47
  %p49 = scmp.lt.s32.totalorder %s48, 7
  %s50 = scalar_select %p49, %s48, 7
  %s51 = smul.addr %s50, 4
  %s52 = scalar_lea.vmem %s5, %s51
  %s53 = ssub.s32 0, 0
  %s54 = smul.u32 8, %s53
  %p56 = scmp.eq.s32.totalorder 0, 0
  // Predicated region
  $region18: #{rnn_forward.4} parent=0 // pred_check
    %p57 = pneg %p56
  $region19: #{rnn_forward.4} parent=0 // pred_check_branch
    %59 = sbr.rel (%p57) target = $region21
  $region20: #{rnn_forward.4} parent=0 // pred_region
    %vm60 = vcmask 257024
    %61 = vst.msk [vmem:[#allocation2] sm:$0xf] %vm60, 0
    %vm62 = vcmask 261120
    %63 = vst.msk [vmem:[#allocation3] sm:$0xff] %vm62, 0.0
    %64 = vst.msk [vmem:[#allocation4] sm:$0xf] %vm60, 0
    %65 = vst.msk [vmem:[#allocation5] sm:$0xff] %vm62, 0.0
  $region21: #{rnn_forward.4} parent=0 // pred_fallthru
    _
  %v66 = vld [vmem:[%s2] sm:$0xf]
  %v67 = vld [vmem:[%s2 + $0x4] sm:$0xf]
  %v68 = vld [vmem:[%s2 + $0x8] sm:$0xf]
  %v69 = vld [vmem:[%s2 + $0xc] sm:$0xf]
  %v70 = vld [vmem:[%s3] sm:$0xf]
  %v71 = vld [vmem:[%s3 + $0x4] sm:$0xf]
  %v72 = vld [vmem:[%s3 + $0x8] sm:$0xf]
  %v73 = vld [vmem:[%s3 + $0xc] sm:$0xf]
  %v74 = vlaneseq
  %v75 = vand.u32 %v74, 127
  %vm76 = vcmp.ge.s32.totalorder %v75, 64
  %vm77 = vcmp.lt.s32.totalorder %v75, 96
  %vm78 = vmand %vm76, %vm77
  %v79 = vld [vmem:[#allocation2] sm:$0xf]
  %v80 = vld [vmem:[#allocation3] sm:$0xff]
  %v81 = vld [vmem:[#allocation4] sm:$0xf]
  %v82 = vld [vmem:[#allocation5] sm:$0xff]
  %v87 = vunpack.c.l.b16 %v66
  %v88 = vunpack.c.l.b16 %v67
  %v89 = vunpack.c.l.b16 %v68
  %v90 = vunpack.c.l.b16 %v69
  %v91 = vpack.c.b16 %v88, %v87
  %v92 = vpack.c.b16 %v90, %v89
  %vm95 = vcmask 261120
  %v97 = vsel %vm95, %v79, 0
  %99 = vmatprep.subr.bf16.mxu0 0
  %100 = vmatpush1.bf16.msra.mxu0 %v91
  %101 = vmatprep.subr.bf16.mxu0 0
  %102 = vmatpush1.bf16.msra.mxu0 %v92
  %103 = vmatprep.subr.bf16.mxu0 0
  %104 = vmatpush1.bf16.msra.mxu0 0
  %105 = vmatprep.subr.bf16.mxu0 0
  %106 = vmatpush1.bf16.msra.mxu0 0
  %107 = vmatprep.subr.bf16.mxu0 0
  %108 = vmatpush1.bf16.msra.mxu0 0
  %109 = vmatprep.subr.bf16.mxu0 0
  %110 = vmatpush1.bf16.msra.mxu0 0
  %111 = vmatprep.subr.bf16.mxu0 0
  %112 = vmatpush1.bf16.msra.mxu0 0
  %113 = vmatprep.subr.bf16.mxu0 0
  %114 = vmatpush1.bf16.msra.mxu0 0
  %115 = vmatprep.subr.bf16.mxu0 0
  %116 = vmatpush1.bf16.msra.mxu0 0
  %117 = vmatprep.subr.bf16.mxu0 0
  %118 = vmatpush1.bf16.msra.mxu0 0
  %119 = vmatprep.subr.bf16.mxu0 0
  %120 = vmatpush1.bf16.msra.mxu0 0
  %121 = vmatprep.subr.bf16.mxu0 0
  %122 = vmatpush1.bf16.msra.mxu0 0
  %123 = vmatprep.subr.bf16.mxu0 0
  %124 = vmatpush1.bf16.msra.mxu0 0
  %125 = vmatprep.subr.bf16.mxu0 0
  %126 = vmatpush1.bf16.msra.mxu0 0
  %127 = vmatprep.subr.bf16.mxu0 0
  %128 = vmatpush1.bf16.msra.mxu0 0
  %129 = vmatprep.subr.bf16.mxu0 0
  %130 = vmatpush1.bf16.msra.mxu0 0
  %131 = vmatprep.mubr.bf16.mxu0 0
  %132 = vmatmul.mubr.bf16.gmra.mrb[0].mxu0 %v97
  %v133 = vpop.f32.mrb[0].mxu0
  %v134 = vadd.f32 0.0, %v133
  %v135 = vpop.f32.mrb[0].mxu0
  %v136 = vpop.f32.mrb[0].mxu0
  %v137 = vpop.f32.mrb[0].mxu0
  %138 = vdwg.mxu0
  %v143 = vunpack.c.l.b16 %v70
  %v144 = vunpack.c.l.b16 %v71
  %v145 = vunpack.c.l.b16 %v72
  %v146 = vunpack.c.l.b16 %v73
  %v147 = vpack.c.b16 %v144, %v143
  %v148 = vpack.c.b16 %v146, %v145
  %v152 = vsel %vm95, %v81, 0
  %154 = vmatprep.subr.bf16.mxu0 0
  %155 = vmatpush1.bf16.msra.mxu0 %v147
  %156 = vmatprep.subr.bf16.mxu0 0
  %157 = vmatpush1.bf16.msra.mxu0 %v148
  %158 = vmatprep.subr.bf16.mxu0 0
  %159 = vmatpush1.bf16.msra.mxu0 0
  %160 = vmatprep.subr.bf16.mxu0 0
  %161 = vmatpush1.bf16.msra.mxu0 0
  %162 = vmatprep.subr.bf16.mxu0 0
  %163 = vmatpush1.bf16.msra.mxu0 0
  %164 = vmatprep.subr.bf16.mxu0 0
  %165 = vmatpush1.bf16.msra.mxu0 0
  %166 = vmatprep.subr.bf16.mxu0 0
  %167 = vmatpush1.bf16.msra.mxu0 0
  %168 = vmatprep.subr.bf16.mxu0 0
  %169 = vmatpush1.bf16.msra.mxu0 0
  %170 = vmatprep.subr.bf16.mxu0 0
  %171 = vmatpush1.bf16.msra.mxu0 0
  %172 = vmatprep.subr.bf16.mxu0 0
  %173 = vmatpush1.bf16.msra.mxu0 0
  %174 = vmatprep.subr.bf16.mxu0 0
  %175 = vmatpush1.bf16.msra.mxu0 0
  %176 = vmatprep.subr.bf16.mxu0 0
  %177 = vmatpush1.bf16.msra.mxu0 0
  %178 = vmatprep.subr.bf16.mxu0 0
  %179 = vmatpush1.bf16.msra.mxu0 0
  %180 = vmatprep.subr.bf16.mxu0 0
  %181 = vmatpush1.bf16.msra.mxu0 0
  %182 = vmatprep.subr.bf16.mxu0 0
  %183 = vmatpush1.bf16.msra.mxu0 0
  %184 = vmatprep.subr.bf16.mxu0 0
  %185 = vmatpush1.bf16.msra.mxu0 0
  %186 = vmatprep.mubr.bf16.mxu0 0
  %187 = vmatmul.mubr.bf16.gmra.mrb[0].mxu0 %v152
  %v188 = vpop.f32.mrb[0].mxu0
  %v189 = vadd.f32 0.0, %v188
  %v190 = vpop.f32.mrb[0].mxu0
  %v191 = vpop.f32.mrb[0].mxu0
  %v192 = vpop.f32.mrb[0].mxu0
  %193 = vdwg.mxu0
  %v194 = vld [vmem:[%s0] sm:$0xf]
  %v195 = vunpack.c.l.bf16 %v194
  %v196 = vadd.f32 %v195, %v134
  %s197 = scalar_lea.vmem %s44, 28
  %v198 = vld [vmem:[%s197] sm:$0xf]
  %v199 = vunpack.c.l.bf16 %v198
  %v200 = vadd.f32 %v199, %v189
  %v201 = vtanh.pop %v196
  %v202 = vxor.u32 %v196, 2147483648
  %v203 = vmul.f32 %v202, 1.442695
  %v204 = vpow.pop %v203
  %v205 = vadd.f32 %v204, 1.0
  %v206 = vrcp.pop %v205
  %v207 = vmul.f32 1.0, %v206
  %v208 = vsel %vm78, %v201, %v207
  %210 = vrot.lane.b32.xlu0 %v80, 32
  %v211 = vpop.permute.xlu0 %210
  %v213 = vmul.f32 %v208, %v211
  %215 = vrot.lane.b32.xlu0 %v208, 64
  %v216 = vpop.permute.xlu0 %215
  %v218 = vmul.f32 %v208, %v216
  %220 = vrot.lane.b32.xlu0 %v218, 32
  %v221 = vpop.permute.xlu0 %220
  %v223 = vadd.f32 %v213, %v221
  %v224 = vtanh.pop %v223
  %226 = vrot.lane.b32.xlu0 %v224, 64
  %v227 = vpop.permute.xlu0 %226
  %v229 = vmul.f32 %v208, %v227
  %v230 = vpack.c.bf16 %v229, %v229
  %v231 = vtanh.pop %v200
  %v232 = vxor.u32 %v200, 2147483648
  %v233 = vmul.f32 %v232, 1.442695
  %v234 = vpow.pop %v233
  %v235 = vadd.f32 %v234, 1.0
  %v236 = vrcp.pop %v235
  %v237 = vmul.f32 1.0, %v236
  %v238 = vsel %vm78, %v231, %v237
  %240 = vrot.lane.b32.xlu0 %v82, 32
  %v241 = vpop.permute.xlu0 %240
  %v243 = vmul.f32 %v238, %v241
  %245 = vrot.lane.b32.xlu0 %v238, 64
  %v246 = vpop.permute.xlu0 %245
  %v248 = vmul.f32 %v238, %v246
  %250 = vrot.lane.b32.xlu0 %v248, 32
  %v251 = vpop.permute.xlu0 %250
  %v253 = vadd.f32 %v243, %v251
  %v254 = vtanh.pop %v253
  %256 = vrot.lane.b32.xlu0 %v254, 64
  %v257 = vpop.permute.xlu0 %256
  %v259 = vmul.f32 %v238, %v257
  %v260 = vpack.c.bf16 %v259, %v259
  %v262 = vunpack.c.l.b16 %v230
  %v263 = vpack.c.b16 %v262, %v262
  %264 = vrot.lane.b32.xlu0 %v263, 32
  %v265 = vpop.permute.xlu0 %264
  %vm267 = vcmask 257024
  %268 = vst.msk [vmem:[%s4] sm:$0xf] %vm267, %v265
  %v270 = vunpack.c.l.b16 %v260
  %v271 = vpack.c.b16 %v270, %v270
  %272 = vrot.lane.b32.xlu0 %v271, 32
  %v273 = vpop.permute.xlu0 %272
  %s275 = scalar_lea.vmem %s52, 28
  %276 = vst.msk [vmem:[%s275] sm:$0xf] %vm267, %v273
  %277 = vrot.lane.b32.xlu0 %v230, 32
  %v278 = vpop.permute.xlu0 %277
  %v280 = vsel %vm95, %v278, 0
  %282 = vmatprep.subr.bf16.mxu0 0
  %283 = vmatpush1.bf16.msra.mxu0 %v91
  %284 = vmatprep.subr.bf16.mxu0 0
  %285 = vmatpush1.bf16.msra.mxu0 %v92
  %286 = vmatprep.subr.bf16.mxu0 0
  %287 = vmatpush1.bf16.msra.mxu0 0
  %288 = vmatprep.subr.bf16.mxu0 0
  %289 = vmatpush1.bf16.msra.mxu0 0
  %290 = vmatprep.subr.bf16.mxu0 0
  %291 = vmatpush1.bf16.msra.mxu0 0
  %292 = vmatprep.subr.bf16.mxu0 0
  %293 = vmatpush1.bf16.msra.mxu0 0
  %294 = vmatprep.subr.bf16.mxu0 0
  %295 = vmatpush1.bf16.msra.mxu0 0
  %296 = vmatprep.subr.bf16.mxu0 0
  %297 = vmatpush1.bf16.msra.mxu0 0
  %298 = vmatprep.subr.bf16.mxu0 0
  %299 = vmatpush1.bf16.msra.mxu0 0
  %300 = vmatprep.subr.bf16.mxu0 0
  %301 = vmatpush1.bf16.msra.mxu0 0
  %302 = vmatprep.subr.bf16.mxu0 0
  %303 = vmatpush1.bf16.msra.mxu0 0
  %304 = vmatprep.subr.bf16.mxu0 0
  %305 = vmatpush1.bf16.msra.mxu0 0
  %306 = vmatprep.subr.bf16.mxu0 0
  %307 = vmatpush1.bf16.msra.mxu0 0
  %308 = vmatprep.subr.bf16.mxu0 0
  %309 = vmatpush1.bf16.msra.mxu0 0
  %310 = vmatprep.subr.bf16.mxu0 0
  %311 = vmatpush1.bf16.msra.mxu0 0
  %312 = vmatprep.subr.bf16.mxu0 0
  %313 = vmatpush1.bf16.msra.mxu0 0
  %314 = vmatprep.mubr.bf16.mxu0 0
  %315 = vmatmul.mubr.bf16.gmra.mrb[0].mxu0 %v280
  %v316 = vpop.f32.mrb[0].mxu0
  %v317 = vadd.f32 0.0, %v316
  %v318 = vpop.f32.mrb[0].mxu0
  %v319 = vpop.f32.mrb[0].mxu0
  %v320 = vpop.f32.mrb[0].mxu0
  %321 = vdwg.mxu0
  %322 = vrot.lane.b32.xlu0 %v260, 32
  %v323 = vpop.permute.xlu0 %322
  %v325 = vsel %vm95, %v323, 0
  %327 = vmatprep.subr.bf16.mxu0 0
  %328 = vmatpush1.bf16.msra.mxu0 %v147
  %329 = vmatprep.subr.bf16.mxu0 0
  %330 = vmatpush1.bf16.msra.mxu0 %v148
  %331 = vmatprep.subr.bf16.mxu0 0
  %332 = vmatpush1.bf16.msra.mxu0 0
  %333 = vmatprep.subr.bf16.mxu0 0
  %334 = vmatpush1.bf16.msra.mxu0 0
  %335 = vmatprep.subr.bf16.mxu0 0
  %336 = vmatpush1.bf16.msra.mxu0 0
  %337 = vmatprep.subr.bf16.mxu0 0
  %338 = vmatpush1.bf16.msra.mxu0 0
  %339 = vmatprep.subr.bf16.mxu0 0
  %340 = vmatpush1.bf16.msra.mxu0 0
  %341 = vmatprep.subr.bf16.mxu0 0
  %342 = vmatpush1.bf16.msra.mxu0 0
  %343 = vmatprep.subr.bf16.mxu0 0
  %344 = vmatpush1.bf16.msra.mxu0 0
  %345 = vmatprep.subr.bf16.mxu0 0
  %346 = vmatpush1.bf16.msra.mxu0 0
  %347 = vmatprep.subr.bf16.mxu0 0
  %348 = vmatpush1.bf16.msra.mxu0 0
  %349 = vmatprep.subr.bf16.mxu0 0
  %350 = vmatpush1.bf16.msra.mxu0 0
  %351 = vmatprep.subr.bf16.mxu0 0
  %352 = vmatpush1.bf16.msra.mxu0 0
  %353 = vmatprep.subr.bf16.mxu0 0
  %354 = vmatpush1.bf16.msra.mxu0 0
  %355 = vmatprep.subr.bf16.mxu0 0
  %356 = vmatpush1.bf16.msra.mxu0 0
  %357 = vmatprep.subr.bf16.mxu0 0
  %358 = vmatpush1.bf16.msra.mxu0 0
  %359 = vmatprep.mubr.bf16.mxu0 0
  %360 = vmatmul.mubr.bf16.gmra.mrb[0].mxu0 %v325
  %v361 = vpop.f32.mrb[0].mxu0
  %v362 = vadd.f32 0.0, %v361
  %v363 = vpop.f32.mrb[0].mxu0
  %v364 = vpop.f32.mrb[0].mxu0
  %v365 = vpop.f32.mrb[0].mxu0
  %366 = vdwg.mxu0
  %s367 = scalar_lea.vmem %s0, 4
  %v368 = vld [vmem:[%s367] sm:$0xf]
  %v369 = vunpack.c.l.bf16 %v368
  %v370 = vadd.f32 %v369, %v317
  %s371 = scalar_lea.vmem %s44, 24
  %v372 = vld [vmem:[%s371] sm:$0xf]
  %v373 = vunpack.c.l.bf16 %v372
  %v374 = vadd.f32 %v373, %v362
  %v375 = vtanh.pop %v370
  %v376 = vxor.u32 %v370, 2147483648
  %v377 = vmul.f32 %v376, 1.442695
  %v378 = vpow.pop %v377
  %v379 = vadd.f32 %v378, 1.0
  %v380 = vrcp.pop %v379
  %v381 = vmul.f32 1.0, %v380
  %v382 = vsel %vm78, %v375, %v381
  %v383 = vmul.f32 %v382, %v223
  %385 = vrot.lane.b32.xlu0 %v382, 64
  %v386 = vpop.permute.xlu0 %385
  %v388 = vmul.f32 %v382, %v386
  %390 = vrot.lane.b32.xlu0 %v388, 32
  %v391 = vpop.permute.xlu0 %390
  %v393 = vadd.f32 %v383, %v391
  %v394 = vtanh.pop %v393
  %396 = vrot.lane.b32.xlu0 %v394, 64
  %v397 = vpop.permute.xlu0 %396
  %v399 = vmul.f32 %v382, %v397
  %v400 = vpack.c.bf16 %v399, %v399
  %v401 = vtanh.pop %v374
  %v402 = vxor.u32 %v374, 2147483648
  %v403 = vmul.f32 %v402, 1.442695
  %v404 = vpow.pop %v403
  %v405 = vadd.f32 %v404, 1.0
  %v406 = vrcp.pop %v405
  %v407 = vmul.f32 1.0, %v406
  %v408 = vsel %vm78, %v401, %v407
  %v409 = vmul.f32 %v408, %v253
  %411 = vrot.lane.b32.xlu0 %v408, 64
  %v412 = vpop.permute.xlu0 %411
  %v414 = vmul.f32 %v408, %v412
  %416 = vrot.lane.b32.xlu0 %v414, 32
  %v417 = vpop.permute.xlu0 %416
  %v419 = vadd.f32 %v409, %v417
  %v420 = vtanh.pop %v419
  %422 = vrot.lane.b32.xlu0 %v420, 64
  %v423 = vpop.permute.xlu0 %422
  %v425 = vmul.f32 %v408, %v423
  %v426 = vpack.c.bf16 %v425, %v425
  %v428 = vunpack.c.l.b16 %v400
  %v429 = vpack.c.b16 %v428, %v428
  %430 = vrot.lane.b32.xlu0 %v429, 32
  %v431 = vpop.permute.xlu0 %430
  %s433 = scalar_lea.vmem %s4, 4
  %434 = vst.msk [vmem:[%s433] sm:$0xf] %vm267, %v431
  %v436 = vunpack.c.l.b16 %v426
  %v437 = vpack.c.b16 %v436, %v436
  %438 = vrot.lane.b32.xlu0 %v437, 32
  %v439 = vpop.permute.xlu0 %438
  %s441 = scalar_lea.vmem %s52, 24
  %442 = vst.msk [vmem:[%s441] sm:$0xf] %vm267, %v439
  %443 = vrot.lane.b32.xlu0 %v400, 32
  %v444 = vpop.permute.xlu0 %443
  %v446 = vsel %vm95, %v444, 0
  %448 = vmatprep.subr.bf16.mxu0 0
  %449 = vmatpush1.bf16.msra.mxu0 %v91
  %450 = vmatprep.subr.bf16.mxu0 0
  %451 = vmatpush1.bf16.msra.mxu0 %v92
  %452 = vmatprep.subr.bf16.mxu0 0
  %453 = vmatpush1.bf16.msra.mxu0 0
  %454 = vmatprep.subr.bf16.mxu0 0
  %455 = vmatpush1.bf16.msra.mxu0 0
  %456 = vmatprep.subr.bf16.mxu0 0
  %457 = vmatpush1.bf16.msra.mxu0 0
  %458 = vmatprep.subr.bf16.mxu0 0
  %459 = vmatpush1.bf16.msra.mxu0 0
  %460 = vmatprep.subr.bf16.mxu0 0
  %461 = vmatpush1.bf16.msra.mxu0 0
  %462 = vmatprep.subr.bf16.mxu0 0
  %463 = vmatpush1.bf16.msra.mxu0 0
  %464 = vmatprep.subr.bf16.mxu0 0
  %465 = vmatpush1.bf16.msra.mxu0 0
  %466 = vmatprep.subr.bf16.mxu0 0
  %467 = vmatpush1.bf16.msra.mxu0 0
  %468 = vmatprep.subr.bf16.mxu0 0
  %469 = vmatpush1.bf16.msra.mxu0 0
  %470 = vmatprep.subr.bf16.mxu0 0
  %471 = vmatpush1.bf16.msra.mxu0 0
  %472 = vmatprep.subr.bf16.mxu0 0
  %473 = vmatpush1.bf16.msra.mxu0 0
  %474 = vmatprep.subr.bf16.mxu0 0
  %475 = vmatpush1.bf16.msra.mxu0 0
  %476 = vmatprep.subr.bf16.mxu0 0
  %477 = vmatpush1.bf16.msra.mxu0 0
  %478 = vmatprep.subr.bf16.mxu0 0
  %479 = vmatpush1.bf16.msra.mxu0 0
  %480 = vmatprep.mubr.bf16.mxu0 0
  %481 = vmatmul.mubr.bf16.gmra.mrb[0].mxu0 %v446
  %v482 = vpop.f32.mrb[0].mxu0
  %v483 = vadd.f32 0.0, %v482
  %v484 = vpop.f32.mrb[0].mxu0
  %v485 = vpop.f32.mrb[0].mxu0
  %v486 = vpop.f32.mrb[0].mxu0
  %487 = vdwg.mxu0
  %488 = vrot.lane.b32.xlu0 %v426, 32
  %v489 = vpop.permute.xlu0 %488
  %v491 = vsel %vm95, %v489, 0
  %493 = vmatprep.subr.bf16.mxu0 0
  %494 = vmatpush1.bf16.msra.mxu0 %v147
  %495 = vmatprep.subr.bf16.mxu0 0
  %496 = vmatpush1.bf16.msra.mxu0 %v148
  %497 = vmatprep.subr.bf16.mxu0 0
  %498 = vmatpush1.bf16.msra.mxu0 0
  %499 = vmatprep.subr.bf16.mxu0 0
  %500 = vmatpush1.bf16.msra.mxu0 0
  %501 = vmatprep.subr.bf16.mxu0 0
  %502 = vmatpush1.bf16.msra.mxu0 0
  %503 = vmatprep.subr.bf16.mxu0 0
  %504 = vmatpush1.bf16.msra.mxu0 0
  %505 = vmatprep.subr.bf16.mxu0 0
  %506 = vmatpush1.bf16.msra.mxu0 0
  %507 = vmatprep.subr.bf16.mxu0 0
  %508 = vmatpush1.bf16.msra.mxu0 0
  %509 = vmatprep.subr.bf16.mxu0 0
  %510 = vmatpush1.bf16.msra.mxu0 0
  %511 = vmatprep.subr.bf16.mxu0 0
  %512 = vmatpush1.bf16.msra.mxu0 0
  %513 = vmatprep.subr.bf16.mxu0 0
  %514 = vmatpush1.bf16.msra.mxu0 0
  %515 = vmatprep.subr.bf16.mxu0 0
  %516 = vmatpush1.bf16.msra.mxu0 0
  %517 = vmatprep.subr.bf16.mxu0 0
  %518 = vmatpush1.bf16.msra.mxu0 0
  %519 = vmatprep.subr.bf16.mxu0 0
  %520 = vmatpush1.bf16.msra.mxu0 0
  %521 = vmatprep.subr.bf16.mxu0 0
  %522 = vmatpush1.bf16.msra.mxu0 0
  %523 = vmatprep.subr.bf16.mxu0 0
  %524 = vmatpush1.bf16.msra.mxu0 0
  %525 = vmatprep.mubr.bf16.mxu0 0
  %526 = vmatmul.mubr.bf16.gmra.mrb[0].mxu0 %v491
  %v527 = vpop.f32.mrb[0].mxu0
  %v528 = vadd.f32 0.0, %v527
  %v529 = vpop.f32.mrb[0].mxu0
  %v530 = vpop.f32.mrb[0].mxu0
  %v531 = vpop.f32.mrb[0].mxu0
  %532 = vdwg.mxu0
  %s533 = scalar_lea.vmem %s0, 8
  %v534 = vld [vmem:[%s533] sm:$0xf]
  %v535 = vunpack.c.l.bf16 %v534
  %v536 = vadd.f32 %v535, %v483
  %s537 = scalar_lea.vmem %s44, 20
  %v538 = vld [vmem:[%s537] sm:$0xf]
  %v539 = vunpack.c.l.bf16 %v538
  %v540 = vadd.f32 %v539, %v528
  %v541 = vtanh.pop %v536
  %v542 = vxor.u32 %v536, 2147483648
  %v543 = vmul.f32 %v542, 1.442695
  %v544 = vpow.pop %v543
  %v545 = vadd.f32 %v544, 1.0
  %v546 = vrcp.pop %v545
  %v547 = vmul.f32 1.0, %v546
  %v548 = vsel %vm78, %v541, %v547
  %v549 = vmul.f32 %v548, %v393
  %551 = vrot.lane.b32.xlu0 %v548, 64
  %v552 = vpop.permute.xlu0 %551
  %v554 = vmul.f32 %v548, %v552
  %556 = vrot.lane.b32.xlu0 %v554, 32
  %v557 = vpop.permute.xlu0 %556
  %v559 = vadd.f32 %v549, %v557
  %v560 = vtanh.pop %v559
  %562 = vrot.lane.b32.xlu0 %v560, 64
  %v563 = vpop.permute.xlu0 %562
  %v565 = vmul.f32 %v548, %v563
  %v566 = vpack.c.bf16 %v565, %v565
  %v567 = vtanh.pop %v540
  %v568 = vxor.u32 %v540, 2147483648
  %v569 = vmul.f32 %v568, 1.442695
  %v570 = vpow.pop %v569
  %v571 = vadd.f32 %v570, 1.0
  %v572 = vrcp.pop %v571
  %v573 = vmul.f32 1.0, %v572
  %v574 = vsel %vm78, %v567, %v573
  %v575 = vmul.f32 %v574, %v419
  %577 = vrot.lane.b32.xlu0 %v574, 64
  %v578 = vpop.permute.xlu0 %577
  %v580 = vmul.f32 %v574, %v578
  %582 = vrot.lane.b32.xlu0 %v580, 32
  %v583 = vpop.permute.xlu0 %582
  %v585 = vadd.f32 %v575, %v583
  %v586 = vtanh.pop %v585
  %588 = vrot.lane.b32.xlu0 %v586, 64
  %v589 = vpop.permute.xlu0 %588
  %v591 = vmul.f32 %v574, %v589
  %v592 = vpack.c.bf16 %v591, %v591
  %v594 = vunpack.c.l.b16 %v566
  %v595 = vpack.c.b16 %v594, %v594
  %596 = vrot.lane.b32.xlu0 %v595, 32
  %v597 = vpop.permute.xlu0 %596
  %s599 = scalar_lea.vmem %s4, 8
  %600 = vst.msk [vmem:[%s599] sm:$0xf] %vm267, %v597
  %v602 = vunpack.c.l.b16 %v592
  %v603 = vpack.c.b16 %v602, %v602
  %604 = vrot.lane.b32.xlu0 %v603, 32
  %v605 = vpop.permute.xlu0 %604
  %s607 = scalar_lea.vmem %s52, 20
  %608 = vst.msk [vmem:[%s607] sm:$0xf] %vm267, %v605
  %609 = vrot.lane.b32.xlu0 %v566, 32
  %v610 = vpop.permute.xlu0 %609
  %v612 = vsel %vm95, %v610, 0
  %614 = vmatprep.subr.bf16.mxu0 0
  %615 = vmatpush1.bf16.msra.mxu0 %v91
  %616 = vmatprep.subr.bf16.mxu0 0
  %617 = vmatpush1.bf16.msra.mxu0 %v92
  %618 = vmatprep.subr.bf16.mxu0 0
  %619 = vmatpush1.bf16.msra.mxu0 0
  %620 = vmatprep.subr.bf16.mxu0 0
  %621 = vmatpush1.bf16.msra.mxu0 0
  %622 = vmatprep.subr.bf16.mxu0 0
  %623 = vmatpush1.bf16.msra.mxu0 0
  %624 = vmatprep.subr.bf16.mxu0 0
  %625 = vmatpush1.bf16.msra.mxu0 0
  %626 = vmatprep.subr.bf16.mxu0 0
  %627 = vmatpush1.bf16.msra.mxu0 0
  %628 = vmatprep.subr.bf16.mxu0 0
  %629 = vmatpush1.bf16.msra.mxu0 0
  %630 = vmatprep.subr.bf16.mxu0 0
  %631 = vmatpush1.bf16.msra.mxu0 0
  %632 = vmatprep.subr.bf16.mxu0 0
  %633 = vmatpush1.bf16.msra.mxu0 0
  %634 = vmatprep.subr.bf16.mxu0 0
  %635 = vmatpush1.bf16.msra.mxu0 0
  %636 = vmatprep.subr.bf16.mxu0 0
  %637 = vmatpush1.bf16.msra.mxu0 0
  %638 = vmatprep.subr.bf16.mxu0 0
  %639 = vmatpush1.bf16.msra.mxu0 0
  %640 = vmatprep.subr.bf16.mxu0 0
  %641 = vmatpush1.bf16.msra.mxu0 0
  %642 = vmatprep.subr.bf16.mxu0 0
  %643 = vmatpush1.bf16.msra.mxu0 0
  %644 = vmatprep.subr.bf16.mxu0 0
  %645 = vmatpush1.bf16.msra.mxu0 0
  %646 = vmatprep.mubr.bf16.mxu0 0
  %647 = vmatmul.mubr.bf16.gmra.mrb[0].mxu0 %v612
  %v648 = vpop.f32.mrb[0].mxu0
  %v649 = vadd.f32 0.0, %v648
  %v650 = vpop.f32.mrb[0].mxu0
  %v651 = vpop.f32.mrb[0].mxu0
  %v652 = vpop.f32.mrb[0].mxu0
  %653 = vdwg.mxu0
  %654 = vrot.lane.b32.xlu0 %v592, 32
  %v655 = vpop.permute.xlu0 %654
  %v657 = vsel %vm95, %v655, 0
  %659 = vmatprep.subr.bf16.mxu0 0
  %660 = vmatpush1.bf16.msra.mxu0 %v147
  %661 = vmatprep.subr.bf16.mxu0 0
  %662 = vmatpush1.bf16.msra.mxu0 %v148
  %663 = vmatprep.subr.bf16.mxu0 0
  %664 = vmatpush1.bf16.msra.mxu0 0
  %665 = vmatprep.subr.bf16.mxu0 0
  %666 = vmatpush1.bf16.msra.mxu0 0
  %667 = vmatprep.subr.bf16.mxu0 0
  %668 = vmatpush1.bf16.msra.mxu0 0
  %669 = vmatprep.subr.bf16.mxu0 0
  %670 = vmatpush1.bf16.msra.mxu0 0
  %671 = vmatprep.subr.bf16.mxu0 0
  %672 = vmatpush1.bf16.msra.mxu0 0
  %673 = vmatprep.subr.bf16.mxu0 0
  %674 = vmatpush1.bf16.msra.mxu0 0
  %675 = vmatprep.subr.bf16.mxu0 0
  %676 = vmatpush1.bf16.msra.mxu0 0
  %677 = vmatprep.subr.bf16.mxu0 0
  %678 = vmatpush1.bf16.msra.mxu0 0
  %679 = vmatprep.subr.bf16.mxu0 0
  %680 = vmatpush1.bf16.msra.mxu0 0
  %681 = vmatprep.subr.bf16.mxu0 0
  %682 = vmatpush1.bf16.msra.mxu0 0
  %683 = vmatprep.subr.bf16.mxu0 0
  %684 = vmatpush1.bf16.msra.mxu0 0
  %685 = vmatprep.subr.bf16.mxu0 0
  %686 = vmatpush1.bf16.msra.mxu0 0
  %687 = vmatprep.subr.bf16.mxu0 0
  %688 = vmatpush1.bf16.msra.mxu0 0
  %689 = vmatprep.subr.bf16.mxu0 0
  %690 = vmatpush1.bf16.msra.mxu0 0
  %691 = vmatprep.mubr.bf16.mxu0 0
  %692 = vmatmul.mubr.bf16.gmra.mrb[0].mxu0 %v657
  %v693 = vpop.f32.mrb[0].mxu0
  %v694 = vadd.f32 0.0, %v693
  %v695 = vpop.f32.mrb[0].mxu0
  %v696 = vpop.f32.mrb[0].mxu0
  %v697 = vpop.f32.mrb[0].mxu0
  %698 = vdwg.mxu0
  %s699 = scalar_lea.vmem %s0, 12
  %v700 = vld [vmem:[%s699] sm:$0xf]
  %v701 = vunpack.c.l.bf16 %v700
  %v702 = vadd.f32 %v701, %v649
  %s703 = scalar_lea.vmem %s44, 16
  %v704 = vld [vmem:[%s703] sm:$0xf]
  %v705 = vunpack.c.l.bf16 %v704
  %v706 = vadd.f32 %v705, %v694
  %v707 = vtanh.pop %v702
  %v708 = vxor.u32 %v702, 2147483648
  %v709 = vmul.f32 %v708, 1.442695
  %v710 = vpow.pop %v709
  %v711 = vadd.f32 %v710, 1.0
  %v712 = vrcp.pop %v711
  %v713 = vmul.f32 1.0, %v712
  %v714 = vsel %vm78, %v707, %v713
  %v715 = vmul.f32 %v714, %v559
  %717 = vrot.lane.b32.xlu0 %v714, 64
  %v718 = vpop.permute.xlu0 %717
  %v720 = vmul.f32 %v714, %v718
  %722 = vrot.lane.b32.xlu0 %v720, 32
  %v723 = vpop.permute.xlu0 %722
  %v725 = vadd.f32 %v715, %v723
  %v726 = vtanh.pop %v725
  %728 = vrot.lane.b32.xlu0 %v726, 64
  %v729 = vpop.permute.xlu0 %728
  %v731 = vmul.f32 %v714, %v729
  %v732 = vpack.c.bf16 %v731, %v731
  %v733 = vtanh.pop %v706
  %v734 = vxor.u32 %v706, 2147483648
  %v735 = vmul.f32 %v734, 1.442695
  %v736 = vpow.pop %v735
  %v737 = vadd.f32 %v736, 1.0
  %v738 = vrcp.pop %v737
  %v739 = vmul.f32 1.0, %v738
  %v740 = vsel %vm78, %v733, %v739
  %v741 = vmul.f32 %v740, %v585
  %743 = vrot.lane.b32.xlu0 %v740, 64
  %v744 = vpop.permute.xlu0 %743
  %v746 = vmul.f32 %v740, %v744
  %748 = vrot.lane.b32.xlu0 %v746, 32
  %v749 = vpop.permute.xlu0 %748
  %v751 = vadd.f32 %v741, %v749
  %v752 = vtanh.pop %v751
  %754 = vrot.lane.b32.xlu0 %v752, 64
  %v755 = vpop.permute.xlu0 %754
  %v757 = vmul.f32 %v740, %v755
  %v758 = vpack.c.bf16 %v757, %v757
  %v760 = vunpack.c.l.b16 %v732
  %v761 = vpack.c.b16 %v760, %v760
  %762 = vrot.lane.b32.xlu0 %v761, 32
  %v763 = vpop.permute.xlu0 %762
  %s765 = scalar_lea.vmem %s4, 12
  %766 = vst.msk [vmem:[%s765] sm:$0xf] %vm267, %v763
  %v768 = vunpack.c.l.b16 %v758
  %v769 = vpack.c.b16 %v768, %v768
  %770 = vrot.lane.b32.xlu0 %v769, 32
  %v771 = vpop.permute.xlu0 %770
  %s773 = scalar_lea.vmem %s52, 16
  %774 = vst.msk [vmem:[%s773] sm:$0xf] %vm267, %v771
  %775 = vrot.lane.b32.xlu0 %v732, 32
  %v776 = vpop.permute.xlu0 %775
  %v778 = vsel %vm95, %v776, 0
  %780 = vmatprep.subr.bf16.mxu0 0
  %781 = vmatpush1.bf16.msra.mxu0 %v91
  %782 = vmatprep.subr.bf16.mxu0 0
  %783 = vmatpush1.bf16.msra.mxu0 %v92
  %784 = vmatprep.subr.bf16.mxu0 0
  %785 = vmatpush1.bf16.msra.mxu0 0
  %786 = vmatprep.subr.bf16.mxu0 0
  %787 = vmatpush1.bf16.msra.mxu0 0
  %788 = vmatprep.subr.bf16.mxu0 0
  %789 = vmatpush1.bf16.msra.mxu0 0
  %790 = vmatprep.subr.bf16.mxu0 0
  %791 = vmatpush1.bf16.msra.mxu0 0
  %792 = vmatprep.subr.bf16.mxu0 0
  %793 = vmatpush1.bf16.msra.mxu0 0
  %794 = vmatprep.subr.bf16.mxu0 0
  %795 = vmatpush1.bf16.msra.mxu0 0
  %796 = vmatprep.subr.bf16.mxu0 0
  %797 = vmatpush1.bf16.msra.mxu0 0
  %798 = vmatprep.subr.bf16.mxu0 0
  %799 = vmatpush1.bf16.msra.mxu0 0
  %800 = vmatprep.subr.bf16.mxu0 0
  %801 = vmatpush1.bf16.msra.mxu0 0
  %802 = vmatprep.subr.bf16.mxu0 0
  %803 = vmatpush1.bf16.msra.mxu0 0
  %804 = vmatprep.subr.bf16.mxu0 0
  %805 = vmatpush1.bf16.msra.mxu0 0
  %806 = vmatprep.subr.bf16.mxu0 0
  %807 = vmatpush1.bf16.msra.mxu0 0
  %808 = vmatprep.subr.bf16.mxu0 0
  %809 = vmatpush1.bf16.msra.mxu0 0
  %810 = vmatprep.subr.bf16.mxu0 0
  %811 = vmatpush1.bf16.msra.mxu0 0
  %812 = vmatprep.mubr.bf16.mxu0 0
  %813 = vmatmul.mubr.bf16.gmra.mrb[0].mxu0 %v778
  %v814 = vpop.f32.mrb[0].mxu0
  %v815 = vadd.f32 0.0, %v814
  %v816 = vpop.f32.mrb[0].mxu0
  %v817 = vpop.f32.mrb[0].mxu0
  %v818 = vpop.f32.mrb[0].mxu0
  %819 = vdwg.mxu0
  %820 = vrot.lane.b32.xlu0 %v758, 32
  %v821 = vpop.permute.xlu0 %820
  %v823 = vsel %vm95, %v821, 0
  %825 = vmatprep.subr.bf16.mxu0 0
  %826 = vmatpush1.bf16.msra.mxu0 %v147
  %827 = vmatprep.subr.bf16.mxu0 0
  %828 = vmatpush1.bf16.msra.mxu0 %v148
  %829 = vmatprep.subr.bf16.mxu0 0
  %830 = vmatpush1.bf16.msra.mxu0 0
  %831 = vmatprep.subr.bf16.mxu0 0
  %832 = vmatpush1.bf16.msra.mxu0 0
  %833 = vmatprep.subr.bf16.mxu0 0
  %834 = vmatpush1.bf16.msra.mxu0 0
  %835 = vmatprep.subr.bf16.mxu0 0
  %836 = vmatpush1.bf16.msra.mxu0 0
  %837 = vmatprep.subr.bf16.mxu0 0
  %838 = vmatpush1.bf16.msra.mxu0 0
  %839 = vmatprep.subr.bf16.mxu0 0
  %840 = vmatpush1.bf16.msra.mxu0 0
  %841 = vmatprep.subr.bf16.mxu0 0
  %842 = vmatpush1.bf16.msra.mxu0 0
  %843 = vmatprep.subr.bf16.mxu0 0
  %844 = vmatpush1.bf16.msra.mxu0 0
  %845 = vmatprep.subr.bf16.mxu0 0
  %846 = vmatpush1.bf16.msra.mxu0 0
  %847 = vmatprep.subr.bf16.mxu0 0
  %848 = vmatpush1.bf16.msra.mxu0 0
  %849 = vmatprep.subr.bf16.mxu0 0
  %850 = vmatpush1.bf16.msra.mxu0 0
  %851 = vmatprep.subr.bf16.mxu0 0
  %852 = vmatpush1.bf16.msra.mxu0 0
  %853 = vmatprep.subr.bf16.mxu0 0
  %854 = vmatpush1.bf16.msra.mxu0 0
  %855 = vmatprep.subr.bf16.mxu0 0
  %856 = vmatpush1.bf16.msra.mxu0 0
  %857 = vmatprep.mubr.bf16.mxu0 0
  %858 = vmatmul.mubr.bf16.gmra.mrb[0].mxu0 %v823
  %v859 = vpop.f32.mrb[0].mxu0
  %v860 = vadd.f32 0.0, %v859
  %v861 = vpop.f32.mrb[0].mxu0
  %v862 = vpop.f32.mrb[0].mxu0
  %v863 = vpop.f32.mrb[0].mxu0
  %864 = vdwg.mxu0
  %s865 = scalar_lea.vmem %s0, 16
  %v866 = vld [vmem:[%s865] sm:$0xf]
  %v867 = vunpack.c.l.bf16 %v866
  %v868 = vadd.f32 %v867, %v815
  %s869 = scalar_lea.vmem %s44, 12
  %v870 = vld [vmem:[%s869] sm:$0xf]
  %v871 = vunpack.c.l.bf16 %v870
  %v872 = vadd.f32 %v871, %v860
  %v873 = vtanh.pop %v868
  %v874 = vxor.u32 %v868, 2147483648
  %v875 = vmul.f32 %v874, 1.442695
  %v876 = vpow.pop %v875
  %v877 = vadd.f32 %v876, 1.0
  %v878 = vrcp.pop %v877
  %v879 = vmul.f32 1.0, %v878
  %v880 = vsel %vm78, %v873, %v879
  %v881 = vmul.f32 %v880, %v725
  %883 = vrot.lane.b32.xlu0 %v880, 64
  %v884 = vpop.permute.xlu0 %883
  %v886 = vmul.f32 %v880, %v884
  %888 = vrot.lane.b32.xlu0 %v886, 32
  %v889 = vpop.permute.xlu0 %888
  %v891 = vadd.f32 %v881, %v889
  %v892 = vtanh.pop %v891
  %894 = vrot.lane.b32.xlu0 %v892, 64
  %v895 = vpop.permute.xlu0 %894
  %v897 = vmul.f32 %v880, %v895
  %v898 = vpack.c.bf16 %v897, %v897
  %v899 = vtanh.pop %v872
  %v900 = vxor.u32 %v872, 2147483648
  %v901 = vmul.f32 %v900, 1.442695
  %v902 = vpow.pop %v901
  %v903 = vadd.f32 %v902, 1.0
  %v904 = vrcp.pop %v903
  %v905 = vmul.f32 1.0, %v904
  %v906 = vsel %vm78, %v899, %v905
  %v907 = vmul.f32 %v906, %v751
  %909 = vrot.lane.b32.xlu0 %v906, 64
  %v910 = vpop.permute.xlu0 %909
  %v912 = vmul.f32 %v906, %v910
  %914 = vrot.lane.b32.xlu0 %v912, 32
  %v915 = vpop.permute.xlu0 %914
  %v917 = vadd.f32 %v907, %v915
  %v918 = vtanh.pop %v917
  %920 = vrot.lane.b32.xlu0 %v918, 64
  %v921 = vpop.permute.xlu0 %920
  %v923 = vmul.f32 %v906, %v921
  %v924 = vpack.c.bf16 %v923, %v923
  %v926 = vunpack.c.l.b16 %v898
  %v927 = vpack.c.b16 %v926, %v926
  %928 = vrot.lane.b32.xlu0 %v927, 32
  %v929 = vpop.permute.xlu0 %928
  %s931 = scalar_lea.vmem %s4, 16
  %932 = vst.msk [vmem:[%s931] sm:$0xf] %vm267, %v929
  %v934 = vunpack.c.l.b16 %v924
  %v935 = vpack.c.b16 %v934, %v934
  %936 = vrot.lane.b32.xlu0 %v935, 32
  %v937 = vpop.permute.xlu0 %936
  %s939 = scalar_lea.vmem %s52, 12
  %940 = vst.msk [vmem:[%s939] sm:$0xf] %vm267, %v937
  %941 = vrot.lane.b32.xlu0 %v898, 32
  %v942 = vpop.permute.xlu0 %941
  %v944 = vsel %vm95, %v942, 0
  %946 = vmatprep.subr.bf16.mxu0 0
  %947 = vmatpush1.bf16.msra.mxu0 %v91
  %948 = vmatprep.subr.bf16.mxu0 0
  %949 = vmatpush1.bf16.msra.mxu0 %v92
  %950 = vmatprep.subr.bf16.mxu0 0
  %951 = vmatpush1.bf16.msra.mxu0 0
  %952 = vmatprep.subr.bf16.mxu0 0
  %953 = vmatpush1.bf16.msra.mxu0 0
  %954 = vmatprep.subr.bf16.mxu0 0
  %955 = vmatpush1.bf16.msra.mxu0 0
  %956 = vmatprep.subr.bf16.mxu0 0
  %957 = vmatpush1.bf16.msra.mxu0 0
  %958 = vmatprep.subr.bf16.mxu0 0
  %959 = vmatpush1.bf16.msra.mxu0 0
  %960 = vmatprep.subr.bf16.mxu0 0
  %961 = vmatpush1.bf16.msra.mxu0 0
  %962 = vmatprep.subr.bf16.mxu0 0
  %963 = vmatpush1.bf16.msra.mxu0 0
  %964 = vmatprep.subr.bf16.mxu0 0
  %965 = vmatpush1.bf16.msra.mxu0 0
  %966 = vmatprep.subr.bf16.mxu0 0
  %967 = vmatpush1.bf16.msra.mxu0 0
  %968 = vmatprep.subr.bf16.mxu0 0
  %969 = vmatpush1.bf16.msra.mxu0 0
  %970 = vmatprep.subr.bf16.mxu0 0
  %971 = vmatpush1.bf16.msra.mxu0 0
  %972 = vmatprep.subr.bf16.mxu0 0
  %973 = vmatpush1.bf16.msra.mxu0 0
  %974 = vmatprep.subr.bf16.mxu0 0
  %975 = vmatpush1.bf16.msra.mxu0 0
  %976 = vmatprep.subr.bf16.mxu0 0
  %977 = vmatpush1.bf16.msra.mxu0 0
  %978 = vmatprep.mubr.bf16.mxu0 0
  %979 = vmatmul.mubr.bf16.gmra.mrb[0].mxu0 %v944
  %v980 = vpop.f32.mrb[0].mxu0
  %v981 = vadd.f32 0.0, %v980
  %v982 = vpop.f32.mrb[0].mxu0
  %v983 = vpop.f32.mrb[0].mxu0
  %v984 = vpop.f32.mrb[0].mxu0
  %985 = vdwg.mxu0
  %986 = vrot.lane.b32.xlu0 %v924, 32
  %v987 = vpop.permute.xlu0 %986
  %v989 = vsel %vm95, %v987, 0
  %991 = vmatprep.subr.bf16.mxu0 0
  %992 = vmatpush1.bf16.msra.mxu0 %v147
  %993 = vmatprep.subr.bf16.mxu0 0
  %994 = vmatpush1.bf16.msra.mxu0 %v148
  %995 = vmatprep.subr.bf16.mxu0 0
  %996 = vmatpush1.bf16.msra.mxu0 0
  %997 = vmatprep.subr.bf16.mxu0 0
  %998 = vmatpush1.bf16.msra.mxu0 0
  %999 = vmatprep.subr.bf16.mxu0 0
  %1000 = vmatpush1.bf16.msra.mxu0 0
  %1001 = vmatprep.subr.bf16.mxu0 0
  %1002 = vmatpush1.bf16.msra.mxu0 0
  %1003 = vmatprep.subr.bf16.mxu0 0
  %1004 = vmatpush1.bf16.msra.mxu0 0
  %1005 = vmatprep.subr.bf16.mxu0 0
  %1006 = vmatpush1.bf16.msra.mxu0 0
  %1007 = vmatprep.subr.bf16.mxu0 0
  %1008 = vmatpush1.bf16.msra.mxu0 0
  %1009 = vmatprep.subr.bf16.mxu0 0
  %1010 = vmatpush1.bf16.msra.mxu0 0
  %1011 = vmatprep.subr.bf16.mxu0 0
  %1012 = vmatpush1.bf16.msra.mxu0 0
  %1013 = vmatprep.subr.bf16.mxu0 0
  %1014 = vmatpush1.bf16.msra.mxu0 0
  %1015 = vmatprep.subr.bf16.mxu0 0
  %1016 = vmatpush1.bf16.msra.mxu0 0
  %1017 = vmatprep.subr.bf16.mxu0 0
  %1018 = vmatpush1.bf16.msra.mxu0 0
  %1019 = vmatprep.subr.bf16.mxu0 0
  %1020 = vmatpush1.bf16.msra.mxu0 0
  %1021 = vmatprep.subr.bf16.mxu0 0
  %1022 = vmatpush1.bf16.msra.mxu0 0
  %1023 = vmatprep.mubr.bf16.mxu0 0
  %1024 = vmatmul.mubr.bf16.gmra.mrb[0].mxu0 %v989
  %v1025 = vpop.f32.mrb[0].mxu0
  %v1026 = vadd.f32 0.0, %v1025
  %v1027 = vpop.f32.mrb[0].mxu0
  %v1028 = vpop.f32.mrb[0].mxu0
  %v1029 = vpop.f32.mrb[0].mxu0
  %1030 = vdwg.mxu0
  %s1031 = scalar_lea.vmem %s0, 20
  %v1032 = vld [vmem:[%s1031] sm:$0xf]
  %v1033 = vunpack.c.l.bf16 %v1032
  %v1034 = vadd.f32 %v1033, %v981
  %s1035 = scalar_lea.vmem %s44, 8
  %v1036 = vld [vmem:[%s1035] sm:$0xf]
  %v1037 = vunpack.c.l.bf16 %v1036
  %v1038 = vadd.f32 %v1037, %v1026
  %v1039 = vtanh.pop %v1034
  %v1040 = vxor.u32 %v1034, 2147483648
  %v1041 = vmul.f32 %v1040, 1.442695
  %v1042 = vpow.pop %v1041
  %v1043 = vadd.f32 %v1042, 1.0
  %v1044 = vrcp.pop %v1043
  %v1045 = vmul.f32 1.0, %v1044
  %v1046 = vsel %vm78, %v1039, %v1045
  %v1047 = vmul.f32 %v1046, %v891
  %1049 = vrot.lane.b32.xlu0 %v1046, 64
  %v1050 = vpop.permute.xlu0 %1049
  %v1052 = vmul.f32 %v1046, %v1050
  %1054 = vrot.lane.b32.xlu0 %v1052, 32
  %v1055 = vpop.permute.xlu0 %1054
  %v1057 = vadd.f32 %v1047, %v1055
  %v1058 = vtanh.pop %v1057
  %1060 = vrot.lane.b32.xlu0 %v1058, 64
  %v1061 = vpop.permute.xlu0 %1060
  %v1063 = vmul.f32 %v1046, %v1061
  %v1064 = vpack.c.bf16 %v1063, %v1063
  %v1065 = vtanh.pop %v1038
  %v1066 = vxor.u32 %v1038, 2147483648
  %v1067 = vmul.f32 %v1066, 1.442695
  %v1068 = vpow.pop %v1067
  %v1069 = vadd.f32 %v1068, 1.0
  %v1070 = vrcp.pop %v1069
  %v1071 = vmul.f32 1.0, %v1070
  %v1072 = vsel %vm78, %v1065, %v1071
  %v1073 = vmul.f32 %v1072, %v917
  %1075 = vrot.lane.b32.xlu0 %v1072, 64
  %v1076 = vpop.permute.xlu0 %1075
  %v1078 = vmul.f32 %v1072, %v1076
  %1080 = vrot.lane.b32.xlu0 %v1078, 32
  %v1081 = vpop.permute.xlu0 %1080
  %v1083 = vadd.f32 %v1073, %v1081
  %v1084 = vtanh.pop %v1083
  %1086 = vrot.lane.b32.xlu0 %v1084, 64
  %v1087 = vpop.permute.xlu0 %1086
  %v1089 = vmul.f32 %v1072, %v1087
  %v1090 = vpack.c.bf16 %v1089, %v1089
  %v1092 = vunpack.c.l.b16 %v1064
  %v1093 = vpack.c.b16 %v1092, %v1092
  %1094 = vrot.lane.b32.xlu0 %v1093, 32
  %v1095 = vpop.permute.xlu0 %1094
  %s1097 = scalar_lea.vmem %s4, 20
  %1098 = vst.msk [vmem:[%s1097] sm:$0xf] %vm267, %v1095
  %v1100 = vunpack.c.l.b16 %v1090
  %v1101 = vpack.c.b16 %v1100, %v1100
  %1102 = vrot.lane.b32.xlu0 %v1101, 32
  %v1103 = vpop.permute.xlu0 %1102
  %s1105 = scalar_lea.vmem %s52, 8
  %1106 = vst.msk [vmem:[%s1105] sm:$0xf] %vm267, %v1103
  %1107 = vrot.lane.b32.xlu0 %v1064, 32
  %v1108 = vpop.permute.xlu0 %1107
  %v1110 = vsel %vm95, %v1108, 0
  %1112 = vmatprep.subr.bf16.mxu0 0
  %1113 = vmatpush1.bf16.msra.mxu0 %v91
  %1114 = vmatprep.subr.bf16.mxu0 0
  %1115 = vmatpush1.bf16.msra.mxu0 %v92
  %1116 = vmatprep.subr.bf16.mxu0 0
  %1117 = vmatpush1.bf16.msra.mxu0 0
  %1118 = vmatprep.subr.bf16.mxu0 0
  %1119 = vmatpush1.bf16.msra.mxu0 0
  %1120 = vmatprep.subr.bf16.mxu0 0
  %1121 = vmatpush1.bf16.msra.mxu0 0
  %1122 = vmatprep.subr.bf16.mxu0 0
  %1123 = vmatpush1.bf16.msra.mxu0 0
  %1124 = vmatprep.subr.bf16.mxu0 0
  %1125 = vmatpush1.bf16.msra.mxu0 0
  %1126 = vmatprep.subr.bf16.mxu0 0
  %1127 = vmatpush1.bf16.msra.mxu0 0
  %1128 = vmatprep.subr.bf16.mxu0 0
  %1129 = vmatpush1.bf16.msra.mxu0 0
  %1130 = vmatprep.subr.bf16.mxu0 0
  %1131 = vmatpush1.bf16.msra.mxu0 0
  %1132 = vmatprep.subr.bf16.mxu0 0
  %1133 = vmatpush1.bf16.msra.mxu0 0
  %1134 = vmatprep.subr.bf16.mxu0 0
  %1135 = vmatpush1.bf16.msra.mxu0 0
  %1136 = vmatprep.subr.bf16.mxu0 0
  %1137 = vmatpush1.bf16.msra.mxu0 0
  %1138 = vmatprep.subr.bf16.mxu0 0
  %1139 = vmatpush1.bf16.msra.mxu0 0
  %1140 = vmatprep.subr.bf16.mxu0 0
  %1141 = vmatpush1.bf16.msra.mxu0 0
  %1142 = vmatprep.subr.bf16.mxu0 0
  %1143 = vmatpush1.bf16.msra.mxu0 0
  %1144 = vmatprep.mubr.bf16.mxu0 0
  %1145 = vmatmul.mubr.bf16.gmra.mrb[0].mxu0 %v1110
  %v1146 = vpop.f32.mrb[0].mxu0
  %v1147 = vadd.f32 0.0, %v1146
  %v1148 = vpop.f32.mrb[0].mxu0
  %v1149 = vpop.f32.mrb[0].mxu0
  %v1150 = vpop.f32.mrb[0].mxu0
  %1151 = vdwg.mxu0
  %1152 = vrot.lane.b32.xlu0 %v1090, 32
  %v1153 = vpop.permute.xlu0 %1152
  %v1155 = vsel %vm95, %v1153, 0
  %1157 = vmatprep.subr.bf16.mxu0 0
  %1158 = vmatpush1.bf16.msra.mxu0 %v147
  %1159 = vmatprep.subr.bf16.mxu0 0
  %1160 = vmatpush1.bf16.msra.mxu0 %v148
  %1161 = vmatprep.subr.bf16.mxu0 0
  %1162 = vmatpush1.bf16.msra.mxu0 0
  %1163 = vmatprep.subr.bf16.mxu0 0
  %1164 = vmatpush1.bf16.msra.mxu0 0
  %1165 = vmatprep.subr.bf16.mxu0 0
  %1166 = vmatpush1.bf16.msra.mxu0 0
  %1167 = vmatprep.subr.bf16.mxu0 0
  %1168 = vmatpush1.bf16.msra.mxu0 0
  %1169 = vmatprep.subr.bf16.mxu0 0
  %1170 = vmatpush1.bf16.msra.mxu0 0
  %1171 = vmatprep.subr.bf16.mxu0 0
  %1172 = vmatpush1.bf16.msra.mxu0 0
  %1173 = vmatprep.subr.bf16.mxu0 0
  %1174 = vmatpush1.bf16.msra.mxu0 0
  %1175 = vmatprep.subr.bf16.mxu0 0
  %1176 = vmatpush1.bf16.msra.mxu0 0
  %1177 = vmatprep.subr.bf16.mxu0 0
  %1178 = vmatpush1.bf16.msra.mxu0 0
  %1179 = vmatprep.subr.bf16.mxu0 0
  %1180 = vmatpush1.bf16.msra.mxu0 0
  %1181 = vmatprep.subr.bf16.mxu0 0
  %1182 = vmatpush1.bf16.msra.mxu0 0
  %1183 = vmatprep.subr.bf16.mxu0 0
  %1184 = vmatpush1.bf16.msra.mxu0 0
  %1185 = vmatprep.subr.bf16.mxu0 0
  %1186 = vmatpush1.bf16.msra.mxu0 0
  %1187 = vmatprep.subr.bf16.mxu0 0
  %1188 = vmatpush1.bf16.msra.mxu0 0
  %1189 = vmatprep.mubr.bf16.mxu0 0
  %1190 = vmatmul.mubr.bf16.gmra.mrb[0].mxu0 %v1155
  %v1191 = vpop.f32.mrb[0].mxu0
  %v1192 = vadd.f32 0.0, %v1191
  %v1193 = vpop.f32.mrb[0].mxu0
  %v1194 = vpop.f32.mrb[0].mxu0
  %v1195 = vpop.f32.mrb[0].mxu0
  %1196 = vdwg.mxu0
  %s1197 = scalar_lea.vmem %s0, 24
  %v1198 = vld [vmem:[%s1197] sm:$0xf]
  %v1199 = vunpack.c.l.bf16 %v1198
  %v1200 = vadd.f32 %v1199, %v1147
  %s1201 = scalar_lea.vmem %s44, 4
  %v1202 = vld [vmem:[%s1201] sm:$0xf]
  %v1203 = vunpack.c.l.bf16 %v1202
  %v1204 = vadd.f32 %v1203, %v1192
  %v1205 = vtanh.pop %v1200
  %v1206 = vxor.u32 %v1200, 2147483648
  %v1207 = vmul.f32 %v1206, 1.442695
  %v1208 = vpow.pop %v1207
  %v1209 = vadd.f32 %v1208, 1.0
  %v1210 = vrcp.pop %v1209
  %v1211 = vmul.f32 1.0, %v1210
  %v1212 = vsel %vm78, %v1205, %v1211
  %v1213 = vmul.f32 %v1212, %v1057
  %1215 = vrot.lane.b32.xlu0 %v1212, 64
  %v1216 = vpop.permute.xlu0 %1215
  %v1218 = vmul.f32 %v1212, %v1216
  %1220 = vrot.lane.b32.xlu0 %v1218, 32
  %v1221 = vpop.permute.xlu0 %1220
  %v1223 = vadd.f32 %v1213, %v1221
  %v1224 = vtanh.pop %v1223
  %1226 = vrot.lane.b32.xlu0 %v1224, 64
  %v1227 = vpop.permute.xlu0 %1226
  %v1229 = vmul.f32 %v1212, %v1227
  %v1230 = vpack.c.bf16 %v1229, %v1229
  %v1231 = vtanh.pop %v1204
  %v1232 = vxor.u32 %v1204, 2147483648
  %v1233 = vmul.f32 %v1232, 1.442695
  %v1234 = vpow.pop %v1233
  %v1235 = vadd.f32 %v1234, 1.0
  %v1236 = vrcp.pop %v1235
  %v1237 = vmul.f32 1.0, %v1236
  %v1238 = vsel %vm78, %v1231, %v1237
  %v1239 = vmul.f32 %v1238, %v1083
  %1241 = vrot.lane.b32.xlu0 %v1238, 64
  %v1242 = vpop.permute.xlu0 %1241
  %v1244 = vmul.f32 %v1238, %v1242
  %1246 = vrot.lane.b32.xlu0 %v1244, 32
  %v1247 = vpop.permute.xlu0 %1246
  %v1249 = vadd.f32 %v1239, %v1247
  %v1250 = vtanh.pop %v1249
  %1252 = vrot.lane.b32.xlu0 %v1250, 64
  %v1253 = vpop.permute.xlu0 %1252
  %v1255 = vmul.f32 %v1238, %v1253
  %v1256 = vpack.c.bf16 %v1255, %v1255
  %v1258 = vunpack.c.l.b16 %v1230
  %v1259 = vpack.c.b16 %v1258, %v1258
  %1260 = vrot.lane.b32.xlu0 %v1259, 32
  %v1261 = vpop.permute.xlu0 %1260
  %s1263 = scalar_lea.vmem %s4, 24
  %1264 = vst.msk [vmem:[%s1263] sm:$0xf] %vm267, %v1261
  %v1266 = vunpack.c.l.b16 %v1256
  %v1267 = vpack.c.b16 %v1266, %v1266
  %1268 = vrot.lane.b32.xlu0 %v1267, 32
  %v1269 = vpop.permute.xlu0 %1268
  %s1271 = scalar_lea.vmem %s52, 4
  %1272 = vst.msk [vmem:[%s1271] sm:$0xf] %vm267, %v1269
  %1273 = vrot.lane.b32.xlu0 %v1230, 32
  %v1274 = vpop.permute.xlu0 %1273
  %v1276 = vsel %vm95, %v1274, 0
  %1278 = vmatprep.subr.bf16.mxu0 0
  %1279 = vmatpush1.bf16.msra.mxu0 %v91
  %1280 = vmatprep.subr.bf16.mxu0 0
  %1281 = vmatpush1.bf16.msra.mxu0 %v92
  %1282 = vmatprep.subr.bf16.mxu0 0
  %1283 = vmatpush1.bf16.msra.mxu0 0
  %1284 = vmatprep.subr.bf16.mxu0 0
  %1285 = vmatpush1.bf16.msra.mxu0 0
  %1286 = vmatprep.subr.bf16.mxu0 0
  %1287 = vmatpush1.bf16.msra.mxu0 0
  %1288 = vmatprep.subr.bf16.mxu0 0
  %1289 = vmatpush1.bf16.msra.mxu0 0
  %1290 = vmatprep.subr.bf16.mxu0 0
  %1291 = vmatpush1.bf16.msra.mxu0 0
  %1292 = vmatprep.subr.bf16.mxu0 0
  %1293 = vmatpush1.bf16.msra.mxu0 0
  %1294 = vmatprep.subr.bf16.mxu0 0
  %1295 = vmatpush1.bf16.msra.mxu0 0
  %1296 = vmatprep.subr.bf16.mxu0 0
  %1297 = vmatpush1.bf16.msra.mxu0 0
  %1298 = vmatprep.subr.bf16.mxu0 0
  %1299 = vmatpush1.bf16.msra.mxu0 0
  %1300 = vmatprep.subr.bf16.mxu0 0
  %1301 = vmatpush1.bf16.msra.mxu0 0
  %1302 = vmatprep.subr.bf16.mxu0 0
  %1303 = vmatpush1.bf16.msra.mxu0 0
  %1304 = vmatprep.subr.bf16.mxu0 0
  %1305 = vmatpush1.bf16.msra.mxu0 0
  %1306 = vmatprep.subr.bf16.mxu0 0
  %1307 = vmatpush1.bf16.msra.mxu0 0
  %1308 = vmatprep.subr.bf16.mxu0 0
  %1309 = vmatpush1.bf16.msra.mxu0 0
  %1310 = vmatprep.mubr.bf16.mxu0 0
  %1311 = vmatmul.mubr.bf16.gmra.mrb[0].mxu0 %v1276
  %v1312 = vpop.f32.mrb[0].mxu0
  %v1313 = vadd.f32 0.0, %v1312
  %v1314 = vpop.f32.mrb[0].mxu0
  %v1315 = vpop.f32.mrb[0].mxu0
  %v1316 = vpop.f32.mrb[0].mxu0
  %1317 = vdwg.mxu0
  %1318 = vrot.lane.b32.xlu0 %v1256, 32
  %v1319 = vpop.permute.xlu0 %1318
  %v1321 = vsel %vm95, %v1319, 0
  %1323 = vmatprep.subr.bf16.mxu0 0
  %1324 = vmatpush1.bf16.msra.mxu0 %v147
  %1325 = vmatprep.subr.bf16.mxu0 0
  %1326 = vmatpush1.bf16.msra.mxu0 %v148
  %1327 = vmatprep.subr.bf16.mxu0 0
  %1328 = vmatpush1.bf16.msra.mxu0 0
  %1329 = vmatprep.subr.bf16.mxu0 0
  %1330 = vmatpush1.bf16.msra.mxu0 0
  %1331 = vmatprep.subr.bf16.mxu0 0
  %1332 = vmatpush1.bf16.msra.mxu0 0
  %1333 = vmatprep.subr.bf16.mxu0 0
  %1334 = vmatpush1.bf16.msra.mxu0 0
  %1335 = vmatprep.subr.bf16.mxu0 0
  %1336 = vmatpush1.bf16.msra.mxu0 0
  %1337 = vmatprep.subr.bf16.mxu0 0
  %1338 = vmatpush1.bf16.msra.mxu0 0
  %1339 = vmatprep.subr.bf16.mxu0 0
  %1340 = vmatpush1.bf16.msra.mxu0 0
  %1341 = vmatprep.subr.bf16.mxu0 0
  %1342 = vmatpush1.bf16.msra.mxu0 0
  %1343 = vmatprep.subr.bf16.mxu0 0
  %1344 = vmatpush1.bf16.msra.mxu0 0
  %1345 = vmatprep.subr.bf16.mxu0 0
  %1346 = vmatpush1.bf16.msra.mxu0 0
  %1347 = vmatprep.subr.bf16.mxu0 0
  %1348 = vmatpush1.bf16.msra.mxu0 0
  %1349 = vmatprep.subr.bf16.mxu0 0
  %1350 = vmatpush1.bf16.msra.mxu0 0
  %1351 = vmatprep.subr.bf16.mxu0 0
  %1352 = vmatpush1.bf16.msra.mxu0 0
  %1353 = vmatprep.subr.bf16.mxu0 0
  %1354 = vmatpush1.bf16.msra.mxu0 0
  %1355 = vmatprep.mubr.bf16.mxu0 0
  %1356 = vmatmul.mubr.bf16.gmra.mrb[0].mxu0 %v1321
  %v1357 = vpop.f32.mrb[0].mxu0
  %v1358 = vadd.f32 0.0, %v1357
  %v1359 = vpop.f32.mrb[0].mxu0
  %v1360 = vpop.f32.mrb[0].mxu0
  %v1361 = vpop.f32.mrb[0].mxu0
  %1362 = vdwg.mxu0
  %s1363 = scalar_lea.vmem %s0, 28
  %v1364 = vld [vmem:[%s1363] sm:$0xf]
  %v1365 = vunpack.c.l.bf16 %v1364
  %v1366 = vadd.f32 %v1365, %v1313
  %v1367 = vld [vmem:[%s44] sm:$0xf]
  %v1368 = vunpack.c.l.bf16 %v1367
  %v1369 = vadd.f32 %v1368, %v1358
  %v1370 = vtanh.pop %v1366
  %v1371 = vxor.u32 %v1366, 2147483648
  %v1372 = vmul.f32 %v1371, 1.442695
  %v1373 = vpow.pop %v1372
  %v1374 = vadd.f32 %v1373, 1.0
  %v1375 = vrcp.pop %v1374
  %v1376 = vmul.f32 1.0, %v1375
  %v1377 = vsel %vm78, %v1370, %v1376
  %v1378 = vmul.f32 %v1377, %v1223
  %1380 = vrot.lane.b32.xlu0 %v1377, 64
  %v1381 = vpop.permute.xlu0 %1380
  %v1383 = vmul.f32 %v1377, %v1381
  %1385 = vrot.lane.b32.xlu0 %v1383, 32
  %v1386 = vpop.permute.xlu0 %1385
  %v1388 = vadd.f32 %v1378, %v1386
  %v1389 = vtanh.pop %v1388
  %1391 = vrot.lane.b32.xlu0 %v1389, 64
  %v1392 = vpop.permute.xlu0 %1391
  %v1394 = vmul.f32 %v1377, %v1392
  %v1395 = vpack.c.bf16 %v1394, %v1394
  %v1396 = vtanh.pop %v1369
  %v1397 = vxor.u32 %v1369, 2147483648
  %v1398 = vmul.f32 %v1397, 1.442695
  %v1399 = vpow.pop %v1398
  %v1400 = vadd.f32 %v1399, 1.0
  %v1401 = vrcp.pop %v1400
  %v1402 = vmul.f32 1.0, %v1401
  %v1403 = vsel %vm78, %v1396, %v1402
  %v1404 = vmul.f32 %v1403, %v1249
  %1406 = vrot.lane.b32.xlu0 %v1403, 64
  %v1407 = vpop.permute.xlu0 %1406
  %v1409 = vmul.f32 %v1403, %v1407
  %1411 = vrot.lane.b32.xlu0 %v1409, 32
  %v1412 = vpop.permute.xlu0 %1411
  %v1414 = vadd.f32 %v1404, %v1412
  %v1415 = vtanh.pop %v1414
  %1417 = vrot.lane.b32.xlu0 %v1415, 64
  %v1418 = vpop.permute.xlu0 %1417
  %v1420 = vmul.f32 %v1403, %v1418
  %v1421 = vpack.c.bf16 %v1420, %v1420
  %v1423 = vunpack.c.l.b16 %v1395
  %v1424 = vpack.c.b16 %v1423, %v1423
  %1425 = vrot.lane.b32.xlu0 %v1424, 32
  %v1426 = vpop.permute.xlu0 %1425
  %s1428 = scalar_lea.vmem %s4, 28
  %1429 = vst.msk [vmem:[%s1428] sm:$0xf] %vm267, %v1426
  %v1431 = vunpack.c.l.b16 %v1421
  %v1432 = vpack.c.b16 %v1431, %v1431
  %1433 = vrot.lane.b32.xlu0 %v1432, 32
  %v1434 = vpop.permute.xlu0 %1433
  %1436 = vst.msk [vmem:[%s52] sm:$0xf] %vm267, %v1434
  %1437 = vst.msk [vmem:[#allocation2] sm:$0xf] %vm267, %v1426
  %1439 = vrot.lane.b32.xlu0 %v1388, 96
  %v1440 = vpop.permute.xlu0 %1439
  %1442 = vst.msk [vmem:[#allocation3] sm:$0xff] %vm95, %v1440
  %1443 = vst.msk [vmem:[#allocation4] sm:$0xf] %vm267, %v1434
  %1445 = vrot.lane.b32.xlu0 %v1414, 96
  %v1446 = vpop.permute.xlu0 %1445
  %1448 = vst.msk [vmem:[#allocation5] sm:$0xff] %vm95, %v1446
  %s1449 = ssub.s32 0, 0
  %s1450 = smul.u32 8, %s1449
  %p1451 = scmp.lt.s32.totalorder %s1450, 7
  %s1452 = scalar_select %p1451, %s1450, 7
  %s1453 = smul.addr %s1452, 4
  %s1454 = scalar_lea.vmem %s5, %s1453
  // Predicated region
  $region22: #{rnn_forward.4} parent=0 // pred_check
    _
  $region23: #{rnn_forward.4} parent=0 // pred_check_branch
    %1456 = sbr.rel (0) target = $region25
  $region24: #{rnn_forward.4} parent=0 // pred_region
    _
  $region25: #{rnn_forward.4} parent=0 // pred_fallthru
    _
  // Predicated region
  $region26: #{rnn_forward.4} parent=0 // pred_check
    _
  $region27: #{rnn_forward.4} parent=0 // pred_check_branch
    %1458 = sbr.rel (0) target = $region29
  $region28: #{rnn_forward.4} parent=0 // pred_region
    %s1459 = ssub.s32 0, 0
    %s1460 = smul.u32 8, %s1459
  $region29: #{rnn_forward.4} parent=0 // pred_fallthru
    _
  // Predicated region
  $region30: #{rnn_forward.4} parent=0 // pred_check
    _
  $region31: #{rnn_forward.4} parent=0 // pred_check_branch
    %1462 = sbr.rel (0) target = $region33
  $region32: #{rnn_forward.4} parent=0 // pred_region
    _
  $region33: #{rnn_forward.4} parent=0 // pred_fallthru
    _
  // Predicated region
  $region34: #{rnn_forward.4} parent=0 // pred_check
    _
  $region35: #{rnn_forward.4} parent=0 // pred_check_branch
    %1464 = sbr.rel (0) target = $region37
  $region36: #{rnn_forward.4} parent=0 // pred_region
    %s1465 = ssub.s32 0, 0
    %s1466 = smul.u32 8, %s1465
    %p1467 = scmp.lt.s32.totalorder %s1466, 7
    %s1468 = scalar_select %p1467, %s1466, 7
    %s1469 = smul.addr %s1468, 4
    %s1470 = scalar_lea.vmem %s5, %s1469
  $region37: #{rnn_forward.4} parent=0 // pred_fallthru
    _

// kernel: rnn_forward.5
$region0: #{rnn_forward.5}
  #allocation0 [shape = 'u32[]', space=smem, size = 0x4, offset = 0x4, fixed_abs, tag = 'smem constant byte address 0x4 - core index']
  #allocation1 [shape = 'u32[144,128]{1,0:T(1,128)}', space=vmem, size = 0x12000, scoped, tag = 'internal scratch']
  #allocation2 [shape = 'f32[8,8,128]{2,1,0:T(8,128)}', space=vmem, size = 0x8000, scoped, tag = 'scratch operand']
  #allocation3 [shape = 'bf16[8,32]{1,0:T(8,128)(2,1)}', space=vmem, size = 0x800, scoped, tag = 'scratch operand']
  #allocation4 [shape = 'f32[8,32]{1,0:T(8,128)}', space=vmem, size = 0x1000, scoped, tag = 'scratch operand']
  %s0 = inlined_call_operand.vmem [shape: bf16[8,8,32], index: 0, kind: input, shape index: {}]
  %s1 = inlined_call_operand.vmem [shape: bf16[8,8,32], index: 1, kind: input, shape index: {}]
  %s2 = inlined_call_operand.vmem [shape: f32[32,128], index: 2, kind: input, shape index: {}]
  %s3 = inlined_call_operand.vmem [shape: f32[32,128], index: 3, kind: input, shape index: {}]
  %s4 = inlined_call_operand.vmem [shape: f32[1,128], index: 4, kind: input, shape index: {}]
  %s5 = inlined_call_operand.vmem [shape: bf16[32,128], index: 5, kind: input, shape index: {}]
  %s6 = inlined_call_operand.vmem [shape: f32[32,128], index: 6, kind: input, shape index: {}]
  %s7 = inlined_call_operand.vmem [shape: f32[32,128], index: 7, kind: input, shape index: {}]
  %s8 = inlined_call_operand.vmem [shape: f32[1,128], index: 8, kind: input, shape index: {}]
  %s9 = inlined_call_operand.vmem [shape: f32[32,32], index: 9, kind: input, shape index: {}]
  %s10 = inlined_call_operand.vmem [shape: f32[32,32], index: 10, kind: input, shape index: {}]
  %s11 = inlined_call_operand.vmem [shape: f32[1,32], index: 11, kind: input, shape index: {}]
  %s12 = inlined_call_operand.vmem [shape: f32[32,32], index: 12, kind: input, shape index: {}]
  %s13 = inlined_call_operand.vmem [shape: f32[1,32], index: 13, kind: input, shape index: {}]
  %s14 = inlined_call_operand.vmem [shape: f32[32,34], index: 14, kind: input, shape index: {}]
  %s15 = inlined_call_operand.vmem [shape: f32[1,34], index: 15, kind: input, shape index: {}]
  %s16 = inlined_call_operand.vmem [shape: f32[8,34], index: 16, kind: output, shape index: {}]
  %s17 = sld [smem:[#allocation0]]
  $region82: #{rnn_forward.5} parent=0
    _
  %s19 = ssub.s32 1, %s17
  %s20 = scalar_select 0, %s19, %s17
  // Predicated region
  $region2: #{rnn_forward.5} parent=0 // pred_check
    _
  $region3: #{rnn_forward.5} parent=0 // pred_check_branch
    %22 = sbr.rel (0) target = $region5
  $region4: #{rnn_forward.5} parent=0 // pred_region
    _
  $region5: #{rnn_forward.5} parent=0 // pred_fallthru
    _
  // Predicated region
  $region6: #{rnn_forward.5} parent=0 // pred_check
    _
  $region7: #{rnn_forward.5} parent=0 // pred_check_branch
    %24 = sbr.rel (0) target = $region9
  $region8: #{rnn_forward.5} parent=0 // pred_region
    _
  $region9: #{rnn_forward.5} parent=0 // pred_fallthru
    _
  // Predicated region
  $region10: #{rnn_forward.5} parent=0 // pred_check
    _
  $region11: #{rnn_forward.5} parent=0 // pred_check_branch
    %26 = sbr.rel (0) target = $region13
  $region12: #{rnn_forward.5} parent=0 // pred_region
    _
  $region13: #{rnn_forward.5} parent=0 // pred_fallthru
    _
  // Predicated region
  $region14: #{rnn_forward.5} parent=0 // pred_check
    _
  $region15: #{rnn_forward.5} parent=0 // pred_check_branch
    %28 = sbr.rel (0) target = $region17
  $region16: #{rnn_forward.5} parent=0 // pred_region
    _
  $region17: #{rnn_forward.5} parent=0 // pred_fallthru
    _
  // Predicated region
  $region18: #{rnn_forward.5} parent=0 // pred_check
    _
  $region19: #{rnn_forward.5} parent=0 // pred_check_branch
    %30 = sbr.rel (0) target = $region21
  $region20: #{rnn_forward.5} parent=0 // pred_region
    _
  $region21: #{rnn_forward.5} parent=0 // pred_fallthru
    _
  // Predicated region
  $region22: #{rnn_forward.5} parent=0 // pred_check
    _
  $region23: #{rnn_forward.5} parent=0 // pred_check_branch
    %32 = sbr.rel (0) target = $region25
  $region24: #{rnn_forward.5} parent=0 // pred_region
    _
  $region25: #{rnn_forward.5} parent=0 // pred_fallthru
    _
  // Predicated region
  $region26: #{rnn_forward.5} parent=0 // pred_check
    _
  $region27: #{rnn_forward.5} parent=0 // pred_check_branch
    %34 = sbr.rel (0) target = $region29
  $region28: #{rnn_forward.5} parent=0 // pred_region
    _
  $region29: #{rnn_forward.5} parent=0 // pred_fallthru
    _
  // Predicated region
  $region30: #{rnn_forward.5} parent=0 // pred_check
    _
  $region31: #{rnn_forward.5} parent=0 // pred_check_branch
    %36 = sbr.rel (0) target = $region33
  $region32: #{rnn_forward.5} parent=0 // pred_region
    _
  $region33: #{rnn_forward.5} parent=0 // pred_fallthru
    _
  // Predicated region
  $region34: #{rnn_forward.5} parent=0 // pred_check
    _
  $region35: #{rnn_forward.5} parent=0 // pred_check_branch
    %38 = sbr.rel (0) target = $region37
  $region36: #{rnn_forward.5} parent=0 // pred_region
    _
  $region37: #{rnn_forward.5} parent=0 // pred_fallthru
    _
  // Predicated region
  $region38: #{rnn_forward.5} parent=0 // pred_check
    _
  $region39: #{rnn_forward.5} parent=0 // pred_check_branch
    %40 = sbr.rel (0) target = $region41
  $region40: #{rnn_forward.5} parent=0 // pred_region
    _
  $region41: #{rnn_forward.5} parent=0 // pred_fallthru
    _
  // Predicated region
  $region42: #{rnn_forward.5} parent=0 // pred_check
    _
  $region43: #{rnn_forward.5} parent=0 // pred_check_branch
    %42 = sbr.rel (0) target = $region45
  $region44: #{rnn_forward.5} parent=0 // pred_region
    _
  $region45: #{rnn_forward.5} parent=0 // pred_fallthru
    _
  // Predicated region
  $region46: #{rnn_forward.5} parent=0 // pred_check
    _
  $region47: #{rnn_forward.5} parent=0 // pred_check_branch
    %44 = sbr.rel (0) target = $region49
  $region48: #{rnn_forward.5} parent=0 // pred_region
    _
  $region49: #{rnn_forward.5} parent=0 // pred_fallthru
    _
  // Predicated region
  $region50: #{rnn_forward.5} parent=0 // pred_check
    _
  $region51: #{rnn_forward.5} parent=0 // pred_check_branch
    %46 = sbr.rel (0) target = $region53
  $region52: #{rnn_forward.5} parent=0 // pred_region
    _
  $region53: #{rnn_forward.5} parent=0 // pred_fallthru
    _
  // Predicated region
  $region54: #{rnn_forward.5} parent=0 // pred_check
    _
  $region55: #{rnn_forward.5} parent=0 // pred_check_branch
    %48 = sbr.rel (0) target = $region57
  $region56: #{rnn_forward.5} parent=0 // pred_region
    _
  $region57: #{rnn_forward.5} parent=0 // pred_fallthru
    _
  // Predicated region
  $region58: #{rnn_forward.5} parent=0 // pred_check
    _
  $region59: #{rnn_forward.5} parent=0 // pred_check_branch
    %50 = sbr.rel (0) target = $region61
  $region60: #{rnn_forward.5} parent=0 // pred_region
    _
  $region61: #{rnn_forward.5} parent=0 // pred_fallthru
    _
  // Predicated region
  $region62: #{rnn_forward.5} parent=0 // pred_check
    _
  $region63: #{rnn_forward.5} parent=0 // pred_check_branch
    %52 = sbr.rel (0) target = $region65
  $region64: #{rnn_forward.5} parent=0 // pred_region
    _
  $region65: #{rnn_forward.5} parent=0 // pred_fallthru
    _
  %v54 = vld [vmem:[%s0] sm:$0xf]
  %v55 = vld [vmem:[%s0 + $0x4] sm:$0xf]
  %v56 = vld [vmem:[%s0 + $0x8] sm:$0xf]
  %v57 = vld [vmem:[%s0 + $0xc] sm:$0xf]
  %v58 = vld [vmem:[%s0 + $0x10] sm:$0xf]
  %v59 = vld [vmem:[%s0 + $0x14] sm:$0xf]
  %v60 = vld [vmem:[%s0 + $0x18] sm:$0xf]
  %v61 = vld [vmem:[%s0 + $0x1c] sm:$0xf]
  %v62 = vld [vmem:[%s1] sm:$0xf]
  %v63 = vld [vmem:[%s1 + $0x4] sm:$0xf]
  %v64 = vld [vmem:[%s1 + $0x8] sm:$0xf]
  %v65 = vld [vmem:[%s1 + $0xc] sm:$0xf]
  %v66 = vld [vmem:[%s1 + $0x10] sm:$0xf]
  %v67 = vld [vmem:[%s1 + $0x14] sm:$0xf]
  %v68 = vld [vmem:[%s1 + $0x18] sm:$0xf]
  %v69 = vld [vmem:[%s1 + $0x1c] sm:$0xf]
  %v70 = vld [vmem:[%s2] sm:$0xff]
  %v71 = vld [vmem:[%s2 + $0x8] sm:$0xff]
  %v72 = vld [vmem:[%s2 + $0x10] sm:$0xff]
  %v73 = vld [vmem:[%s2 + $0x18] sm:$0xff]
  %v74 = vld [vmem:[%s3] sm:$0xff]
  %v75 = vld [vmem:[%s3 + $0x8] sm:$0xff]
  %v76 = vld [vmem:[%s3 + $0x10] sm:$0xff]
  %v77 = vld [vmem:[%s3 + $0x18] sm:$0xff]
  %v86 = vunpack.c.l.b16 %v62
  %v87 = vunpack.c.l.b16 %v63
  %v88 = vunpack.c.l.b16 %v64
  %v89 = vunpack.c.l.b16 %v65
  %v90 = vunpack.c.l.b16 %v66
  %v91 = vunpack.c.l.b16 %v67
  %v92 = vunpack.c.l.b16 %v68
  %v93 = vunpack.c.l.b16 %v69
  %v94 = vpack.c.b16 %v87, %v86
  %v95 = vpack.c.b16 %v89, %v88
  %v96 = vpack.c.b16 %v91, %v90
  %v97 = vpack.c.b16 %v93, %v92
  %vm98 = vcmask 261120
  %v100 = vsel %vm98, %v94, 0
  %v103 = vsel %vm98, %v95, 0
  %v106 = vsel %vm98, %v96, 0
  %v109 = vsel %vm98, %v97, 0
  %111 = vmatprep.subr.mxu0 0.0
  %112 = vmatpush1.msra.mxu0 %v74
  %113 = vmatprep.subr.mxu0 0.0
  %114 = vmatpush1.msra.mxu0 %v75
  %115 = vmatprep.subr.mxu0 0.0
  %116 = vmatpush1.msra.mxu0 %v76
  %117 = vmatprep.subr.mxu0 0.0
  %118 = vmatpush1.msra.mxu0 %v77
  %119 = vmatprep.subr.mxu0 0.0
  %120 = vmatpush1.msra.mxu0 0.0
  %121 = vmatprep.subr.mxu0 0.0
  %122 = vmatpush1.msra.mxu0 0.0
  %123 = vmatprep.subr.mxu0 0.0
  %124 = vmatpush1.msra.mxu0 0.0
  %125 = vmatprep.subr.mxu0 0.0
  %126 = vmatpush1.msra.mxu0 0.0
  %127 = vmatprep.subr.mxu0 0.0
  %128 = vmatpush1.msra.mxu0 0.0
  %129 = vmatprep.subr.mxu0 0.0
  %130 = vmatpush1.msra.mxu0 0.0
  %131 = vmatprep.subr.mxu0 0.0
  %132 = vmatpush1.msra.mxu0 0.0
  %133 = vmatprep.subr.mxu0 0.0
  %134 = vmatpush1.msra.mxu0 0.0
  %135 = vmatprep.subr.mxu0 0.0
  %136 = vmatpush1.msra.mxu0 0.0
  %137 = vmatprep.subr.mxu0 0.0
  %138 = vmatpush1.msra.mxu0 0.0
  %139 = vmatprep.subr.mxu0 0.0
  %140 = vmatpush1.msra.mxu0 0.0
  %141 = vmatprep.subr.mxu0 0.0
  %142 = vmatpush1.msra.mxu0 0.0
  %143 = vmatprep.subr.mxu0 0.0
  %144 = vmatpush1.msra.mxu0 0.0
  %145 = vmatprep.subr.mxu0 0.0
  %146 = vmatpush1.msra.mxu0 0.0
  %147 = vmatprep.subr.mxu0 0.0
  %148 = vmatpush1.msra.mxu0 0.0
  %149 = vmatprep.subr.mxu0 0.0
  %150 = vmatpush1.msra.mxu0 0.0
  %151 = vmatprep.subr.mxu0 0.0
  %152 = vmatpush1.msra.mxu0 0.0
  %153 = vmatprep.subr.mxu0 0.0
  %154 = vmatpush1.msra.mxu0 0.0
  %155 = vmatprep.subr.mxu0 0.0
  %156 = vmatpush1.msra.mxu0 0.0
  %157 = vmatprep.subr.mxu0 0.0
  %158 = vmatpush1.msra.mxu0 0.0
  %159 = vmatprep.subr.mxu0 0.0
  %160 = vmatpush1.msra.mxu0 0.0
  %161 = vmatprep.subr.mxu0 0.0
  %162 = vmatpush1.msra.mxu0 0.0
  %163 = vmatprep.subr.mxu0 0.0
  %164 = vmatpush1.msra.mxu0 0.0
  %165 = vmatprep.subr.mxu0 0.0
  %166 = vmatpush1.msra.mxu0 0.0
  %167 = vmatprep.subr.mxu0 0.0
  %168 = vmatpush1.msra.mxu0 0.0
  %169 = vmatprep.subr.mxu0 0.0
  %170 = vmatpush1.msra.mxu0 0.0
  %171 = vmatprep.subr.mxu0 0.0
  %172 = vmatpush1.msra.mxu0 0.0
  %173 = vmatprep.subr.mxu0 0.0
  %174 = vmatpush1.msra.mxu0 0.0
  %175 = vmatprep.mubr.bf16.mxu0 0
  %176 = vmatmul.mubr.bf16.gmra.mrb[0].mxu0 %v100
  %v177 = vpop.f32.mrb[0].mxu0
  %v178 = vadd.f32 0.0, %v177
  %v179 = vpop.f32.mrb[0].mxu0
  %v180 = vpop.f32.mrb[0].mxu0
  %v181 = vadd.f32 0.0, %v180
  %v182 = vpop.f32.mrb[0].mxu0
  %183 = vmatprep.mubr.bf16.mxu0 0
  %184 = vmatmul.mubr.bf16.gmra.mrb[0].mxu0 %v103
  %v185 = vpop.f32.mrb[0].mxu0
  %v186 = vadd.f32 0.0, %v185
  %v187 = vpop.f32.mrb[0].mxu0
  %v188 = vpop.f32.mrb[0].mxu0
  %v189 = vadd.f32 0.0, %v188
  %v190 = vpop.f32.mrb[0].mxu0
  %191 = vmatprep.mubr.bf16.mxu0 0
  %192 = vmatmul.mubr.bf16.gmra.mrb[0].mxu0 %v106
  %v193 = vpop.f32.mrb[0].mxu0
  %v194 = vadd.f32 0.0, %v193
  %v195 = vpop.f32.mrb[0].mxu0
  %v196 = vpop.f32.mrb[0].mxu0
  %v197 = vadd.f32 0.0, %v196
  %v198 = vpop.f32.mrb[0].mxu0
  %199 = vmatprep.mubr.bf16.mxu0 0
  %200 = vmatmul.mubr.bf16.gmra.mrb[0].mxu0 %v109
  %v201 = vpop.f32.mrb[0].mxu0
  %v202 = vadd.f32 0.0, %v201
  %v203 = vpop.f32.mrb[0].mxu0
  %v204 = vpop.f32.mrb[0].mxu0
  %v205 = vadd.f32 0.0, %v204
  %v206 = vpop.f32.mrb[0].mxu0
  %207 = vdwg.mxu0
  %v216 = vunpack.c.l.b16 %v54
  %v217 = vunpack.c.l.b16 %v55
  %v218 = vunpack.c.l.b16 %v56
  %v219 = vunpack.c.l.b16 %v57
  %v220 = vunpack.c.l.b16 %v58
  %v221 = vunpack.c.l.b16 %v59
  %v222 = vunpack.c.l.b16 %v60
  %v223 = vunpack.c.l.b16 %v61
  %v224 = vpack.c.b16 %v217, %v216
  %v225 = vpack.c.b16 %v219, %v218
  %v226 = vpack.c.b16 %v221, %v220
  %v227 = vpack.c.b16 %v223, %v222
  %v229 = vsel %vm98, %v224, 0
  %v232 = vsel %vm98, %v225, 0
  %v235 = vsel %vm98, %v226, 0
  %v238 = vsel %vm98, %v227, 0
  %240 = vmatprep.subr.mxu0 0.0
  %241 = vmatpush1.msra.mxu0 %v70
  %242 = vmatprep.subr.mxu0 0.0
  %243 = vmatpush1.msra.mxu0 %v71
  %244 = vmatprep.subr.mxu0 0.0
  %245 = vmatpush1.msra.mxu0 %v72
  %246 = vmatprep.subr.mxu0 0.0
  %247 = vmatpush1.msra.mxu0 %v73
  %248 = vmatprep.subr.mxu0 0.0
  %249 = vmatpush1.msra.mxu0 0.0
  %250 = vmatprep.subr.mxu0 0.0
  %251 = vmatpush1.msra.mxu0 0.0
  %252 = vmatprep.subr.mxu0 0.0
  %253 = vmatpush1.msra.mxu0 0.0
  %254 = vmatprep.subr.mxu0 0.0
  %255 = vmatpush1.msra.mxu0 0.0
  %256 = vmatprep.subr.mxu0 0.0
  %257 = vmatpush1.msra.mxu0 0.0
  %258 = vmatprep.subr.mxu0 0.0
  %259 = vmatpush1.msra.mxu0 0.0
  %260 = vmatprep.subr.mxu0 0.0
  %261 = vmatpush1.msra.mxu0 0.0
  %262 = vmatprep.subr.mxu0 0.0
  %263 = vmatpush1.msra.mxu0 0.0
  %264 = vmatprep.subr.mxu0 0.0
  %265 = vmatpush1.msra.mxu0 0.0
  %266 = vmatprep.subr.mxu0 0.0
  %267 = vmatpush1.msra.mxu0 0.0
  %268 = vmatprep.subr.mxu0 0.0
  %269 = vmatpush1.msra.mxu0 0.0
  %270 = vmatprep.subr.mxu0 0.0
  %271 = vmatpush1.msra.mxu0 0.0
  %272 = vmatprep.subr.mxu0 0.0
  %273 = vmatpush1.msra.mxu0 0.0
  %274 = vmatprep.subr.mxu0 0.0
  %275 = vmatpush1.msra.mxu0 0.0
  %276 = vmatprep.subr.mxu0 0.0
  %277 = vmatpush1.msra.mxu0 0.0
  %278 = vmatprep.subr.mxu0 0.0
  %279 = vmatpush1.msra.mxu0 0.0
  %280 = vmatprep.subr.mxu0 0.0
  %281 = vmatpush1.msra.mxu0 0.0
  %282 = vmatprep.subr.mxu0 0.0
  %283 = vmatpush1.msra.mxu0 0.0
  %284 = vmatprep.subr.mxu0 0.0
  %285 = vmatpush1.msra.mxu0 0.0
  %286 = vmatprep.subr.mxu0 0.0
  %287 = vmatpush1.msra.mxu0 0.0
  %288 = vmatprep.subr.mxu0 0.0
  %289 = vmatpush1.msra.mxu0 0.0
  %290 = vmatprep.subr.mxu0 0.0
  %291 = vmatpush1.msra.mxu0 0.0
  %292 = vmatprep.subr.mxu0 0.0
  %293 = vmatpush1.msra.mxu0 0.0
  %294 = vmatprep.subr.mxu0 0.0
  %295 = vmatpush1.msra.mxu0 0.0
  %296 = vmatprep.subr.mxu0 0.0
  %297 = vmatpush1.msra.mxu0 0.0
  %298 = vmatprep.subr.mxu0 0.0
  %299 = vmatpush1.msra.mxu0 0.0
  %300 = vmatprep.subr.mxu0 0.0
  %301 = vmatpush1.msra.mxu0 0.0
  %302 = vmatprep.subr.mxu0 0.0
  %303 = vmatpush1.msra.mxu0 0.0
  %304 = vmatprep.mubr.bf16.mxu0 0
  %305 = vmatmul.mubr.bf16.gmra.mrb[0].mxu0 %v229
  %v306 = vpop.f32.mrb[0].mxu0
  %v307 = vadd.f32 %v178, %v306
  %v308 = vpop.f32.mrb[0].mxu0
  %v309 = vpop.f32.mrb[0].mxu0
  %v310 = vadd.f32 %v181, %v309
  %v311 = vpop.f32.mrb[0].mxu0
  %312 = vmatprep.mubr.bf16.mxu0 0
  %313 = vmatmul.mubr.bf16.gmra.mrb[0].mxu0 %v232
  %v314 = vpop.f32.mrb[0].mxu0
  %v315 = vadd.f32 %v186, %v314
  %v316 = vpop.f32.mrb[0].mxu0
  %v317 = vpop.f32.mrb[0].mxu0
  %v318 = vadd.f32 %v189, %v317
  %v319 = vpop.f32.mrb[0].mxu0
  %320 = vmatprep.mubr.bf16.mxu0 0
  %321 = vmatmul.mubr.bf16.gmra.mrb[0].mxu0 %v235
  %v322 = vpop.f32.mrb[0].mxu0
  %v323 = vadd.f32 %v194, %v322
  %v324 = vpop.f32.mrb[0].mxu0
  %v325 = vpop.f32.mrb[0].mxu0
  %v326 = vadd.f32 %v197, %v325
  %v327 = vpop.f32.mrb[0].mxu0
  %328 = vmatprep.mubr.bf16.mxu0 0
  %329 = vmatmul.mubr.bf16.gmra.mrb[0].mxu0 %v238
  %v330 = vpop.f32.mrb[0].mxu0
  %v331 = vadd.f32 %v202, %v330
  %v332 = vpop.f32.mrb[0].mxu0
  %v333 = vpop.f32.mrb[0].mxu0
  %v334 = vadd.f32 %v205, %v333
  %v335 = vpop.f32.mrb[0].mxu0
  %336 = vdwg.mxu0
  %v337 = vld [vmem:[%s4] sm:$0x1]
  %v339 = vlaneseq
  %v340 = vshrl.u32 %v339, 7
  %v341 = vsub.s32 0, %v340
  %v342 = vrot.slane %v337, %v341
  %v344 = vadd.f32 %v307, %v342
  %v345 = vadd.f32 %v310, %v342
  %v346 = vadd.f32 %v315, %v342
  %v347 = vadd.f32 %v318, %v342
  %v348 = vadd.f32 %v323, %v342
  %v349 = vadd.f32 %v326, %v342
  %v350 = vadd.f32 %v331, %v342
  %v351 = vadd.f32 %v334, %v342
  %352 = vst [vmem:[#allocation2] sm:$0xff] %v344
  %353 = vst [vmem:[#allocation2 + $0x8] sm:$0xff] %v345
  %354 = vst [vmem:[#allocation2 + $0x10] sm:$0xff] %v346
  %355 = vst [vmem:[#allocation2 + $0x18] sm:$0xff] %v347
  %356 = vst [vmem:[#allocation2 + $0x20] sm:$0xff] %v348
  %357 = vst [vmem:[#allocation2 + $0x28] sm:$0xff] %v349
  %358 = vst [vmem:[#allocation2 + $0x30] sm:$0xff] %v350
  %359 = vst [vmem:[#allocation2 + $0x38] sm:$0xff] %v351
  %p360 = scmp.eq.s32.totalorder 0, 0
  // Predicated region
  $region66: #{rnn_forward.5} parent=0 // pred_check
    %p361 = pneg %p360
  $region67: #{rnn_forward.5} parent=0 // pred_check_branch
    %363 = sbr.rel (%p361) target = $region69
  $region68: #{rnn_forward.5} parent=0 // pred_region
    %vm364 = vcmask 257024
    %365 = vst.msk [vmem:[#allocation3] sm:$0xf] %vm364, 0
    %366 = vst.msk [vmem:[#allocation4] sm:$0xff] %vm98, 0.0
  $region69: #{rnn_forward.5} parent=0 // pred_fallthru
    _
  %v367 = vld [vmem:[%s5] sm:$0xf]
  %v368 = vld [vmem:[%s5 + $0x4] sm:$0xf]
  %v369 = vld [vmem:[%s5 + $0x8] sm:$0xf]
  %v370 = vld [vmem:[%s5 + $0xc] sm:$0xf]
  %v371 = vlaneseq
  %v372 = vand.u32 %v371, 127
  %vm373 = vcmp.ge.s32.totalorder %v372, 64
  %vm374 = vcmp.lt.s32.totalorder %v372, 96
  %vm375 = vmand %vm373, %vm374
  %v376 = vld [vmem:[#allocation3] sm:$0xf]
  %v377 = vld [vmem:[#allocation4] sm:$0xff]
  %v378 = vld [vmem:[#allocation2] sm:$0xff]
  %v383 = vunpack.c.l.b16 %v367
  %v384 = vunpack.c.l.b16 %v368
  %v385 = vunpack.c.l.b16 %v369
  %v386 = vunpack.c.l.b16 %v370
  %v387 = vpack.c.b16 %v384, %v383
  %v388 = vpack.c.b16 %v386, %v385
  %v392 = vsel %vm98, %v376, 0
  %394 = vmatprep.subr.bf16.mxu0 0
  %395 = vmatpush1.bf16.msra.mxu0 %v387
  %396 = vmatprep.subr.bf16.mxu0 0
  %397 = vmatpush1.bf16.msra.mxu0 %v388
  %398 = vmatprep.subr.bf16.mxu0 0
  %399 = vmatpush1.bf16.msra.mxu0 0
  %400 = vmatprep.subr.bf16.mxu0 0
  %401 = vmatpush1.bf16.msra.mxu0 0
  %402 = vmatprep.subr.bf16.mxu0 0
  %403 = vmatpush1.bf16.msra.mxu0 0
  %404 = vmatprep.subr.bf16.mxu0 0
  %405 = vmatpush1.bf16.msra.mxu0 0
  %406 = vmatprep.subr.bf16.mxu0 0
  %407 = vmatpush1.bf16.msra.mxu0 0
  %408 = vmatprep.subr.bf16.mxu0 0
  %409 = vmatpush1.bf16.msra.mxu0 0
  %410 = vmatprep.subr.bf16.mxu0 0
  %411 = vmatpush1.bf16.msra.mxu0 0
  %412 = vmatprep.subr.bf16.mxu0 0
  %413 = vmatpush1.bf16.msra.mxu0 0
  %414 = vmatprep.subr.bf16.mxu0 0
  %415 = vmatpush1.bf16.msra.mxu0 0
  %416 = vmatprep.subr.bf16.mxu0 0
  %417 = vmatpush1.bf16.msra.mxu0 0
  %418 = vmatprep.subr.bf16.mxu0 0
  %419 = vmatpush1.bf16.msra.mxu0 0
  %420 = vmatprep.subr.bf16.mxu0 0
  %421 = vmatpush1.bf16.msra.mxu0 0
  %422 = vmatprep.subr.bf16.mxu0 0
  %423 = vmatpush1.bf16.msra.mxu0 0
  %424 = vmatprep.subr.bf16.mxu0 0
  %425 = vmatpush1.bf16.msra.mxu0 0
  %426 = vmatprep.mubr.bf16.mxu0 0
  %427 = vmatmul.mubr.bf16.gmra.mrb[0].mxu0 %v392
  %v428 = vpop.f32.mrb[0].mxu0
  %v429 = vadd.f32 0.0, %v428
  %v430 = vpop.f32.mrb[0].mxu0
  %v431 = vpop.f32.mrb[0].mxu0
  %v432 = vpop.f32.mrb[0].mxu0
  %433 = vdwg.mxu0
  %v434 = vadd.f32 %v378, %v429
  %v435 = vtanh.pop %v434
  %v436 = vxor.u32 %v434, 2147483648
  %v437 = vmul.f32 %v436, 1.442695
  %v438 = vpow.pop %v437
  %v439 = vadd.f32 %v438, 1.0
  %v440 = vrcp.pop %v439
  %v441 = vmul.f32 1.0, %v440
  %v442 = vsel %vm375, %v435, %v441
  %444 = vrot.lane.b32.xlu0 %v377, 32
  %v445 = vpop.permute.xlu0 %444
  %v447 = vmul.f32 %v442, %v445
  %449 = vrot.lane.b32.xlu0 %v442, 64
  %v450 = vpop.permute.xlu0 %449
  %v452 = vmul.f32 %v442, %v450
  %454 = vrot.lane.b32.xlu0 %v452, 32
  %v455 = vpop.permute.xlu0 %454
  %v457 = vadd.f32 %v447, %v455
  %v458 = vtanh.pop %v457
  %460 = vrot.lane.b32.xlu0 %v458, 64
  %v461 = vpop.permute.xlu0 %460
  %v463 = vmul.f32 %v442, %v461
  %v464 = vpack.c.bf16 %v463, %v463
  %s465 = scalar_lea.vmem [#allocation2], 8
  %v466 = vld [vmem:[%s465] sm:$0xff]
  %468 = vrot.lane.b32.xlu0 %v464, 32
  %v469 = vpop.permute.xlu0 %468
  %v471 = vsel %vm98, %v469, 0
  %473 = vmatprep.subr.bf16.mxu0 0
  %474 = vmatpush1.bf16.msra.mxu0 %v387
  %475 = vmatprep.subr.bf16.mxu0 0
  %476 = vmatpush1.bf16.msra.mxu0 %v388
  %477 = vmatprep.subr.bf16.mxu0 0
  %478 = vmatpush1.bf16.msra.mxu0 0
  %479 = vmatprep.subr.bf16.mxu0 0
  %480 = vmatpush1.bf16.msra.mxu0 0
  %481 = vmatprep.subr.bf16.mxu0 0
  %482 = vmatpush1.bf16.msra.mxu0 0
  %483 = vmatprep.subr.bf16.mxu0 0
  %484 = vmatpush1.bf16.msra.mxu0 0
  %485 = vmatprep.subr.bf16.mxu0 0
  %486 = vmatpush1.bf16.msra.mxu0 0
  %487 = vmatprep.subr.bf16.mxu0 0
  %488 = vmatpush1.bf16.msra.mxu0 0
  %489 = vmatprep.subr.bf16.mxu0 0
  %490 = vmatpush1.bf16.msra.mxu0 0
  %491 = vmatprep.subr.bf16.mxu0 0
  %492 = vmatpush1.bf16.msra.mxu0 0
  %493 = vmatprep.subr.bf16.mxu0 0
  %494 = vmatpush1.bf16.msra.mxu0 0
  %495 = vmatprep.subr.bf16.mxu0 0
  %496 = vmatpush1.bf16.msra.mxu0 0
  %497 = vmatprep.subr.bf16.mxu0 0
  %498 = vmatpush1.bf16.msra.mxu0 0
  %499 = vmatprep.subr.bf16.mxu0 0
  %500 = vmatpush1.bf16.msra.mxu0 0
  %501 = vmatprep.subr.bf16.mxu0 0
  %502 = vmatpush1.bf16.msra.mxu0 0
  %503 = vmatprep.subr.bf16.mxu0 0
  %504 = vmatpush1.bf16.msra.mxu0 0
  %505 = vmatprep.mubr.bf16.mxu0 0
  %506 = vmatmul.mubr.bf16.gmra.mrb[0].mxu0 %v471
  %v507 = vpop.f32.mrb[0].mxu0
  %v508 = vadd.f32 0.0, %v507
  %v509 = vpop.f32.mrb[0].mxu0
  %v510 = vpop.f32.mrb[0].mxu0
  %v511 = vpop.f32.mrb[0].mxu0
  %512 = vdwg.mxu0
  %v513 = vadd.f32 %v466, %v508
  %v514 = vtanh.pop %v513
  %v515 = vxor.u32 %v513, 2147483648
  %v516 = vmul.f32 %v515, 1.442695
  %v517 = vpow.pop %v516
  %v518 = vadd.f32 %v517, 1.0
  %v519 = vrcp.pop %v518
  %v520 = vmul.f32 1.0, %v519
  %v521 = vsel %vm375, %v514, %v520
  %v522 = vmul.f32 %v521, %v457
  %524 = vrot.lane.b32.xlu0 %v521, 64
  %v525 = vpop.permute.xlu0 %524
  %v527 = vmul.f32 %v521, %v525
  %529 = vrot.lane.b32.xlu0 %v527, 32
  %v530 = vpop.permute.xlu0 %529
  %v532 = vadd.f32 %v522, %v530
  %v533 = vtanh.pop %v532
  %535 = vrot.lane.b32.xlu0 %v533, 64
  %v536 = vpop.permute.xlu0 %535
  %v538 = vmul.f32 %v521, %v536
  %v539 = vpack.c.bf16 %v538, %v538
  %s540 = scalar_lea.vmem [#allocation2], 16
  %v541 = vld [vmem:[%s540] sm:$0xff]
  %543 = vrot.lane.b32.xlu0 %v539, 32
  %v544 = vpop.permute.xlu0 %543
  %v546 = vsel %vm98, %v544, 0
  %548 = vmatprep.subr.bf16.mxu0 0
  %549 = vmatpush1.bf16.msra.mxu0 %v387
  %550 = vmatprep.subr.bf16.mxu0 0
  %551 = vmatpush1.bf16.msra.mxu0 %v388
  %552 = vmatprep.subr.bf16.mxu0 0
  %553 = vmatpush1.bf16.msra.mxu0 0
  %554 = vmatprep.subr.bf16.mxu0 0
  %555 = vmatpush1.bf16.msra.mxu0 0
  %556 = vmatprep.subr.bf16.mxu0 0
  %557 = vmatpush1.bf16.msra.mxu0 0
  %558 = vmatprep.subr.bf16.mxu0 0
  %559 = vmatpush1.bf16.msra.mxu0 0
  %560 = vmatprep.subr.bf16.mxu0 0
  %561 = vmatpush1.bf16.msra.mxu0 0
  %562 = vmatprep.subr.bf16.mxu0 0
  %563 = vmatpush1.bf16.msra.mxu0 0
  %564 = vmatprep.subr.bf16.mxu0 0
  %565 = vmatpush1.bf16.msra.mxu0 0
  %566 = vmatprep.subr.bf16.mxu0 0
  %567 = vmatpush1.bf16.msra.mxu0 0
  %568 = vmatprep.subr.bf16.mxu0 0
  %569 = vmatpush1.bf16.msra.mxu0 0
  %570 = vmatprep.subr.bf16.mxu0 0
  %571 = vmatpush1.bf16.msra.mxu0 0
  %572 = vmatprep.subr.bf16.mxu0 0
  %573 = vmatpush1.bf16.msra.mxu0 0
  %574 = vmatprep.subr.bf16.mxu0 0
  %575 = vmatpush1.bf16.msra.mxu0 0
  %576 = vmatprep.subr.bf16.mxu0 0
  %577 = vmatpush1.bf16.msra.mxu0 0
  %578 = vmatprep.subr.bf16.mxu0 0
  %579 = vmatpush1.bf16.msra.mxu0 0
  %580 = vmatprep.mubr.bf16.mxu0 0
  %581 = vmatmul.mubr.bf16.gmra.mrb[0].mxu0 %v546
  %v582 = vpop.f32.mrb[0].mxu0
  %v583 = vadd.f32 0.0, %v582
  %v584 = vpop.f32.mrb[0].mxu0
  %v585 = vpop.f32.mrb[0].mxu0
  %v586 = vpop.f32.mrb[0].mxu0
  %587 = vdwg.mxu0
  %v588 = vadd.f32 %v541, %v583
  %v589 = vtanh.pop %v588
  %v590 = vxor.u32 %v588, 2147483648
  %v591 = vmul.f32 %v590, 1.442695
  %v592 = vpow.pop %v591
  %v593 = vadd.f32 %v592, 1.0
  %v594 = vrcp.pop %v593
  %v595 = vmul.f32 1.0, %v594
  %v596 = vsel %vm375, %v589, %v595
  %v597 = vmul.f32 %v596, %v532
  %599 = vrot.lane.b32.xlu0 %v596, 64
  %v600 = vpop.permute.xlu0 %599
  %v602 = vmul.f32 %v596, %v600
  %604 = vrot.lane.b32.xlu0 %v602, 32
  %v605 = vpop.permute.xlu0 %604
  %v607 = vadd.f32 %v597, %v605
  %v608 = vtanh.pop %v607
  %610 = vrot.lane.b32.xlu0 %v608, 64
  %v611 = vpop.permute.xlu0 %610
  %v613 = vmul.f32 %v596, %v611
  %v614 = vpack.c.bf16 %v613, %v613
  %s615 = scalar_lea.vmem [#allocation2], 24
  %v616 = vld [vmem:[%s615] sm:$0xff]
  %618 = vrot.lane.b32.xlu0 %v614, 32
  %v619 = vpop.permute.xlu0 %618
  %v621 = vsel %vm98, %v619, 0
  %623 = vmatprep.subr.bf16.mxu0 0
  %624 = vmatpush1.bf16.msra.mxu0 %v387
  %625 = vmatprep.subr.bf16.mxu0 0
  %626 = vmatpush1.bf16.msra.mxu0 %v388
  %627 = vmatprep.subr.bf16.mxu0 0
  %628 = vmatpush1.bf16.msra.mxu0 0
  %629 = vmatprep.subr.bf16.mxu0 0
  %630 = vmatpush1.bf16.msra.mxu0 0
  %631 = vmatprep.subr.bf16.mxu0 0
  %632 = vmatpush1.bf16.msra.mxu0 0
  %633 = vmatprep.subr.bf16.mxu0 0
  %634 = vmatpush1.bf16.msra.mxu0 0
  %635 = vmatprep.subr.bf16.mxu0 0
  %636 = vmatpush1.bf16.msra.mxu0 0
  %637 = vmatprep.subr.bf16.mxu0 0
  %638 = vmatpush1.bf16.msra.mxu0 0
  %639 = vmatprep.subr.bf16.mxu0 0
  %640 = vmatpush1.bf16.msra.mxu0 0
  %641 = vmatprep.subr.bf16.mxu0 0
  %642 = vmatpush1.bf16.msra.mxu0 0
  %643 = vmatprep.subr.bf16.mxu0 0
  %644 = vmatpush1.bf16.msra.mxu0 0
  %645 = vmatprep.subr.bf16.mxu0 0
  %646 = vmatpush1.bf16.msra.mxu0 0
  %647 = vmatprep.subr.bf16.mxu0 0
  %648 = vmatpush1.bf16.msra.mxu0 0
  %649 = vmatprep.subr.bf16.mxu0 0
  %650 = vmatpush1.bf16.msra.mxu0 0
  %651 = vmatprep.subr.bf16.mxu0 0
  %652 = vmatpush1.bf16.msra.mxu0 0
  %653 = vmatprep.subr.bf16.mxu0 0
  %654 = vmatpush1.bf16.msra.mxu0 0
  %655 = vmatprep.mubr.bf16.mxu0 0
  %656 = vmatmul.mubr.bf16.gmra.mrb[0].mxu0 %v621
  %v657 = vpop.f32.mrb[0].mxu0
  %v658 = vadd.f32 0.0, %v657
  %v659 = vpop.f32.mrb[0].mxu0
  %v660 = vpop.f32.mrb[0].mxu0
  %v661 = vpop.f32.mrb[0].mxu0
  %662 = vdwg.mxu0
  %v663 = vadd.f32 %v616, %v658
  %v664 = vtanh.pop %v663
  %v665 = vxor.u32 %v663, 2147483648
  %v666 = vmul.f32 %v665, 1.442695
  %v667 = vpow.pop %v666
  %v668 = vadd.f32 %v667, 1.0
  %v669 = vrcp.pop %v668
  %v670 = vmul.f32 1.0, %v669
  %v671 = vsel %vm375, %v664, %v670
  %v672 = vmul.f32 %v671, %v607
  %674 = vrot.lane.b32.xlu0 %v671, 64
  %v675 = vpop.permute.xlu0 %674
  %v677 = vmul.f32 %v671, %v675
  %679 = vrot.lane.b32.xlu0 %v677, 32
  %v680 = vpop.permute.xlu0 %679
  %v682 = vadd.f32 %v672, %v680
  %v683 = vtanh.pop %v682
  %685 = vrot.lane.b32.xlu0 %v683, 64
  %v686 = vpop.permute.xlu0 %685
  %v688 = vmul.f32 %v671, %v686
  %v689 = vpack.c.bf16 %v688, %v688
  %s690 = scalar_lea.vmem [#allocation2], 32
  %v691 = vld [vmem:[%s690] sm:$0xff]
  %693 = vrot.lane.b32.xlu0 %v689, 32
  %v694 = vpop.permute.xlu0 %693
  %v696 = vsel %vm98, %v694, 0
  %698 = vmatprep.subr.bf16.mxu0 0
  %699 = vmatpush1.bf16.msra.mxu0 %v387
  %700 = vmatprep.subr.bf16.mxu0 0
  %701 = vmatpush1.bf16.msra.mxu0 %v388
  %702 = vmatprep.subr.bf16.mxu0 0
  %703 = vmatpush1.bf16.msra.mxu0 0
  %704 = vmatprep.subr.bf16.mxu0 0
  %705 = vmatpush1.bf16.msra.mxu0 0
  %706 = vmatprep.subr.bf16.mxu0 0
  %707 = vmatpush1.bf16.msra.mxu0 0
  %708 = vmatprep.subr.bf16.mxu0 0
  %709 = vmatpush1.bf16.msra.mxu0 0
  %710 = vmatprep.subr.bf16.mxu0 0
  %711 = vmatpush1.bf16.msra.mxu0 0
  %712 = vmatprep.subr.bf16.mxu0 0
  %713 = vmatpush1.bf16.msra.mxu0 0
  %714 = vmatprep.subr.bf16.mxu0 0
  %715 = vmatpush1.bf16.msra.mxu0 0
  %716 = vmatprep.subr.bf16.mxu0 0
  %717 = vmatpush1.bf16.msra.mxu0 0
  %718 = vmatprep.subr.bf16.mxu0 0
  %719 = vmatpush1.bf16.msra.mxu0 0
  %720 = vmatprep.subr.bf16.mxu0 0
  %721 = vmatpush1.bf16.msra.mxu0 0
  %722 = vmatprep.subr.bf16.mxu0 0
  %723 = vmatpush1.bf16.msra.mxu0 0
  %724 = vmatprep.subr.bf16.mxu0 0
  %725 = vmatpush1.bf16.msra.mxu0 0
  %726 = vmatprep.subr.bf16.mxu0 0
  %727 = vmatpush1.bf16.msra.mxu0 0
  %728 = vmatprep.subr.bf16.mxu0 0
  %729 = vmatpush1.bf16.msra.mxu0 0
  %730 = vmatprep.mubr.bf16.mxu0 0
  %731 = vmatmul.mubr.bf16.gmra.mrb[0].mxu0 %v696
  %v732 = vpop.f32.mrb[0].mxu0
  %v733 = vadd.f32 0.0, %v732
  %v734 = vpop.f32.mrb[0].mxu0
  %v735 = vpop.f32.mrb[0].mxu0
  %v736 = vpop.f32.mrb[0].mxu0
  %737 = vdwg.mxu0
  %v738 = vadd.f32 %v691, %v733
  %v739 = vtanh.pop %v738
  %v740 = vxor.u32 %v738, 2147483648
  %v741 = vmul.f32 %v740, 1.442695
  %v742 = vpow.pop %v741
  %v743 = vadd.f32 %v742, 1.0
  %v744 = vrcp.pop %v743
  %v745 = vmul.f32 1.0, %v744
  %v746 = vsel %vm375, %v739, %v745
  %v747 = vmul.f32 %v746, %v682
  %749 = vrot.lane.b32.xlu0 %v746, 64
  %v750 = vpop.permute.xlu0 %749
  %v752 = vmul.f32 %v746, %v750
  %754 = vrot.lane.b32.xlu0 %v752, 32
  %v755 = vpop.permute.xlu0 %754
  %v757 = vadd.f32 %v747, %v755
  %v758 = vtanh.pop %v757
  %760 = vrot.lane.b32.xlu0 %v758, 64
  %v761 = vpop.permute.xlu0 %760
  %v763 = vmul.f32 %v746, %v761
  %v764 = vpack.c.bf16 %v763, %v763
  %s765 = scalar_lea.vmem [#allocation2], 40
  %v766 = vld [vmem:[%s765] sm:$0xff]
  %768 = vrot.lane.b32.xlu0 %v764, 32
  %v769 = vpop.permute.xlu0 %768
  %v771 = vsel %vm98, %v769, 0
  %773 = vmatprep.subr.bf16.mxu0 0
  %774 = vmatpush1.bf16.msra.mxu0 %v387
  %775 = vmatprep.subr.bf16.mxu0 0
  %776 = vmatpush1.bf16.msra.mxu0 %v388
  %777 = vmatprep.subr.bf16.mxu0 0
  %778 = vmatpush1.bf16.msra.mxu0 0
  %779 = vmatprep.subr.bf16.mxu0 0
  %780 = vmatpush1.bf16.msra.mxu0 0
  %781 = vmatprep.subr.bf16.mxu0 0
  %782 = vmatpush1.bf16.msra.mxu0 0
  %783 = vmatprep.subr.bf16.mxu0 0
  %784 = vmatpush1.bf16.msra.mxu0 0
  %785 = vmatprep.subr.bf16.mxu0 0
  %786 = vmatpush1.bf16.msra.mxu0 0
  %787 = vmatprep.subr.bf16.mxu0 0
  %788 = vmatpush1.bf16.msra.mxu0 0
  %789 = vmatprep.subr.bf16.mxu0 0
  %790 = vmatpush1.bf16.msra.mxu0 0
  %791 = vmatprep.subr.bf16.mxu0 0
  %792 = vmatpush1.bf16.msra.mxu0 0
  %793 = vmatprep.subr.bf16.mxu0 0
  %794 = vmatpush1.bf16.msra.mxu0 0
  %795 = vmatprep.subr.bf16.mxu0 0
  %796 = vmatpush1.bf16.msra.mxu0 0
  %797 = vmatprep.subr.bf16.mxu0 0
  %798 = vmatpush1.bf16.msra.mxu0 0
  %799 = vmatprep.subr.bf16.mxu0 0
  %800 = vmatpush1.bf16.msra.mxu0 0
  %801 = vmatprep.subr.bf16.mxu0 0
  %802 = vmatpush1.bf16.msra.mxu0 0
  %803 = vmatprep.subr.bf16.mxu0 0
  %804 = vmatpush1.bf16.msra.mxu0 0
  %805 = vmatprep.mubr.bf16.mxu0 0
  %806 = vmatmul.mubr.bf16.gmra.mrb[0].mxu0 %v771
  %v807 = vpop.f32.mrb[0].mxu0
  %v808 = vadd.f32 0.0, %v807
  %v809 = vpop.f32.mrb[0].mxu0
  %v810 = vpop.f32.mrb[0].mxu0
  %v811 = vpop.f32.mrb[0].mxu0
  %812 = vdwg.mxu0
  %v813 = vadd.f32 %v766, %v808
  %v814 = vtanh.pop %v813
  %v815 = vxor.u32 %v813, 2147483648
  %v816 = vmul.f32 %v815, 1.442695
  %v817 = vpow.pop %v816
  %v818 = vadd.f32 %v817, 1.0
  %v819 = vrcp.pop %v818
  %v820 = vmul.f32 1.0, %v819
  %v821 = vsel %vm375, %v814, %v820
  %v822 = vmul.f32 %v821, %v757
  %824 = vrot.lane.b32.xlu0 %v821, 64
  %v825 = vpop.permute.xlu0 %824
  %v827 = vmul.f32 %v821, %v825
  %829 = vrot.lane.b32.xlu0 %v827, 32
  %v830 = vpop.permute.xlu0 %829
  %v832 = vadd.f32 %v822, %v830
  %v833 = vtanh.pop %v832
  %835 = vrot.lane.b32.xlu0 %v833, 64
  %v836 = vpop.permute.xlu0 %835
  %v838 = vmul.f32 %v821, %v836
  %v839 = vpack.c.bf16 %v838, %v838
  %s840 = scalar_lea.vmem [#allocation2], 48
  %v841 = vld [vmem:[%s840] sm:$0xff]
  %843 = vrot.lane.b32.xlu0 %v839, 32
  %v844 = vpop.permute.xlu0 %843
  %v846 = vsel %vm98, %v844, 0
  %848 = vmatprep.subr.bf16.mxu0 0
  %849 = vmatpush1.bf16.msra.mxu0 %v387
  %850 = vmatprep.subr.bf16.mxu0 0
  %851 = vmatpush1.bf16.msra.mxu0 %v388
  %852 = vmatprep.subr.bf16.mxu0 0
  %853 = vmatpush1.bf16.msra.mxu0 0
  %854 = vmatprep.subr.bf16.mxu0 0
  %855 = vmatpush1.bf16.msra.mxu0 0
  %856 = vmatprep.subr.bf16.mxu0 0
  %857 = vmatpush1.bf16.msra.mxu0 0
  %858 = vmatprep.subr.bf16.mxu0 0
  %859 = vmatpush1.bf16.msra.mxu0 0
  %860 = vmatprep.subr.bf16.mxu0 0
  %861 = vmatpush1.bf16.msra.mxu0 0
  %862 = vmatprep.subr.bf16.mxu0 0
  %863 = vmatpush1.bf16.msra.mxu0 0
  %864 = vmatprep.subr.bf16.mxu0 0
  %865 = vmatpush1.bf16.msra.mxu0 0
  %866 = vmatprep.subr.bf16.mxu0 0
  %867 = vmatpush1.bf16.msra.mxu0 0
  %868 = vmatprep.subr.bf16.mxu0 0
  %869 = vmatpush1.bf16.msra.mxu0 0
  %870 = vmatprep.subr.bf16.mxu0 0
  %871 = vmatpush1.bf16.msra.mxu0 0
  %872 = vmatprep.subr.bf16.mxu0 0
  %873 = vmatpush1.bf16.msra.mxu0 0
  %874 = vmatprep.subr.bf16.mxu0 0
  %875 = vmatpush1.bf16.msra.mxu0 0
  %876 = vmatprep.subr.bf16.mxu0 0
  %877 = vmatpush1.bf16.msra.mxu0 0
  %878 = vmatprep.subr.bf16.mxu0 0
  %879 = vmatpush1.bf16.msra.mxu0 0
  %880 = vmatprep.mubr.bf16.mxu0 0
  %881 = vmatmul.mubr.bf16.gmra.mrb[0].mxu0 %v846
  %v882 = vpop.f32.mrb[0].mxu0
  %v883 = vadd.f32 0.0, %v882
  %v884 = vpop.f32.mrb[0].mxu0
  %v885 = vpop.f32.mrb[0].mxu0
  %v886 = vpop.f32.mrb[0].mxu0
  %887 = vdwg.mxu0
  %v888 = vadd.f32 %v841, %v883
  %v889 = vtanh.pop %v888
  %v890 = vxor.u32 %v888, 2147483648
  %v891 = vmul.f32 %v890, 1.442695
  %v892 = vpow.pop %v891
  %v893 = vadd.f32 %v892, 1.0
  %v894 = vrcp.pop %v893
  %v895 = vmul.f32 1.0, %v894
  %v896 = vsel %vm375, %v889, %v895
  %v897 = vmul.f32 %v896, %v832
  %899 = vrot.lane.b32.xlu0 %v896, 64
  %v900 = vpop.permute.xlu0 %899
  %v902 = vmul.f32 %v896, %v900
  %904 = vrot.lane.b32.xlu0 %v902, 32
  %v905 = vpop.permute.xlu0 %904
  %v907 = vadd.f32 %v897, %v905
  %v908 = vtanh.pop %v907
  %910 = vrot.lane.b32.xlu0 %v908, 64
  %v911 = vpop.permute.xlu0 %910
  %v913 = vmul.f32 %v896, %v911
  %v914 = vpack.c.bf16 %v913, %v913
  %s915 = scalar_lea.vmem [#allocation2], 56
  %v916 = vld [vmem:[%s915] sm:$0xff]
  %918 = vrot.lane.b32.xlu0 %v914, 32
  %v919 = vpop.permute.xlu0 %918
  %v921 = vsel %vm98, %v919, 0
  %923 = vmatprep.subr.bf16.mxu0 0
  %924 = vmatpush1.bf16.msra.mxu0 %v387
  %925 = vmatprep.subr.bf16.mxu0 0
  %926 = vmatpush1.bf16.msra.mxu0 %v388
  %927 = vmatprep.subr.bf16.mxu0 0
  %928 = vmatpush1.bf16.msra.mxu0 0
  %929 = vmatprep.subr.bf16.mxu0 0
  %930 = vmatpush1.bf16.msra.mxu0 0
  %931 = vmatprep.subr.bf16.mxu0 0
  %932 = vmatpush1.bf16.msra.mxu0 0
  %933 = vmatprep.subr.bf16.mxu0 0
  %934 = vmatpush1.bf16.msra.mxu0 0
  %935 = vmatprep.subr.bf16.mxu0 0
  %936 = vmatpush1.bf16.msra.mxu0 0
  %937 = vmatprep.subr.bf16.mxu0 0
  %938 = vmatpush1.bf16.msra.mxu0 0
  %939 = vmatprep.subr.bf16.mxu0 0
  %940 = vmatpush1.bf16.msra.mxu0 0
  %941 = vmatprep.subr.bf16.mxu0 0
  %942 = vmatpush1.bf16.msra.mxu0 0
  %943 = vmatprep.subr.bf16.mxu0 0
  %944 = vmatpush1.bf16.msra.mxu0 0
  %945 = vmatprep.subr.bf16.mxu0 0
  %946 = vmatpush1.bf16.msra.mxu0 0
  %947 = vmatprep.subr.bf16.mxu0 0
  %948 = vmatpush1.bf16.msra.mxu0 0
  %949 = vmatprep.subr.bf16.mxu0 0
  %950 = vmatpush1.bf16.msra.mxu0 0
  %951 = vmatprep.subr.bf16.mxu0 0
  %952 = vmatpush1.bf16.msra.mxu0 0
  %953 = vmatprep.subr.bf16.mxu0 0
  %954 = vmatpush1.bf16.msra.mxu0 0
  %955 = vmatprep.mubr.bf16.mxu0 0
  %956 = vmatmul.mubr.bf16.gmra.mrb[0].mxu0 %v921
  %v957 = vpop.f32.mrb[0].mxu0
  %v958 = vadd.f32 0.0, %v957
  %v959 = vpop.f32.mrb[0].mxu0
  %v960 = vpop.f32.mrb[0].mxu0
  %v961 = vpop.f32.mrb[0].mxu0
  %962 = vdwg.mxu0
  %v963 = vadd.f32 %v916, %v958
  %v964 = vtanh.pop %v963
  %v965 = vxor.u32 %v963, 2147483648
  %v966 = vmul.f32 %v965, 1.442695
  %v967 = vpow.pop %v966
  %v968 = vadd.f32 %v967, 1.0
  %v969 = vrcp.pop %v968
  %v970 = vmul.f32 1.0, %v969
  %v971 = vsel %vm375, %v964, %v970
  %v972 = vmul.f32 %v971, %v907
  %974 = vrot.lane.b32.xlu0 %v971, 64
  %v975 = vpop.permute.xlu0 %974
  %v977 = vmul.f32 %v971, %v975
  %979 = vrot.lane.b32.xlu0 %v977, 32
  %v980 = vpop.permute.xlu0 %979
  %v982 = vadd.f32 %v972, %v980
  %v983 = vtanh.pop %v982
  %985 = vrot.lane.b32.xlu0 %v983, 64
  %v986 = vpop.permute.xlu0 %985
  %v988 = vmul.f32 %v971, %v986
  %v989 = vpack.c.bf16 %v988, %v988
  %v991 = vunpack.c.l.b16 %v989
  %v992 = vpack.c.b16 %v991, %v991
  %993 = vrot.lane.b32.xlu0 %v992, 32
  %v994 = vpop.permute.xlu0 %993
  %vm996 = vcmask 257024
  %997 = vst.msk [vmem:[#allocation3] sm:$0xf] %vm996, %v994
  %999 = vrot.lane.b32.xlu0 %v982, 96
  %v1000 = vpop.permute.xlu0 %999
  %1002 = vst.msk [vmem:[#allocation4] sm:$0xff] %vm98, %v1000
  // Predicated region
  $region70: #{rnn_forward.5} parent=0 // pred_check
    %p1003 = pneg %p360
  $region71: #{rnn_forward.5} parent=0 // pred_check_branch
    %1005 = sbr.rel (%p1003) target = $region73
  $region72: #{rnn_forward.5} parent=0 // pred_region
    %v1006 = vunpack.c.l.bf16 %v989
    %s1007 = scalar_lea.vmem %s0, 28
    %v1008 = vld [vmem:[%s1007] sm:$0xf]
    %v1009 = vunpack.c.l.bf16 %v1008
    %s1010 = scalar_lea.vmem %s1, 28
    %v1011 = vld [vmem:[%s1010] sm:$0xf]
    %v1012 = vunpack.c.l.bf16 %v1011
    %v1013 = vld [vmem:[%s6] sm:$0xff]
    %v1014 = vld [vmem:[%s6 + $0x8] sm:$0xff]
    %v1015 = vld [vmem:[%s6 + $0x10] sm:$0xff]
    %v1016 = vld [vmem:[%s6 + $0x18] sm:$0xff]
    %v1017 = vld [vmem:[%s7] sm:$0xff]
    %v1018 = vld [vmem:[%s7 + $0x8] sm:$0xff]
    %v1019 = vld [vmem:[%s7 + $0x10] sm:$0xff]
    %v1020 = vld [vmem:[%s7 + $0x18] sm:$0xff]
    %v1022 = vsel %vm98, %v1012, 0
    %1024 = vmatprep.subr.mxu0 0.0
    %1025 = vmatpush1.msra.mxu0 %v1017
    %1026 = vmatprep.subr.mxu0 0.0
    %1027 = vmatpush1.msra.mxu0 %v1018
    %1028 = vmatprep.subr.mxu0 0.0
    %1029 = vmatpush1.msra.mxu0 %v1019
    %1030 = vmatprep.subr.mxu0 0.0
    %1031 = vmatpush1.msra.mxu0 %v1020
    %1032 = vmatprep.subr.mxu0 0.0
    %1033 = vmatpush1.msra.mxu0 0.0
    %1034 = vmatprep.subr.mxu0 0.0
    %1035 = vmatpush1.msra.mxu0 0.0
    %1036 = vmatprep.subr.mxu0 0.0
    %1037 = vmatpush1.msra.mxu0 0.0
    %1038 = vmatprep.subr.mxu0 0.0
    %1039 = vmatpush1.msra.mxu0 0.0
    %1040 = vmatprep.subr.mxu0 0.0
    %1041 = vmatpush1.msra.mxu0 0.0
    %1042 = vmatprep.subr.mxu0 0.0
    %1043 = vmatpush1.msra.mxu0 0.0
    %1044 = vmatprep.subr.mxu0 0.0
    %1045 = vmatpush1.msra.mxu0 0.0
    %1046 = vmatprep.subr.mxu0 0.0
    %1047 = vmatpush1.msra.mxu0 0.0
    %1048 = vmatprep.subr.mxu0 0.0
    %1049 = vmatpush1.msra.mxu0 0.0
    %1050 = vmatprep.subr.mxu0 0.0
    %1051 = vmatpush1.msra.mxu0 0.0
    %1052 = vmatprep.subr.mxu0 0.0
    %1053 = vmatpush1.msra.mxu0 0.0
    %1054 = vmatprep.subr.mxu0 0.0
    %1055 = vmatpush1.msra.mxu0 0.0
    %1056 = vmatprep.subr.mxu0 0.0
    %1057 = vmatpush1.msra.mxu0 0.0
    %1058 = vmatprep.subr.mxu0 0.0
    %1059 = vmatpush1.msra.mxu0 0.0
    %1060 = vmatprep.subr.mxu0 0.0
    %1061 = vmatpush1.msra.mxu0 0.0
    %1062 = vmatprep.subr.mxu0 0.0
    %1063 = vmatpush1.msra.mxu0 0.0
    %1064 = vmatprep.subr.mxu0 0.0
    %1065 = vmatpush1.msra.mxu0 0.0
    %1066 = vmatprep.subr.mxu0 0.0
    %1067 = vmatpush1.msra.mxu0 0.0
    %1068 = vmatprep.subr.mxu0 0.0
    %1069 = vmatpush1.msra.mxu0 0.0
    %1070 = vmatprep.subr.mxu0 0.0
    %1071 = vmatpush1.msra.mxu0 0.0
    %1072 = vmatprep.subr.mxu0 0.0
    %1073 = vmatpush1.msra.mxu0 0.0
    %1074 = vmatprep.subr.mxu0 0.0
    %1075 = vmatpush1.msra.mxu0 0.0
    %1076 = vmatprep.subr.mxu0 0.0
    %1077 = vmatpush1.msra.mxu0 0.0
    %1078 = vmatprep.subr.mxu0 0.0
    %1079 = vmatpush1.msra.mxu0 0.0
    %1080 = vmatprep.subr.mxu0 0.0
    %1081 = vmatpush1.msra.mxu0 0.0
    %1082 = vmatprep.subr.mxu0 0.0
    %1083 = vmatpush1.msra.mxu0 0.0
    %1084 = vmatprep.subr.mxu0 0.0
    %1085 = vmatpush1.msra.mxu0 0.0
    %1086 = vmatprep.subr.mxu0 0.0
    %1087 = vmatpush1.msra.mxu0 0.0
    %1088 = vmatprep.mubr.f32.mxu0 0.0
    %1089 = vmatmul.mubr.f32.gmra.mrb[0].mxu0 %v1022
    %v1090 = vpop.f32.mrb[0].mxu0
    %v1091 = vadd.f32 0.0, %v1090
    %v1092 = vpop.f32.mrb[0].mxu0
    %1093 = vdwg.mxu0
    %v1095 = vsel %vm98, %v1009, 0
    %1097 = vmatprep.subr.mxu0 0.0
    %1098 = vmatpush1.msra.mxu0 %v1013
    %1099 = vmatprep.subr.mxu0 0.0
    %1100 = vmatpush1.msra.mxu0 %v1014
    %1101 = vmatprep.subr.mxu0 0.0
    %1102 = vmatpush1.msra.mxu0 %v1015
    %1103 = vmatprep.subr.mxu0 0.0
    %1104 = vmatpush1.msra.mxu0 %v1016
    %1105 = vmatprep.subr.mxu0 0.0
    %1106 = vmatpush1.msra.mxu0 0.0
    %1107 = vmatprep.subr.mxu0 0.0
    %1108 = vmatpush1.msra.mxu0 0.0
    %1109 = vmatprep.subr.mxu0 0.0
    %1110 = vmatpush1.msra.mxu0 0.0
    %1111 = vmatprep.subr.mxu0 0.0
    %1112 = vmatpush1.msra.mxu0 0.0
    %1113 = vmatprep.subr.mxu0 0.0
    %1114 = vmatpush1.msra.mxu0 0.0
    %1115 = vmatprep.subr.mxu0 0.0
    %1116 = vmatpush1.msra.mxu0 0.0
    %1117 = vmatprep.subr.mxu0 0.0
    %1118 = vmatpush1.msra.mxu0 0.0
    %1119 = vmatprep.subr.mxu0 0.0
    %1120 = vmatpush1.msra.mxu0 0.0
    %1121 = vmatprep.subr.mxu0 0.0
    %1122 = vmatpush1.msra.mxu0 0.0
    %1123 = vmatprep.subr.mxu0 0.0
    %1124 = vmatpush1.msra.mxu0 0.0
    %1125 = vmatprep.subr.mxu0 0.0
    %1126 = vmatpush1.msra.mxu0 0.0
    %1127 = vmatprep.subr.mxu0 0.0
    %1128 = vmatpush1.msra.mxu0 0.0
    %1129 = vmatprep.subr.mxu0 0.0
    %1130 = vmatpush1.msra.mxu0 0.0
    %1131 = vmatprep.subr.mxu0 0.0
    %1132 = vmatpush1.msra.mxu0 0.0
    %1133 = vmatprep.subr.mxu0 0.0
    %1134 = vmatpush1.msra.mxu0 0.0
    %1135 = vmatprep.subr.mxu0 0.0
    %1136 = vmatpush1.msra.mxu0 0.0
    %1137 = vmatprep.subr.mxu0 0.0
    %1138 = vmatpush1.msra.mxu0 0.0
    %1139 = vmatprep.subr.mxu0 0.0
    %1140 = vmatpush1.msra.mxu0 0.0
    %1141 = vmatprep.subr.mxu0 0.0
    %1142 = vmatpush1.msra.mxu0 0.0
    %1143 = vmatprep.subr.mxu0 0.0
    %1144 = vmatpush1.msra.mxu0 0.0
    %1145 = vmatprep.subr.mxu0 0.0
    %1146 = vmatpush1.msra.mxu0 0.0
    %1147 = vmatprep.subr.mxu0 0.0
    %1148 = vmatpush1.msra.mxu0 0.0
    %1149 = vmatprep.subr.mxu0 0.0
    %1150 = vmatpush1.msra.mxu0 0.0
    %1151 = vmatprep.subr.mxu0 0.0
    %1152 = vmatpush1.msra.mxu0 0.0
    %1153 = vmatprep.subr.mxu0 0.0
    %1154 = vmatpush1.msra.mxu0 0.0
    %1155 = vmatprep.subr.mxu0 0.0
    %1156 = vmatpush1.msra.mxu0 0.0
    %1157 = vmatprep.subr.mxu0 0.0
    %1158 = vmatpush1.msra.mxu0 0.0
    %1159 = vmatprep.subr.mxu0 0.0
    %1160 = vmatpush1.msra.mxu0 0.0
    %1161 = vmatprep.mubr.f32.mxu0 0.0
    %1162 = vmatmul.mubr.f32.gmra.mrb[0].mxu0 %v1095
    %v1163 = vpop.f32.mrb[0].mxu0
    %v1164 = vadd.f32 %v1091, %v1163
    %v1165 = vpop.f32.mrb[0].mxu0
    %1166 = vdwg.mxu0
    %v1167 = vld [vmem:[%s8] sm:$0x1]
    %v1169 = vlaneseq
    %v1170 = vshrl.u32 %v1169, 7
    %v1171 = vsub.s32 0, %v1170
    %v1172 = vrot.slane %v1167, %v1171
    %v1174 = vadd.f32 %v1164, %v1172
    %v1175 = vxor.u32 %v1174, 2147483648
    %v1176 = vmul.f32 %v1175, 1.442695
    %v1177 = vpow.pop %v1176
    %v1178 = vadd.f32 %v1177, 1.0
    %v1179 = vrcp.pop %v1178
    %v1180 = vmul.f32 1.0, %v1179
    %v1181 = vtanh.pop %v1174
    %1183 = vrot.lane.b32.xlu0 %v1181, 64
    %v1184 = vpop.permute.xlu0 %1183
    %v1186 = vmul.f32 %v1180, %v1184
    %v1187 = vtanh.pop %v1186
    %1189 = vrot.lane.b32.xlu0 %v1187, 96
    %v1190 = vpop.permute.xlu0 %1189
    %v1192 = vmul.f32 %v1180, %v1190
    %v1193 = vld [vmem:[%s9] sm:$0xff]
    %v1194 = vld [vmem:[%s9 + $0x8] sm:$0xff]
    %v1195 = vld [vmem:[%s9 + $0x10] sm:$0xff]
    %v1196 = vld [vmem:[%s9 + $0x18] sm:$0xff]
    %v1197 = vld [vmem:[%s10] sm:$0xff]
    %v1198 = vld [vmem:[%s10 + $0x8] sm:$0xff]
    %v1199 = vld [vmem:[%s10 + $0x10] sm:$0xff]
    %v1200 = vld [vmem:[%s10 + $0x18] sm:$0xff]
    %1202 = vrot.lane.b32.xlu0 %v1192, 32
    %v1203 = vpop.permute.xlu0 %1202
    %v1204 = vsel %vm98, %v1203, 0
    %1206 = vmatprep.subr.mxu0 0.0
    %1207 = vmatpush1.msra.mxu0 %v1197
    %1208 = vmatprep.subr.mxu0 0.0
    %1209 = vmatpush1.msra.mxu0 %v1198
    %1210 = vmatprep.subr.mxu0 0.0
    %1211 = vmatpush1.msra.mxu0 %v1199
    %1212 = vmatprep.subr.mxu0 0.0
    %1213 = vmatpush1.msra.mxu0 %v1200
    %1214 = vmatprep.subr.mxu0 0.0
    %1215 = vmatpush1.msra.mxu0 0.0
    %1216 = vmatprep.subr.mxu0 0.0
    %1217 = vmatpush1.msra.mxu0 0.0
    %1218 = vmatprep.subr.mxu0 0.0
    %1219 = vmatpush1.msra.mxu0 0.0
    %1220 = vmatprep.subr.mxu0 0.0
    %1221 = vmatpush1.msra.mxu0 0.0
    %1222 = vmatprep.subr.mxu0 0.0
    %1223 = vmatpush1.msra.mxu0 0.0
    %1224 = vmatprep.subr.mxu0 0.0
    %1225 = vmatpush1.msra.mxu0 0.0
    %1226 = vmatprep.subr.mxu0 0.0
    %1227 = vmatpush1.msra.mxu0 0.0
    %1228 = vmatprep.subr.mxu0 0.0
    %1229 = vmatpush1.msra.mxu0 0.0
    %1230 = vmatprep.subr.mxu0 0.0
    %1231 = vmatpush1.msra.mxu0 0.0
    %1232 = vmatprep.subr.mxu0 0.0
    %1233 = vmatpush1.msra.mxu0 0.0
    %1234 = vmatprep.subr.mxu0 0.0
    %1235 = vmatpush1.msra.mxu0 0.0
    %1236 = vmatprep.subr.mxu0 0.0
    %1237 = vmatpush1.msra.mxu0 0.0
    %1238 = vmatprep.subr.mxu0 0.0
    %1239 = vmatpush1.msra.mxu0 0.0
    %1240 = vmatprep.subr.mxu0 0.0
    %1241 = vmatpush1.msra.mxu0 0.0
    %1242 = vmatprep.subr.mxu0 0.0
    %1243 = vmatpush1.msra.mxu0 0.0
    %1244 = vmatprep.subr.mxu0 0.0
    %1245 = vmatpush1.msra.mxu0 0.0
    %1246 = vmatprep.subr.mxu0 0.0
    %1247 = vmatpush1.msra.mxu0 0.0
    %1248 = vmatprep.subr.mxu0 0.0
    %1249 = vmatpush1.msra.mxu0 0.0
    %1250 = vmatprep.subr.mxu0 0.0
    %1251 = vmatpush1.msra.mxu0 0.0
    %1252 = vmatprep.subr.mxu0 0.0
    %1253 = vmatpush1.msra.mxu0 0.0
    %1254 = vmatprep.subr.mxu0 0.0
    %1255 = vmatpush1.msra.mxu0 0.0
    %1256 = vmatprep.subr.mxu0 0.0
    %1257 = vmatpush1.msra.mxu0 0.0
    %1258 = vmatprep.subr.mxu0 0.0
    %1259 = vmatpush1.msra.mxu0 0.0
    %1260 = vmatprep.subr.mxu0 0.0
    %1261 = vmatpush1.msra.mxu0 0.0
    %1262 = vmatprep.subr.mxu0 0.0
    %1263 = vmatpush1.msra.mxu0 0.0
    %1264 = vmatprep.subr.mxu0 0.0
    %1265 = vmatpush1.msra.mxu0 0.0
    %1266 = vmatprep.subr.mxu0 0.0
    %1267 = vmatpush1.msra.mxu0 0.0
    %1268 = vmatprep.subr.mxu0 0.0
    %1269 = vmatpush1.msra.mxu0 0.0
    %1270 = vmatprep.mubr.f32.mxu0 0.0
    %1271 = vmatmul.mubr.f32.gmra.mrb[0].mxu0 %v1204
    %v1272 = vpop.f32.mrb[0].mxu0
    %v1273 = vadd.f32 0.0, %v1272
    %v1274 = vpop.f32.mrb[0].mxu0
    %1275 = vdwg.mxu0
    %1277 = vrot.lane.b32.xlu0 %v1006, 32
    %v1278 = vpop.permute.xlu0 %1277
    %v1279 = vsel %vm98, %v1278, 0
    %1281 = vmatprep.subr.mxu0 0.0
    %1282 = vmatpush1.msra.mxu0 %v1193
    %1283 = vmatprep.subr.mxu0 0.0
    %1284 = vmatpush1.msra.mxu0 %v1194
    %1285 = vmatprep.subr.mxu0 0.0
    %1286 = vmatpush1.msra.mxu0 %v1195
    %1287 = vmatprep.subr.mxu0 0.0
    %1288 = vmatpush1.msra.mxu0 %v1196
    %1289 = vmatprep.subr.mxu0 0.0
    %1290 = vmatpush1.msra.mxu0 0.0
    %1291 = vmatprep.subr.mxu0 0.0
    %1292 = vmatpush1.msra.mxu0 0.0
    %1293 = vmatprep.subr.mxu0 0.0
    %1294 = vmatpush1.msra.mxu0 0.0
    %1295 = vmatprep.subr.mxu0 0.0
    %1296 = vmatpush1.msra.mxu0 0.0
    %1297 = vmatprep.subr.mxu0 0.0
    %1298 = vmatpush1.msra.mxu0 0.0
    %1299 = vmatprep.subr.mxu0 0.0
    %1300 = vmatpush1.msra.mxu0 0.0
    %1301 = vmatprep.subr.mxu0 0.0
    %1302 = vmatpush1.msra.mxu0 0.0
    %1303 = vmatprep.subr.mxu0 0.0
    %1304 = vmatpush1.msra.mxu0 0.0
    %1305 = vmatprep.subr.mxu0 0.0
    %1306 = vmatpush1.msra.mxu0 0.0
    %1307 = vmatprep.subr.mxu0 0.0
    %1308 = vmatpush1.msra.mxu0 0.0
    %1309 = vmatprep.subr.mxu0 0.0
    %1310 = vmatpush1.msra.mxu0 0.0
    %1311 = vmatprep.subr.mxu0 0.0
    %1312 = vmatpush1.msra.mxu0 0.0
    %1313 = vmatprep.subr.mxu0 0.0
    %1314 = vmatpush1.msra.mxu0 0.0
    %1315 = vmatprep.subr.mxu0 0.0
    %1316 = vmatpush1.msra.mxu0 0.0
    %1317 = vmatprep.subr.mxu0 0.0
    %1318 = vmatpush1.msra.mxu0 0.0
    %1319 = vmatprep.subr.mxu0 0.0
    %1320 = vmatpush1.msra.mxu0 0.0
    %1321 = vmatprep.subr.mxu0 0.0
    %1322 = vmatpush1.msra.mxu0 0.0
    %1323 = vmatprep.subr.mxu0 0.0
    %1324 = vmatpush1.msra.mxu0 0.0
    %1325 = vmatprep.subr.mxu0 0.0
    %1326 = vmatpush1.msra.mxu0 0.0
    %1327 = vmatprep.subr.mxu0 0.0
    %1328 = vmatpush1.msra.mxu0 0.0
    %1329 = vmatprep.subr.mxu0 0.0
    %1330 = vmatpush1.msra.mxu0 0.0
    %1331 = vmatprep.subr.mxu0 0.0
    %1332 = vmatpush1.msra.mxu0 0.0
    %1333 = vmatprep.subr.mxu0 0.0
    %1334 = vmatpush1.msra.mxu0 0.0
    %1335 = vmatprep.subr.mxu0 0.0
    %1336 = vmatpush1.msra.mxu0 0.0
    %1337 = vmatprep.subr.mxu0 0.0
    %1338 = vmatpush1.msra.mxu0 0.0
    %1339 = vmatprep.subr.mxu0 0.0
    %1340 = vmatpush1.msra.mxu0 0.0
    %1341 = vmatprep.subr.mxu0 0.0
    %1342 = vmatpush1.msra.mxu0 0.0
    %1343 = vmatprep.subr.mxu0 0.0
    %1344 = vmatpush1.msra.mxu0 0.0
    %1345 = vmatprep.mubr.f32.mxu0 0.0
    %1346 = vmatmul.mubr.f32.gmra.mrb[0].mxu0 %v1279
    %v1347 = vpop.f32.mrb[0].mxu0
    %v1348 = vadd.f32 %v1273, %v1347
    %v1349 = vpop.f32.mrb[0].mxu0
    %1350 = vdwg.mxu0
    %v1351 = vld [vmem:[%s11] sm:$0x1]
    %v1353 = vlaneseq
    %v1354 = vshrl.u32 %v1353, 7
    %v1355 = vsub.s32 0, %v1354
    %v1356 = vrot.slane %v1351, %v1355
    %v1358 = vadd.f32 %v1348, %v1356
    %v1359 = vmax.f32 %v1358, 0.0
    %v1360 = vld [vmem:[%s12] sm:$0xff]
    %v1361 = vld [vmem:[%s12 + $0x8] sm:$0xff]
    %v1362 = vld [vmem:[%s12 + $0x10] sm:$0xff]
    %v1363 = vld [vmem:[%s12 + $0x18] sm:$0xff]
    %v1364 = vld [vmem:[%s13] sm:$0x1]
    %v1366 = vlaneseq
    %v1367 = vshrl.u32 %v1366, 7
    %v1368 = vsub.s32 0, %v1367
    %v1369 = vrot.slane %v1364, %v1368
    %v1372 = vsel %vm98, %v1359, 0
    %1374 = vmatprep.subr.mxu0 0.0
    %1375 = vmatpush1.msra.mxu0 %v1360
    %1376 = vmatprep.subr.mxu0 0.0
    %1377 = vmatpush1.msra.mxu0 %v1361
    %1378 = vmatprep.subr.mxu0 0.0
    %1379 = vmatpush1.msra.mxu0 %v1362
    %1380 = vmatprep.subr.mxu0 0.0
    %1381 = vmatpush1.msra.mxu0 %v1363
    %1382 = vmatprep.subr.mxu0 0.0
    %1383 = vmatpush1.msra.mxu0 0.0
    %1384 = vmatprep.subr.mxu0 0.0
    %1385 = vmatpush1.msra.mxu0 0.0
    %1386 = vmatprep.subr.mxu0 0.0
    %1387 = vmatpush1.msra.mxu0 0.0
    %1388 = vmatprep.subr.mxu0 0.0
    %1389 = vmatpush1.msra.mxu0 0.0
    %1390 = vmatprep.subr.mxu0 0.0
    %1391 = vmatpush1.msra.mxu0 0.0
    %1392 = vmatprep.subr.mxu0 0.0
    %1393 = vmatpush1.msra.mxu0 0.0
    %1394 = vmatprep.subr.mxu0 0.0
    %1395 = vmatpush1.msra.mxu0 0.0
    %1396 = vmatprep.subr.mxu0 0.0
    %1397 = vmatpush1.msra.mxu0 0.0
    %1398 = vmatprep.subr.mxu0 0.0
    %1399 = vmatpush1.msra.mxu0 0.0
    %1400 = vmatprep.subr.mxu0 0.0
    %1401 = vmatpush1.msra.mxu0 0.0
    %1402 = vmatprep.subr.mxu0 0.0
    %1403 = vmatpush1.msra.mxu0 0.0
    %1404 = vmatprep.subr.mxu0 0.0
    %1405 = vmatpush1.msra.mxu0 0.0
    %1406 = vmatprep.subr.mxu0 0.0
    %1407 = vmatpush1.msra.mxu0 0.0
    %1408 = vmatprep.subr.mxu0 0.0
    %1409 = vmatpush1.msra.mxu0 0.0
    %1410 = vmatprep.subr.mxu0 0.0
    %1411 = vmatpush1.msra.mxu0 0.0
    %1412 = vmatprep.subr.mxu0 0.0
    %1413 = vmatpush1.msra.mxu0 0.0
    %1414 = vmatprep.subr.mxu0 0.0
    %1415 = vmatpush1.msra.mxu0 0.0
    %1416 = vmatprep.subr.mxu0 0.0
    %1417 = vmatpush1.msra.mxu0 0.0
    %1418 = vmatprep.subr.mxu0 0.0
    %1419 = vmatpush1.msra.mxu0 0.0
    %1420 = vmatprep.subr.mxu0 0.0
    %1421 = vmatpush1.msra.mxu0 0.0
    %1422 = vmatprep.subr.mxu0 0.0
    %1423 = vmatpush1.msra.mxu0 0.0
    %1424 = vmatprep.subr.mxu0 0.0
    %1425 = vmatpush1.msra.mxu0 0.0
    %1426 = vmatprep.subr.mxu0 0.0
    %1427 = vmatpush1.msra.mxu0 0.0
    %1428 = vmatprep.subr.mxu0 0.0
    %1429 = vmatpush1.msra.mxu0 0.0
    %1430 = vmatprep.subr.mxu0 0.0
    %1431 = vmatpush1.msra.mxu0 0.0
    %1432 = vmatprep.subr.mxu0 0.0
    %1433 = vmatpush1.msra.mxu0 0.0
    %1434 = vmatprep.subr.mxu0 0.0
    %1435 = vmatpush1.msra.mxu0 0.0
    %1436 = vmatprep.subr.mxu0 0.0
    %1437 = vmatpush1.msra.mxu0 0.0
    %1438 = vmatprep.mubr.f32.mxu0 0.0
    %1439 = vmatmul.mubr.f32.gmra.mrb[0].mxu0 %v1372
    %v1440 = vpop.f32.mrb[0].mxu0
    %v1441 = vadd.f32 %v1369, %v1440
    %v1442 = vpop.f32.mrb[0].mxu0
    %1443 = vdwg.mxu0
    %v1444 = vmax.f32 %v1441, 0.0
    %v1445 = vld [vmem:[%s14] sm:$0xff]
    %v1446 = vld [vmem:[%s14 + $0x8] sm:$0xff]
    %v1447 = vld [vmem:[%s14 + $0x10] sm:$0xff]
    %v1448 = vld [vmem:[%s14 + $0x18] sm:$0xff]
    %v1449 = vld [vmem:[%s15] sm:$0x1]
    %v1451 = vlaneseq
    %v1452 = vshrl.u32 %v1451, 7
    %v1453 = vsub.s32 0, %v1452
    %v1454 = vrot.slane %v1449, %v1453
    %v1457 = vsel %vm98, %v1444, 0
    %1459 = vmatprep.subr.mxu0 0.0
    %1460 = vmatpush1.msra.mxu0 %v1445
    %1461 = vmatprep.subr.mxu0 0.0
    %1462 = vmatpush1.msra.mxu0 %v1446
    %1463 = vmatprep.subr.mxu0 0.0
    %1464 = vmatpush1.msra.mxu0 %v1447
    %1465 = vmatprep.subr.mxu0 0.0
    %1466 = vmatpush1.msra.mxu0 %v1448
    %1467 = vmatprep.subr.mxu0 0.0
    %1468 = vmatpush1.msra.mxu0 0.0
    %1469 = vmatprep.subr.mxu0 0.0
    %1470 = vmatpush1.msra.mxu0 0.0
    %1471 = vmatprep.subr.mxu0 0.0
    %1472 = vmatpush1.msra.mxu0 0.0
    %1473 = vmatprep.subr.mxu0 0.0
    %1474 = vmatpush1.msra.mxu0 0.0
    %1475 = vmatprep.subr.mxu0 0.0
    %1476 = vmatpush1.msra.mxu0 0.0
    %1477 = vmatprep.subr.mxu0 0.0
    %1478 = vmatpush1.msra.mxu0 0.0
    %1479 = vmatprep.subr.mxu0 0.0
    %1480 = vmatpush1.msra.mxu0 0.0
    %1481 = vmatprep.subr.mxu0 0.0
    %1482 = vmatpush1.msra.mxu0 0.0
    %1483 = vmatprep.subr.mxu0 0.0
    %1484 = vmatpush1.msra.mxu0 0.0
    %1485 = vmatprep.subr.mxu0 0.0
    %1486 = vmatpush1.msra.mxu0 0.0
    %1487 = vmatprep.subr.mxu0 0.0
    %1488 = vmatpush1.msra.mxu0 0.0
    %1489 = vmatprep.subr.mxu0 0.0
    %1490 = vmatpush1.msra.mxu0 0.0
    %1491 = vmatprep.subr.mxu0 0.0
    %1492 = vmatpush1.msra.mxu0 0.0
    %1493 = vmatprep.subr.mxu0 0.0
    %1494 = vmatpush1.msra.mxu0 0.0
    %1495 = vmatprep.subr.mxu0 0.0
    %1496 = vmatpush1.msra.mxu0 0.0
    %1497 = vmatprep.subr.mxu0 0.0
    %1498 = vmatpush1.msra.mxu0 0.0
    %1499 = vmatprep.subr.mxu0 0.0
    %1500 = vmatpush1.msra.mxu0 0.0
    %1501 = vmatprep.subr.mxu0 0.0
    %1502 = vmatpush1.msra.mxu0 0.0
    %1503 = vmatprep.subr.mxu0 0.0
    %1504 = vmatpush1.msra.mxu0 0.0
    %1505 = vmatprep.subr.mxu0 0.0
    %1506 = vmatpush1.msra.mxu0 0.0
    %1507 = vmatprep.subr.mxu0 0.0
    %1508 = vmatpush1.msra.mxu0 0.0
    %1509 = vmatprep.subr.mxu0 0.0
    %1510 = vmatpush1.msra.mxu0 0.0
    %1511 = vmatprep.subr.mxu0 0.0
    %1512 = vmatpush1.msra.mxu0 0.0
    %1513 = vmatprep.subr.mxu0 0.0
    %1514 = vmatpush1.msra.mxu0 0.0
    %1515 = vmatprep.subr.mxu0 0.0
    %1516 = vmatpush1.msra.mxu0 0.0
    %1517 = vmatprep.subr.mxu0 0.0
    %1518 = vmatpush1.msra.mxu0 0.0
    %1519 = vmatprep.subr.mxu0 0.0
    %1520 = vmatpush1.msra.mxu0 0.0
    %1521 = vmatprep.subr.mxu0 0.0
    %1522 = vmatpush1.msra.mxu0 0.0
    %1523 = vmatprep.mubr.f32.mxu0 0.0
    %1524 = vmatmul.mubr.f32.gmra.mrb[0].mxu0 %v1457
    %v1525 = vpop.f32.mrb[0].mxu0
    %v1526 = vadd.f32 %v1454, %v1525
    %v1527 = vpop.f32.mrb[0].mxu0
    %1528 = vdwg.mxu0
    %vm1529 = vcmask 277504
    %1530 = vst.msk [vmem:[%s16] sm:$0xff] %vm1529, %v1526
  $region73: #{rnn_forward.5} parent=0 // pred_fallthru
    _
  // Predicated region
  $region74: #{rnn_forward.5} parent=0 // pred_check
    _
  $region75: #{rnn_forward.5} parent=0 // pred_check_branch
    %1532 = sbr.rel (0) target = $region77
  $region76: #{rnn_forward.5} parent=0 // pred_region
    _
  $region77: #{rnn_forward.5} parent=0 // pred_fallthru
    _
  // Predicated region
  $region78: #{rnn_forward.5} parent=0 // pred_check
    _
  $region79: #{rnn_forward.5} parent=0 // pred_check_branch
    %1534 = sbr.rel (0) target = $region81
  $region80: #{rnn_forward.5} parent=0 // pred_region
    _
  $region81: #{rnn_forward.5} parent=0 // pred_fallthru
    _

</llo_original>
